<compile_context>
chip_gen: v6e
topology: v6e:2x2x1
jax: 0.10.0
libtpu: 0.0.40
codegen_flags: <defaults>
</compile_context>

<pallas_src>
import functools

import jax
import jax.numpy as jnp
from jax.experimental import pallas as pl
from jax.experimental.pallas import tpu as pltpu


def _spatial_gate_kernel(w_ref, b_ref, x_ref, out_ref,
                         pad_ref, flat_ref, scale_ref,
                         *, C, H, W, K, PAD, R0, HW):
    # w_ref:     SMEM (2*K*K,) f32  conv weights, BN scale (and 1/C for ch 1) folded
    # b_ref:     SMEM (1,)     f32  folded BN bias
    # x_ref:     VMEM (1, C, HW)    one batch element, lane-dense
    # out_ref:   VMEM (1, C, HW)
    # pad_ref:   VMEM (2, Hp, Wp)   padded 2-D pooled maps (conv input)
    # flat_ref:  VMEM (2, HWp)      pooled maps in flat lane-dense layout
    # scale_ref: VMEM (1, HWp)      sigmoid gate in flat lane-dense layout
    f32 = jnp.float32
    CB = 8                                   # channels per chunk (one sublane group)
    n_full = C // CB
    rem = C - n_full * CB

    # ---- 1) ChannelPool: fused running max + running f32 sum over C ------------
    # Single pass over x; chunked so live values stay (8, HW) sized.
    cmax = None
    csum = None
    if n_full > 0:
        xc = x_ref[0, 0:CB, :].astype(f32)                       # (8, HW)
        m8, s8 = xc, xc
        for i in range(1, n_full):
            xc = x_ref[0, i * CB:(i + 1) * CB, :].astype(f32)
            m8 = jnp.maximum(m8, xc)
            s8 = s8 + xc
        cmax = jnp.max(m8, axis=0)                               # (HW,)
        csum = jnp.sum(s8, axis=0)                               # (HW,)
    if rem > 0:
        xr = x_ref[0, n_full * CB:C, :].astype(f32)              # (rem, HW)
        rmax = jnp.max(xr, axis=0)
        rsum = jnp.sum(xr, axis=0)
        cmax = rmax if cmax is None else jnp.maximum(cmax, rmax)
        csum = rsum if csum is None else csum + rsum

    # ---- 2) relayout pooled maps to padded 2-D + zero ONLY the conv halo -------
    flat_ref[0, 0:HW] = cmax
    flat_ref[1, 0:HW] = csum

    Wh = W + 2 * PAD                         # lanes actually read by the conv taps
    for c in range(2):
        # top / bottom halo rows (re-zeroed every step: required under "parallel")
        pad_ref[c, R0 - PAD:R0, :] = jnp.zeros((PAD, pad_ref.shape[2]), f32)
        pad_ref[c, R0 + H:R0 + H + PAD, :] = jnp.zeros((PAD, pad_ref.shape[2]), f32)
        # left / right halo lane columns alongside the interior
        pad_ref[c, R0:R0 + H, 0:PAD] = jnp.zeros((H, PAD), f32)
        pad_ref[c, R0:R0 + H, PAD + W:Wh] = jnp.zeros((H, PAD), f32)
        # interior: one lane-dense row of the flat map per output row
        for h in range(H):
            pad_ref[c, R0 + h, PAD:PAD + W] = flat_ref[c, h * W:(h + 1) * W]

    # ---- 3) 7x7 conv (2 -> 1) + bias + sigmoid, row-chunked ---------------------
    # One row-block load per (c, dy, chunk); dx taps are register-resident lane
    # shifts; 4 accumulators (c x dy-parity) for ILP; chunking caps vreg pressure.
    TH = min(H, 16)
    bias = b_ref[0]
    for h0 in range(0, H, TH):
        th = min(TH, H - h0)
        acc = [jnp.zeros((th, W), f32) for _ in range(4)]
        for c in range(2):
            for dy in range(K):
                r0 = R0 - PAD + dy + h0
                row = pad_ref[c, r0:r0 + th, :]                  # (th, Wp): 1 load
                ai = 2 * c + (dy & 1)
                for dx in range(K):
                    w = w_ref[c * K * K + dy * K + dx]           # SMEM scalar
                    acc[ai] = acc[ai] + w * row[:, dx:dx + W]    # lane-shifted tap
        conv = (acc[0] + acc[1]) + (acc[2] + acc[3]) + bias      # (th, W)
        s2d = jax.nn.sigmoid(conv)
        # relayout this chunk's scale rows into the flat lane-dense scale map
        for hh in range(th):
            scale_ref[0, (h0 + hh) * W:(h0 + hh + 1) * W] = s2d[hh]

    # ---- 4) gate: out = x * scale, chunked over C, lane-dense stores ------------
    scale = scale_ref[0, 0:HW]                                   # (HW,) f32
    scale8 = jnp.broadcast_to(scale, (CB, HW))                   # hoisted broadcast
    for i in range(n_full):
        xc = x_ref[0, i * CB:(i + 1) * CB, :]
        out_ref[0, i * CB:(i + 1) * CB, :] = (
            xc.astype(f32) * scale8).astype(out_ref.dtype)
    if rem > 0:
        xr = x_ref[0, n_full * CB:C, :]
        out_ref[0, n_full * CB:C, :] = (
            xr.astype(f32) * scale8[:rem]).astype(out_ref.dtype)


def _round_up(v, m):
    return (v + m - 1) // m * m


def spatial_gate(x, conv_w, bn_gamma, bn_beta, bn_mean, bn_var,
                 *, eps=1e-5, kernel_size=7):
    """x: (N, C, H, W); conv_w: (1, 2, K, K); bn_*: (1,)."""
    N, C, H, W = x.shape
    K = kernel_size
    PAD = (K - 1) // 2
    HW = H * W

    # Padded-scratch geometry (interior rows [R0, R0+H), lanes [PAD, PAD+W)).
    R0 = 8                                    # sublane-aligned interior offset (>= PAD)
    Hp = _round_up(R0 + H + PAD, 8)
    Wp = _round_up(W + 2 * PAD, 128)
    HWp = _round_up(HW, 128)

    # Fold inference BatchNorm into the bias-free conv; fold 1/C into the
    # "mean"-channel weights so the kernel only needs a channel SUM.
    bn_scale = bn_gamma / jnp.sqrt(bn_var + eps)                      # (1,)
    b_eff = (bn_beta - bn_mean * bn_scale).astype(jnp.float32)        # (1,)
    w_max = conv_w[0, 0] * bn_scale[0]                                # (K, K)
    w_mean = conv_w[0, 1] * (bn_scale[0] / C)                         # (K, K)
    w_eff = jnp.concatenate(
        [w_max.reshape(-1), w_mean.reshape(-1)]).astype(jnp.float32)  # (2*K*K,)

    # Lane-dense view of the C*H*W data path (free: contiguous NCHW reshape).
    x_flat = x.reshape(N, C, HW)

    kernel = functools.partial(_spatial_gate_kernel,
                               C=C, H=H, W=W, K=K, PAD=PAD, R0=R0, HW=HW)

    # Explicit scoped-VMEM budget: 2x(in block) + 2x(out block) + scratch + 30%.
    isz = x.dtype.itemsize
    block_bytes = C * HW * isz
    scratch_bytes = (2 * Hp * Wp + 2 * HWp + HWp) * 4
    vmem_limit = min(64 * 1024 * 1024,
                     max(4 * 1024 * 1024,
                         int((4 * block_bytes + scratch_bytes) * 1.3)))

    cost = pl.CostEstimate(
        flops=int(N * HW * (3 * C + 4 * K * K)),
        transcendentals=int(N * HW),
        bytes_accessed=int(2 * N * C * HW * isz))

    out_flat = pl.pallas_call(
        kernel,
        out_shape=jax.ShapeDtypeStruct((N, C, HW), x.dtype),
        grid=(N,),
        in_specs=[
            pl.BlockSpec(memory_space=pltpu.MemorySpace.SMEM),        # w_eff
            pl.BlockSpec(memory_space=pltpu.MemorySpace.SMEM),        # b_eff
            pl.BlockSpec((1, C, HW), lambda n: (n, 0, 0)),            # x (lane-dense)
        ],
        out_specs=pl.BlockSpec((1, C, HW), lambda n: (n, 0, 0)),
        scratch_shapes=[
            pltpu.VMEM((2, Hp, Wp), jnp.float32),                     # padded pooled maps
            pltpu.VMEM((2, HWp), jnp.float32),                        # flat pooled maps
            pltpu.VMEM((1, HWp), jnp.float32),                        # flat scale map
        ],
        compiler_params=pltpu.CompilerParams(
            dimension_semantics=("parallel",),                        # 2 TCs on v7x
            vmem_limit_bytes=vmem_limit),
        cost_estimate=cost,
    )(w_eff, b_eff, x_flat)

    return out_flat.reshape(N, C, H, W)


def _reference(x, conv_w, bn_gamma, bn_beta, bn_mean, bn_var, *, eps=1e-5):
    # Pure-JAX reference matching the PyTorch module (BN in inference form).
    pad = (conv_w.shape[-1] - 1) // 2
    cmax = jnp.max(x, axis=1, keepdims=True)
    cmean = jnp.mean(x, axis=1, keepdims=True)
    xc = jnp.concatenate([cmax, cmean], axis=1)     # (N, 2, H, W)
    y = jax.lax.conv_general_dilated(
        xc, conv_w, window_strides=(1, 1), padding=[(pad, pad), (pad, pad)],
        dimension_numbers=("NCHW", "OIHW", "NCHW"))
    g = bn_gamma.reshape(1, -1, 1, 1)
    be = bn_beta.reshape(1, -1, 1, 1)
    m = bn_mean.reshape(1, -1, 1, 1)
    v = bn_var.reshape(1, -1, 1, 1)
    y = (y - m) / jnp.sqrt(v + eps) * g + be
    return x * jax.nn.sigmoid(y)


if __name__ == "__main__":
    key = jax.random.PRNGKey(0)
    k_x, k_w, k_g, k_b, k_m, k_v = jax.random.split(key, 6)

    N, C, H, W, K = 2, 4, 16, 16, 7

    x = jax.random.normal(k_x, (N, C, H, W), dtype=jnp.float32)

    # Deterministic synthetic parameters (c2_msra_fill ~ kaiming normal).
    fan_in = 2 * K * K
    conv_w = jax.random.normal(k_w, (1, 2, K, K), dtype=jnp.float32) * (2.0 / fan_in) ** 0.5
    bn_gamma = 1.0 + 0.1 * jax.random.normal(k_g, (1,), dtype=jnp.float32)
    bn_beta = 0.1 * jax.random.normal(k_b, (1,), dtype=jnp.float32)
    bn_mean = 0.1 * jax.random.normal(k_m, (1,), dtype=jnp.float32)
    bn_var = 1.0 + 0.1 * jax.random.uniform(k_v, (1,), dtype=jnp.float32)

    out = spatial_gate(x, conv_w, bn_gamma, bn_beta, bn_mean, bn_var)
    out = jax.block_until_ready(out)

    ref = _reference(x, conv_w, bn_gamma, bn_beta, bn_mean, bn_var)
    assert out.shape == (N, C, H, W)
    assert jnp.allclose(out, ref, rtol=1e-5, atol=1e-5), (
        float(jnp.max(jnp.abs(out - ref))))

    print("KERNEL_OK")
</pallas_src>

<mosaic_0001>
module attributes {stable_mosaic.version = 11 : i64} {
  func.func @_spatial_gate_kernel(%arg0: i32, %arg1: memref<98xf32, #tpu.memory_space<smem>>, %arg2: memref<1xf32, #tpu.memory_space<smem>>, %arg3: memref<1x4x256xf32, #tpu.memory_space<vmem>>, %arg4: memref<1x4x256xf32, #tpu.memory_space<vmem>>, %arg5: memref<2x32x128xf32, #tpu.memory_space<vmem>>, %arg6: memref<2x256xf32, #tpu.memory_space<vmem>>, %arg7: memref<1x256xf32, #tpu.memory_space<vmem>>) attributes {dimension_semantics = [#tpu.dimension_semantics<parallel>], iteration_bounds = array<i64: 2>, scalar_prefetch = 0 : i64, scratch_operands = 3 : i64, tpu.core_type = #tpu.core_type<tc>, window_params = [{transform_indices = @transform_0, window_bounds = array<i64: 98>}, {transform_indices = @transform_1, window_bounds = array<i64: 1>}, {transform_indices = @transform_2, window_bounds = array<i64: 1, 4, 256>}, {transform_indices = @transform_3, window_bounds = array<i64: 1, 4, 256>}]} {
    %c0 = arith.constant 0 : index
    %c0_0 = arith.constant 0 : index
    %c0_1 = arith.constant 0 : index
    %0 = vector.load %arg3[%c0, %c0_0, %c0_1] : memref<1x4x256xf32, #tpu.memory_space<vmem>>, vector<1x4x256xf32>
    %1 = vector.shape_cast %0 : vector<1x4x256xf32> to vector<4x256xf32>
    %cst = arith.constant dense<0xFF800000> : vector<256xf32>
    %2 = vector.multi_reduction <maximumf>, %1, %cst [0] : vector<4x256xf32> to vector<256xf32>
    %cst_2 = arith.constant dense<0.000000e+00> : vector<256xf32>
    %3 = vector.multi_reduction <add>, %1, %cst_2 [0] : vector<4x256xf32> to vector<256xf32>
    %c0_3 = arith.constant 0 : index
    %c0_4 = arith.constant 0 : index
    %4 = vector.load %arg6[%c0_3, %c0_4] : memref<2x256xf32, #tpu.memory_space<vmem>>, vector<1x256xf32>
    %5 = vector.shape_cast %4 : vector<1x256xf32> to vector<256xf32>
    %6 = vector.shape_cast %2 : vector<256xf32> to vector<1x256xf32>
    tpu.vector_store %arg6[%c0_3, %c0_4], %6 {strides = array<i32>} : memref<2x256xf32, #tpu.memory_space<vmem>>, vector<1x256xf32>,
    %c1 = arith.constant 1 : index
    %c0_5 = arith.constant 0 : index
    %7 = vector.load %arg6[%c1, %c0_5] : memref<2x256xf32, #tpu.memory_space<vmem>>, vector<1x256xf32>
    %8 = vector.shape_cast %7 : vector<1x256xf32> to vector<256xf32>
    %9 = vector.shape_cast %3 : vector<256xf32> to vector<1x256xf32>
    tpu.vector_store %arg6[%c1, %c0_5], %9 {strides = array<i32>} : memref<2x256xf32, #tpu.memory_space<vmem>>, vector<1x256xf32>,
    %cst_6 = arith.constant 0.000000e+00 : f32
    %10 = vector.broadcast %cst_6 : f32 to vector<3x128xf32>
    %c0_7 = arith.constant 0 : index
    %c5 = arith.constant 5 : index
    %c0_8 = arith.constant 0 : index
    %11 = vector.load %arg5[%c0_7, %c5, %c0_8] : memref<2x32x128xf32, #tpu.memory_space<vmem>>, vector<1x3x128xf32>
    %12 = vector.shape_cast %11 : vector<1x3x128xf32> to vector<3x128xf32>
    %13 = vector.shape_cast %10 : vector<3x128xf32> to vector<1x3x128xf32>
    tpu.vector_store %arg5[%c0_7, %c5, %c0_8], %13 {strides = array<i32>} : memref<2x32x128xf32, #tpu.memory_space<vmem>>, vector<1x3x128xf32>,
    %cst_9 = arith.constant 0.000000e+00 : f32
    %14 = vector.broadcast %cst_9 : f32 to vector<3x128xf32>
    %c0_10 = arith.constant 0 : index
    %c24 = arith.constant 24 : index
    %c0_11 = arith.constant 0 : index
    %15 = vector.load %arg5[%c0_10, %c24, %c0_11] : memref<2x32x128xf32, #tpu.memory_space<vmem>>, vector<1x3x128xf32>
    %16 = vector.shape_cast %15 : vector<1x3x128xf32> to vector<3x128xf32>
    %17 = vector.shape_cast %14 : vector<3x128xf32> to vector<1x3x128xf32>
    tpu.vector_store %arg5[%c0_10, %c24, %c0_11], %17 {strides = array<i32>} : memref<2x32x128xf32, #tpu.memory_space<vmem>>, vector<1x3x128xf32>,
    %cst_12 = arith.constant 0.000000e+00 : f32
    %18 = vector.broadcast %cst_12 : f32 to vector<16x3xf32>
    %c0_13 = arith.constant 0 : index
    %c8 = arith.constant 8 : index
    %c0_14 = arith.constant 0 : index
    %19 = vector.load %arg5[%c0_13, %c8, %c0_14] : memref<2x32x128xf32, #tpu.memory_space<vmem>>, vector<1x16x3xf32>
    %20 = vector.shape_cast %19 : vector<1x16x3xf32> to vector<16x3xf32>
    %21 = vector.shape_cast %18 : vector<16x3xf32> to vector<1x16x3xf32>
    tpu.vector_store %arg5[%c0_13, %c8, %c0_14], %21 {strides = array<i32>} : memref<2x32x128xf32, #tpu.memory_space<vmem>>, vector<1x16x3xf32>,
    %cst_15 = arith.constant 0.000000e+00 : f32
    %22 = vector.broadcast %cst_15 : f32 to vector<16x3xf32>
    %c0_16 = arith.constant 0 : index
    %c8_17 = arith.constant 8 : index
    %c19 = arith.constant 19 : index
    %23 = vector.load %arg5[%c0_16, %c8_17, %c19] : memref<2x32x128xf32, #tpu.memory_space<vmem>>, vector<1x16x3xf32>
    %24 = vector.shape_cast %23 : vector<1x16x3xf32> to vector<16x3xf32>
    %25 = vector.shape_cast %22 : vector<16x3xf32> to vector<1x16x3xf32>
    tpu.vector_store %arg5[%c0_16, %c8_17, %c19], %25 {strides = array<i32>} : memref<2x32x128xf32, #tpu.memory_space<vmem>>, vector<1x16x3xf32>,
    %c0_18 = arith.constant 0 : index
    %c0_19 = arith.constant 0 : index
    %26 = vector.load %arg6[%c0_18, %c0_19] : memref<2x256xf32, #tpu.memory_space<vmem>>, vector<1x16xf32>
    %27 = vector.shape_cast %26 : vector<1x16xf32> to vector<16xf32>
    %c0_20 = arith.constant 0 : index
    %c8_21 = arith.constant 8 : index
    %c3 = arith.constant 3 : index
    %28 = vector.load %arg5[%c0_20, %c8_21, %c3] : memref<2x32x128xf32, #tpu.memory_space<vmem>>, vector<1x1x16xf32>
    %29 = vector.shape_cast %28 : vector<1x1x16xf32> to vector<16xf32>
    %30 = vector.shape_cast %27 : vector<16xf32> to vector<1x1x16xf32>
    tpu.vector_store %arg5[%c0_20, %c8_21, %c3], %30 {strides = array<i32>} : memref<2x32x128xf32, #tpu.memory_space<vmem>>, vector<1x1x16xf32>,
    %c0_22 = arith.constant 0 : index
    %c16 = arith.constant 16 : index
    %31 = vector.load %arg6[%c0_22, %c16] : memref<2x256xf32, #tpu.memory_space<vmem>>, vector<1x16xf32>
    %32 = vector.shape_cast %31 : vector<1x16xf32> to vector<16xf32>
    %c0_23 = arith.constant 0 : index
    %c9 = arith.constant 9 : index
    %c3_24 = arith.constant 3 : index
    %33 = vector.load %arg5[%c0_23, %c9, %c3_24] : memref<2x32x128xf32, #tpu.memory_space<vmem>>, vector<1x1x16xf32>
    %34 = vector.shape_cast %33 : vector<1x1x16xf32> to vector<16xf32>
    %35 = vector.shape_cast %32 : vector<16xf32> to vector<1x1x16xf32>
    tpu.vector_store %arg5[%c0_23, %c9, %c3_24], %35 {strides = array<i32>} : memref<2x32x128xf32, #tpu.memory_space<vmem>>, vector<1x1x16xf32>,
    %c0_25 = arith.constant 0 : index
    %c32 = arith.constant 32 : index
    %36 = vector.load %arg6[%c0_25, %c32] : memref<2x256xf32, #tpu.memory_space<vmem>>, vector<1x16xf32>
    %37 = vector.shape_cast %36 : vector<1x16xf32> to vector<16xf32>
    %c0_26 = arith.constant 0 : index
    %c10 = arith.constant 10 : index
    %c3_27 = arith.constant 3 : index
    %38 = vector.load %arg5[%c0_26, %c10, %c3_27] : memref<2x32x128xf32, #tpu.memory_space<vmem>>, vector<1x1x16xf32>
    %39 = vector.shape_cast %38 : vector<1x1x16xf32> to vector<16xf32>
    %40 = vector.shape_cast %37 : vector<16xf32> to vector<1x1x16xf32>
    tpu.vector_store %arg5[%c0_26, %c10, %c3_27], %40 {strides = array<i32>} : memref<2x32x128xf32, #tpu.memory_space<vmem>>, vector<1x1x16xf32>,
    %c0_28 = arith.constant 0 : index
    %c48 = arith.constant 48 : index
    %41 = vector.load %arg6[%c0_28, %c48] : memref<2x256xf32, #tpu.memory_space<vmem>>, vector<1x16xf32>
    %42 = vector.shape_cast %41 : vector<1x16xf32> to vector<16xf32>
    %c0_29 = arith.constant 0 : index
    %c11 = arith.constant 11 : index
    %c3_30 = arith.constant 3 : index
    %43 = vector.load %arg5[%c0_29, %c11, %c3_30] : memref<2x32x128xf32, #tpu.memory_space<vmem>>, vector<1x1x16xf32>
    %44 = vector.shape_cast %43 : vector<1x1x16xf32> to vector<16xf32>
    %45 = vector.shape_cast %42 : vector<16xf32> to vector<1x1x16xf32>
    tpu.vector_store %arg5[%c0_29, %c11, %c3_30], %45 {strides = array<i32>} : memref<2x32x128xf32, #tpu.memory_space<vmem>>, vector<1x1x16xf32>,
    %c0_31 = arith.constant 0 : index
    %c64 = arith.constant 64 : index
    %46 = vector.load %arg6[%c0_31, %c64] : memref<2x256xf32, #tpu.memory_space<vmem>>, vector<1x16xf32>
    %47 = vector.shape_cast %46 : vector<1x16xf32> to vector<16xf32>
    %c0_32 = arith.constant 0 : index
    %c12 = arith.constant 12 : index
    %c3_33 = arith.constant 3 : index
    %48 = vector.load %arg5[%c0_32, %c12, %c3_33] : memref<2x32x128xf32, #tpu.memory_space<vmem>>, vector<1x1x16xf32>
    %49 = vector.shape_cast %48 : vector<1x1x16xf32> to vector<16xf32>
    %50 = vector.shape_cast %47 : vector<16xf32> to vector<1x1x16xf32>
    tpu.vector_store %arg5[%c0_32, %c12, %c3_33], %50 {strides = array<i32>} : memref<2x32x128xf32, #tpu.memory_space<vmem>>, vector<1x1x16xf32>,
    %c0_34 = arith.constant 0 : index
    %c80 = arith.constant 80 : index
    %51 = vector.load %arg6[%c0_34, %c80] : memref<2x256xf32, #tpu.memory_space<vmem>>, vector<1x16xf32>
    %52 = vector.shape_cast %51 : vector<1x16xf32> to vector<16xf32>
    %c0_35 = arith.constant 0 : index
    %c13 = arith.constant 13 : index
    %c3_36 = arith.constant 3 : index
    %53 = vector.load %arg5[%c0_35, %c13, %c3_36] : memref<2x32x128xf32, #tpu.memory_space<vmem>>, vector<1x1x16xf32>
    %54 = vector.shape_cast %53 : vector<1x1x16xf32> to vector<16xf32>
    %55 = vector.shape_cast %52 : vector<16xf32> to vector<1x1x16xf32>
    tpu.vector_store %arg5[%c0_35, %c13, %c3_36], %55 {strides = array<i32>} : memref<2x32x128xf32, #tpu.memory_space<vmem>>, vector<1x1x16xf32>,
    %c0_37 = arith.constant 0 : index
    %c96 = arith.constant 96 : index
    %56 = vector.load %arg6[%c0_37, %c96] : memref<2x256xf32, #tpu.memory_space<vmem>>, vector<1x16xf32>
    %57 = vector.shape_cast %56 : vector<1x16xf32> to vector<16xf32>
    %c0_38 = arith.constant 0 : index
    %c14 = arith.constant 14 : index
    %c3_39 = arith.constant 3 : index
    %58 = vector.load %arg5[%c0_38, %c14, %c3_39] : memref<2x32x128xf32, #tpu.memory_space<vmem>>, vector<1x1x16xf32>
    %59 = vector.shape_cast %58 : vector<1x1x16xf32> to vector<16xf32>
    %60 = vector.shape_cast %57 : vector<16xf32> to vector<1x1x16xf32>
    tpu.vector_store %arg5[%c0_38, %c14, %c3_39], %60 {strides = array<i32>} : memref<2x32x128xf32, #tpu.memory_space<vmem>>, vector<1x1x16xf32>,
    %c0_40 = arith.constant 0 : index
    %c112 = arith.constant 112 : index
    %61 = vector.load %arg6[%c0_40, %c112] : memref<2x256xf32, #tpu.memory_space<vmem>>, vector<1x16xf32>
    %62 = vector.shape_cast %61 : vector<1x16xf32> to vector<16xf32>
    %c0_41 = arith.constant 0 : index
    %c15 = arith.constant 15 : index
    %c3_42 = arith.constant 3 : index
    %63 = vector.load %arg5[%c0_41, %c15, %c3_42] : memref<2x32x128xf32, #tpu.memory_space<vmem>>, vector<1x1x16xf32>
    %64 = vector.shape_cast %63 : vector<1x1x16xf32> to vector<16xf32>
    %65 = vector.shape_cast %62 : vector<16xf32> to vector<1x1x16xf32>
    tpu.vector_store %arg5[%c0_41, %c15, %c3_42], %65 {strides = array<i32>} : memref<2x32x128xf32, #tpu.memory_space<vmem>>, vector<1x1x16xf32>,
    %c0_43 = arith.constant 0 : index
    %c128 = arith.constant 128 : index
    %66 = vector.load %arg6[%c0_43, %c128] : memref<2x256xf32, #tpu.memory_space<vmem>>, vector<1x16xf32>
    %67 = vector.shape_cast %66 : vector<1x16xf32> to vector<16xf32>
    %c0_44 = arith.constant 0 : index
    %c16_45 = arith.constant 16 : index
    %c3_46 = arith.constant 3 : index
    %68 = vector.load %arg5[%c0_44, %c16_45, %c3_46] : memref<2x32x128xf32, #tpu.memory_space<vmem>>, vector<1x1x16xf32>
    %69 = vector.shape_cast %68 : vector<1x1x16xf32> to vector<16xf32>
    %70 = vector.shape_cast %67 : vector<16xf32> to vector<1x1x16xf32>
    tpu.vector_store %arg5[%c0_44, %c16_45, %c3_46], %70 {strides = array<i32>} : memref<2x32x128xf32, #tpu.memory_space<vmem>>, vector<1x1x16xf32>,
    %c0_47 = arith.constant 0 : index
    %c144 = arith.constant 144 : index
    %71 = vector.load %arg6[%c0_47, %c144] : memref<2x256xf32, #tpu.memory_space<vmem>>, vector<1x16xf32>
    %72 = vector.shape_cast %71 : vector<1x16xf32> to vector<16xf32>
    %c0_48 = arith.constant 0 : index
    %c17 = arith.constant 17 : index
    %c3_49 = arith.constant 3 : index
    %73 = vector.load %arg5[%c0_48, %c17, %c3_49] : memref<2x32x128xf32, #tpu.memory_space<vmem>>, vector<1x1x16xf32>
    %74 = vector.shape_cast %73 : vector<1x1x16xf32> to vector<16xf32>
    %75 = vector.shape_cast %72 : vector<16xf32> to vector<1x1x16xf32>
    tpu.vector_store %arg5[%c0_48, %c17, %c3_49], %75 {strides = array<i32>} : memref<2x32x128xf32, #tpu.memory_space<vmem>>, vector<1x1x16xf32>,
    %c0_50 = arith.constant 0 : index
    %c160 = arith.constant 160 : index
    %76 = vector.load %arg6[%c0_50, %c160] : memref<2x256xf32, #tpu.memory_space<vmem>>, vector<1x16xf32>
    %77 = vector.shape_cast %76 : vector<1x16xf32> to vector<16xf32>
    %c0_51 = arith.constant 0 : index
    %c18 = arith.constant 18 : index
    %c3_52 = arith.constant 3 : index
    %78 = vector.load %arg5[%c0_51, %c18, %c3_52] : memref<2x32x128xf32, #tpu.memory_space<vmem>>, vector<1x1x16xf32>
    %79 = vector.shape_cast %78 : vector<1x1x16xf32> to vector<16xf32>
    %80 = vector.shape_cast %77 : vector<16xf32> to vector<1x1x16xf32>
    tpu.vector_store %arg5[%c0_51, %c18, %c3_52], %80 {strides = array<i32>} : memref<2x32x128xf32, #tpu.memory_space<vmem>>, vector<1x1x16xf32>,
    %c0_53 = arith.constant 0 : index
    %c176 = arith.constant 176 : index
    %81 = vector.load %arg6[%c0_53, %c176] : memref<2x256xf32, #tpu.memory_space<vmem>>, vector<1x16xf32>
    %82 = vector.shape_cast %81 : vector<1x16xf32> to vector<16xf32>
    %c0_54 = arith.constant 0 : index
    %c19_55 = arith.constant 19 : index
    %c3_56 = arith.constant 3 : index
    %83 = vector.load %arg5[%c0_54, %c19_55, %c3_56] : memref<2x32x128xf32, #tpu.memory_space<vmem>>, vector<1x1x16xf32>
    %84 = vector.shape_cast %83 : vector<1x1x16xf32> to vector<16xf32>
    %85 = vector.shape_cast %82 : vector<16xf32> to vector<1x1x16xf32>
    tpu.vector_store %arg5[%c0_54, %c19_55, %c3_56], %85 {strides = array<i32>} : memref<2x32x128xf32, #tpu.memory_space<vmem>>, vector<1x1x16xf32>,
    %c0_57 = arith.constant 0 : index
    %c192 = arith.constant 192 : index
    %86 = vector.load %arg6[%c0_57, %c192] : memref<2x256xf32, #tpu.memory_space<vmem>>, vector<1x16xf32>
    %87 = vector.shape_cast %86 : vector<1x16xf32> to vector<16xf32>
    %c0_58 = arith.constant 0 : index
    %c20 = arith.constant 20 : index
    %c3_59 = arith.constant 3 : index
    %88 = vector.load %arg5[%c0_58, %c20, %c3_59] : memref<2x32x128xf32, #tpu.memory_space<vmem>>, vector<1x1x16xf32>
    %89 = vector.shape_cast %88 : vector<1x1x16xf32> to vector<16xf32>
    %90 = vector.shape_cast %87 : vector<16xf32> to vector<1x1x16xf32>
    tpu.vector_store %arg5[%c0_58, %c20, %c3_59], %90 {strides = array<i32>} : memref<2x32x128xf32, #tpu.memory_space<vmem>>, vector<1x1x16xf32>,
    %c0_60 = arith.constant 0 : index
    %c208 = arith.constant 208 : index
    %91 = vector.load %arg6[%c0_60, %c208] : memref<2x256xf32, #tpu.memory_space<vmem>>, vector<1x16xf32>
    %92 = vector.shape_cast %91 : vector<1x16xf32> to vector<16xf32>
    %c0_61 = arith.constant 0 : index
    %c21 = arith.constant 21 : index
    %c3_62 = arith.constant 3 : index
    %93 = vector.load %arg5[%c0_61, %c21, %c3_62] : memref<2x32x128xf32, #tpu.memory_space<vmem>>, vector<1x1x16xf32>
    %94 = vector.shape_cast %93 : vector<1x1x16xf32> to vector<16xf32>
    %95 = vector.shape_cast %92 : vector<16xf32> to vector<1x1x16xf32>
    tpu.vector_store %arg5[%c0_61, %c21, %c3_62], %95 {strides = array<i32>} : memref<2x32x128xf32, #tpu.memory_space<vmem>>, vector<1x1x16xf32>,
    %c0_63 = arith.constant 0 : index
    %c224 = arith.constant 224 : index
    %96 = vector.load %arg6[%c0_63, %c224] : memref<2x256xf32, #tpu.memory_space<vmem>>, vector<1x16xf32>
    %97 = vector.shape_cast %96 : vector<1x16xf32> to vector<16xf32>
    %c0_64 = arith.constant 0 : index
    %c22 = arith.constant 22 : index
    %c3_65 = arith.constant 3 : index
    %98 = vector.load %arg5[%c0_64, %c22, %c3_65] : memref<2x32x128xf32, #tpu.memory_space<vmem>>, vector<1x1x16xf32>
    %99 = vector.shape_cast %98 : vector<1x1x16xf32> to vector<16xf32>
    %100 = vector.shape_cast %97 : vector<16xf32> to vector<1x1x16xf32>
    tpu.vector_store %arg5[%c0_64, %c22, %c3_65], %100 {strides = array<i32>} : memref<2x32x128xf32, #tpu.memory_space<vmem>>, vector<1x1x16xf32>,
    %c0_66 = arith.constant 0 : index
    %c240 = arith.constant 240 : index
    %101 = vector.load %arg6[%c0_66, %c240] : memref<2x256xf32, #tpu.memory_space<vmem>>, vector<1x16xf32>
    %102 = vector.shape_cast %101 : vector<1x16xf32> to vector<16xf32>
    %c0_67 = arith.constant 0 : index
    %c23 = arith.constant 23 : index
    %c3_68 = arith.constant 3 : index
    %103 = vector.load %arg5[%c0_67, %c23, %c3_68] : memref<2x32x128xf32, #tpu.memory_space<vmem>>, vector<1x1x16xf32>
    %104 = vector.shape_cast %103 : vector<1x1x16xf32> to vector<16xf32>
    %105 = vector.shape_cast %102 : vector<16xf32> to vector<1x1x16xf32>
    tpu.vector_store %arg5[%c0_67, %c23, %c3_68], %105 {strides = array<i32>} : memref<2x32x128xf32, #tpu.memory_space<vmem>>, vector<1x1x16xf32>,
    %cst_69 = arith.constant 0.000000e+00 : f32
    %106 = vector.broadcast %cst_69 : f32 to vector<3x128xf32>
    %c1_70 = arith.constant 1 : index
    %c5_71 = arith.constant 5 : index
    %c0_72 = arith.constant 0 : index
    %107 = vector.load %arg5[%c1_70, %c5_71, %c0_72] : memref<2x32x128xf32, #tpu.memory_space<vmem>>, vector<1x3x128xf32>
    %108 = vector.shape_cast %107 : vector<1x3x128xf32> to vector<3x128xf32>
    %109 = vector.shape_cast %106 : vector<3x128xf32> to vector<1x3x128xf32>
    tpu.vector_store %arg5[%c1_70, %c5_71, %c0_72], %109 {strides = array<i32>} : memref<2x32x128xf32, #tpu.memory_space<vmem>>, vector<1x3x128xf32>,
    %cst_73 = arith.constant 0.000000e+00 : f32
    %110 = vector.broadcast %cst_73 : f32 to vector<3x128xf32>
    %c1_74 = arith.constant 1 : index
    %c24_75 = arith.constant 24 : index
    %c0_76 = arith.constant 0 : index
    %111 = vector.load %arg5[%c1_74, %c24_75, %c0_76] : memref<2x32x128xf32, #tpu.memory_space<vmem>>, vector<1x3x128xf32>
    %112 = vector.shape_cast %111 : vector<1x3x128xf32> to vector<3x128xf32>
    %113 = vector.shape_cast %110 : vector<3x128xf32> to vector<1x3x128xf32>
    tpu.vector_store %arg5[%c1_74, %c24_75, %c0_76], %113 {strides = array<i32>} : memref<2x32x128xf32, #tpu.memory_space<vmem>>, vector<1x3x128xf32>,
    %cst_77 = arith.constant 0.000000e+00 : f32
    %114 = vector.broadcast %cst_77 : f32 to vector<16x3xf32>
    %c1_78 = arith.constant 1 : index
    %c8_79 = arith.constant 8 : index
    %c0_80 = arith.constant 0 : index
    %115 = vector.load %arg5[%c1_78, %c8_79, %c0_80] : memref<2x32x128xf32, #tpu.memory_space<vmem>>, vector<1x16x3xf32>
    %116 = vector.shape_cast %115 : vector<1x16x3xf32> to vector<16x3xf32>
    %117 = vector.shape_cast %114 : vector<16x3xf32> to vector<1x16x3xf32>
    tpu.vector_store %arg5[%c1_78, %c8_79, %c0_80], %117 {strides = array<i32>} : memref<2x32x128xf32, #tpu.memory_space<vmem>>, vector<1x16x3xf32>,
    %cst_81 = arith.constant 0.000000e+00 : f32
    %118 = vector.broadcast %cst_81 : f32 to vector<16x3xf32>
    %c1_82 = arith.constant 1 : index
    %c8_83 = arith.constant 8 : index
    %c19_84 = arith.constant 19 : index
    %119 = vector.load %arg5[%c1_82, %c8_83, %c19_84] : memref<2x32x128xf32, #tpu.memory_space<vmem>>, vector<1x16x3xf32>
    %120 = vector.shape_cast %119 : vector<1x16x3xf32> to vector<16x3xf32>
    %121 = vector.shape_cast %118 : vector<16x3xf32> to vector<1x16x3xf32>
    tpu.vector_store %arg5[%c1_82, %c8_83, %c19_84], %121 {strides = array<i32>} : memref<2x32x128xf32, #tpu.memory_space<vmem>>, vector<1x16x3xf32>,
    %c1_85 = arith.constant 1 : index
    %c0_86 = arith.constant 0 : index
    %122 = vector.load %arg6[%c1_85, %c0_86] : memref<2x256xf32, #tpu.memory_space<vmem>>, vector<1x16xf32>
    %123 = vector.shape_cast %122 : vector<1x16xf32> to vector<16xf32>
    %c1_87 = arith.constant 1 : index
    %c8_88 = arith.constant 8 : index
    %c3_89 = arith.constant 3 : index
    %124 = vector.load %arg5[%c1_87, %c8_88, %c3_89] : memref<2x32x128xf32, #tpu.memory_space<vmem>>, vector<1x1x16xf32>
    %125 = vector.shape_cast %124 : vector<1x1x16xf32> to vector<16xf32>
    %126 = vector.shape_cast %123 : vector<16xf32> to vector<1x1x16xf32>
    tpu.vector_store %arg5[%c1_87, %c8_88, %c3_89], %126 {strides = array<i32>} : memref<2x32x128xf32, #tpu.memory_space<vmem>>, vector<1x1x16xf32>,
    %c1_90 = arith.constant 1 : index
    %c16_91 = arith.constant 16 : index
    %127 = vector.load %arg6[%c1_90, %c16_91] : memref<2x256xf32, #tpu.memory_space<vmem>>, vector<1x16xf32>
    %128 = vector.shape_cast %127 : vector<1x16xf32> to vector<16xf32>
    %c1_92 = arith.constant 1 : index
    %c9_93 = arith.constant 9 : index
    %c3_94 = arith.constant 3 : index
    %129 = vector.load %arg5[%c1_92, %c9_93, %c3_94] : memref<2x32x128xf32, #tpu.memory_space<vmem>>, vector<1x1x16xf32>
    %130 = vector.shape_cast %129 : vector<1x1x16xf32> to vector<16xf32>
    %131 = vector.shape_cast %128 : vector<16xf32> to vector<1x1x16xf32>
    tpu.vector_store %arg5[%c1_92, %c9_93, %c3_94], %131 {strides = array<i32>} : memref<2x32x128xf32, #tpu.memory_space<vmem>>, vector<1x1x16xf32>,
    %c1_95 = arith.constant 1 : index
    %c32_96 = arith.constant 32 : index
    %132 = vector.load %arg6[%c1_95, %c32_96] : memref<2x256xf32, #tpu.memory_space<vmem>>, vector<1x16xf32>
    %133 = vector.shape_cast %132 : vector<1x16xf32> to vector<16xf32>
    %c1_97 = arith.constant 1 : index
    %c10_98 = arith.constant 10 : index
    %c3_99 = arith.constant 3 : index
    %134 = vector.load %arg5[%c1_97, %c10_98, %c3_99] : memref<2x32x128xf32, #tpu.memory_space<vmem>>, vector<1x1x16xf32>
    %135 = vector.shape_cast %134 : vector<1x1x16xf32> to vector<16xf32>
    %136 = vector.shape_cast %133 : vector<16xf32> to vector<1x1x16xf32>
    tpu.vector_store %arg5[%c1_97, %c10_98, %c3_99], %136 {strides = array<i32>} : memref<2x32x128xf32, #tpu.memory_space<vmem>>, vector<1x1x16xf32>,
    %c1_100 = arith.constant 1 : index
    %c48_101 = arith.constant 48 : index
    %137 = vector.load %arg6[%c1_100, %c48_101] : memref<2x256xf32, #tpu.memory_space<vmem>>, vector<1x16xf32>
    %138 = vector.shape_cast %137 : vector<1x16xf32> to vector<16xf32>
    %c1_102 = arith.constant 1 : index
    %c11_103 = arith.constant 11 : index
    %c3_104 = arith.constant 3 : index
    %139 = vector.load %arg5[%c1_102, %c11_103, %c3_104] : memref<2x32x128xf32, #tpu.memory_space<vmem>>, vector<1x1x16xf32>
    %140 = vector.shape_cast %139 : vector<1x1x16xf32> to vector<16xf32>
    %141 = vector.shape_cast %138 : vector<16xf32> to vector<1x1x16xf32>
    tpu.vector_store %arg5[%c1_102, %c11_103, %c3_104], %141 {strides = array<i32>} : memref<2x32x128xf32, #tpu.memory_space<vmem>>, vector<1x1x16xf32>,
    %c1_105 = arith.constant 1 : index
    %c64_106 = arith.constant 64 : index
    %142 = vector.load %arg6[%c1_105, %c64_106] : memref<2x256xf32, #tpu.memory_space<vmem>>, vector<1x16xf32>
    %143 = vector.shape_cast %142 : vector<1x16xf32> to vector<16xf32>
    %c1_107 = arith.constant 1 : index
    %c12_108 = arith.constant 12 : index
    %c3_109 = arith.constant 3 : index
    %144 = vector.load %arg5[%c1_107, %c12_108, %c3_109] : memref<2x32x128xf32, #tpu.memory_space<vmem>>, vector<1x1x16xf32>
    %145 = vector.shape_cast %144 : vector<1x1x16xf32> to vector<16xf32>
    %146 = vector.shape_cast %143 : vector<16xf32> to vector<1x1x16xf32>
    tpu.vector_store %arg5[%c1_107, %c12_108, %c3_109], %146 {strides = array<i32>} : memref<2x32x128xf32, #tpu.memory_space<vmem>>, vector<1x1x16xf32>,
    %c1_110 = arith.constant 1 : index
    %c80_111 = arith.constant 80 : index
    %147 = vector.load %arg6[%c1_110, %c80_111] : memref<2x256xf32, #tpu.memory_space<vmem>>, vector<1x16xf32>
    %148 = vector.shape_cast %147 : vector<1x16xf32> to vector<16xf32>
    %c1_112 = arith.constant 1 : index
    %c13_113 = arith.constant 13 : index
    %c3_114 = arith.constant 3 : index
    %149 = vector.load %arg5[%c1_112, %c13_113, %c3_114] : memref<2x32x128xf32, #tpu.memory_space<vmem>>, vector<1x1x16xf32>
    %150 = vector.shape_cast %149 : vector<1x1x16xf32> to vector<16xf32>
    %151 = vector.shape_cast %148 : vector<16xf32> to vector<1x1x16xf32>
    tpu.vector_store %arg5[%c1_112, %c13_113, %c3_114], %151 {strides = array<i32>} : memref<2x32x128xf32, #tpu.memory_space<vmem>>, vector<1x1x16xf32>,
    %c1_115 = arith.constant 1 : index
    %c96_116 = arith.constant 96 : index
    %152 = vector.load %arg6[%c1_115, %c96_116] : memref<2x256xf32, #tpu.memory_space<vmem>>, vector<1x16xf32>
    %153 = vector.shape_cast %152 : vector<1x16xf32> to vector<16xf32>
    %c1_117 = arith.constant 1 : index
    %c14_118 = arith.constant 14 : index
    %c3_119 = arith.constant 3 : index
    %154 = vector.load %arg5[%c1_117, %c14_118, %c3_119] : memref<2x32x128xf32, #tpu.memory_space<vmem>>, vector<1x1x16xf32>
    %155 = vector.shape_cast %154 : vector<1x1x16xf32> to vector<16xf32>
    %156 = vector.shape_cast %153 : vector<16xf32> to vector<1x1x16xf32>
    tpu.vector_store %arg5[%c1_117, %c14_118, %c3_119], %156 {strides = array<i32>} : memref<2x32x128xf32, #tpu.memory_space<vmem>>, vector<1x1x16xf32>,
    %c1_120 = arith.constant 1 : index
    %c112_121 = arith.constant 112 : index
    %157 = vector.load %arg6[%c1_120, %c112_121] : memref<2x256xf32, #tpu.memory_space<vmem>>, vector<1x16xf32>
    %158 = vector.shape_cast %157 : vector<1x16xf32> to vector<16xf32>
    %c1_122 = arith.constant 1 : index
    %c15_123 = arith.constant 15 : index
    %c3_124 = arith.constant 3 : index
    %159 = vector.load %arg5[%c1_122, %c15_123, %c3_124] : memref<2x32x128xf32, #tpu.memory_space<vmem>>, vector<1x1x16xf32>
    %160 = vector.shape_cast %159 : vector<1x1x16xf32> to vector<16xf32>
    %161 = vector.shape_cast %158 : vector<16xf32> to vector<1x1x16xf32>
    tpu.vector_store %arg5[%c1_122, %c15_123, %c3_124], %161 {strides = array<i32>} : memref<2x32x128xf32, #tpu.memory_space<vmem>>, vector<1x1x16xf32>,
    %c1_125 = arith.constant 1 : index
    %c128_126 = arith.constant 128 : index
    %162 = vector.load %arg6[%c1_125, %c128_126] : memref<2x256xf32, #tpu.memory_space<vmem>>, vector<1x16xf32>
    %163 = vector.shape_cast %162 : vector<1x16xf32> to vector<16xf32>
    %c1_127 = arith.constant 1 : index
    %c16_128 = arith.constant 16 : index
    %c3_129 = arith.constant 3 : index
    %164 = vector.load %arg5[%c1_127, %c16_128, %c3_129] : memref<2x32x128xf32, #tpu.memory_space<vmem>>, vector<1x1x16xf32>
    %165 = vector.shape_cast %164 : vector<1x1x16xf32> to vector<16xf32>
    %166 = vector.shape_cast %163 : vector<16xf32> to vector<1x1x16xf32>
    tpu.vector_store %arg5[%c1_127, %c16_128, %c3_129], %166 {strides = array<i32>} : memref<2x32x128xf32, #tpu.memory_space<vmem>>, vector<1x1x16xf32>,
    %c1_130 = arith.constant 1 : index
    %c144_131 = arith.constant 144 : index
    %167 = vector.load %arg6[%c1_130, %c144_131] : memref<2x256xf32, #tpu.memory_space<vmem>>, vector<1x16xf32>
    %168 = vector.shape_cast %167 : vector<1x16xf32> to vector<16xf32>
    %c1_132 = arith.constant 1 : index
    %c17_133 = arith.constant 17 : index
    %c3_134 = arith.constant 3 : index
    %169 = vector.load %arg5[%c1_132, %c17_133, %c3_134] : memref<2x32x128xf32, #tpu.memory_space<vmem>>, vector<1x1x16xf32>
    %170 = vector.shape_cast %169 : vector<1x1x16xf32> to vector<16xf32>
    %171 = vector.shape_cast %168 : vector<16xf32> to vector<1x1x16xf32>
    tpu.vector_store %arg5[%c1_132, %c17_133, %c3_134], %171 {strides = array<i32>} : memref<2x32x128xf32, #tpu.memory_space<vmem>>, vector<1x1x16xf32>,
    %c1_135 = arith.constant 1 : index
    %c160_136 = arith.constant 160 : index
    %172 = vector.load %arg6[%c1_135, %c160_136] : memref<2x256xf32, #tpu.memory_space<vmem>>, vector<1x16xf32>
    %173 = vector.shape_cast %172 : vector<1x16xf32> to vector<16xf32>
    %c1_137 = arith.constant 1 : index
    %c18_138 = arith.constant 18 : index
    %c3_139 = arith.constant 3 : index
    %174 = vector.load %arg5[%c1_137, %c18_138, %c3_139] : memref<2x32x128xf32, #tpu.memory_space<vmem>>, vector<1x1x16xf32>
    %175 = vector.shape_cast %174 : vector<1x1x16xf32> to vector<16xf32>
    %176 = vector.shape_cast %173 : vector<16xf32> to vector<1x1x16xf32>
    tpu.vector_store %arg5[%c1_137, %c18_138, %c3_139], %176 {strides = array<i32>} : memref<2x32x128xf32, #tpu.memory_space<vmem>>, vector<1x1x16xf32>,
    %c1_140 = arith.constant 1 : index
    %c176_141 = arith.constant 176 : index
    %177 = vector.load %arg6[%c1_140, %c176_141] : memref<2x256xf32, #tpu.memory_space<vmem>>, vector<1x16xf32>
    %178 = vector.shape_cast %177 : vector<1x16xf32> to vector<16xf32>
    %c1_142 = arith.constant 1 : index
    %c19_143 = arith.constant 19 : index
    %c3_144 = arith.constant 3 : index
    %179 = vector.load %arg5[%c1_142, %c19_143, %c3_144] : memref<2x32x128xf32, #tpu.memory_space<vmem>>, vector<1x1x16xf32>
    %180 = vector.shape_cast %179 : vector<1x1x16xf32> to vector<16xf32>
    %181 = vector.shape_cast %178 : vector<16xf32> to vector<1x1x16xf32>
    tpu.vector_store %arg5[%c1_142, %c19_143, %c3_144], %181 {strides = array<i32>} : memref<2x32x128xf32, #tpu.memory_space<vmem>>, vector<1x1x16xf32>,
    %c1_145 = arith.constant 1 : index
    %c192_146 = arith.constant 192 : index
    %182 = vector.load %arg6[%c1_145, %c192_146] : memref<2x256xf32, #tpu.memory_space<vmem>>, vector<1x16xf32>
    %183 = vector.shape_cast %182 : vector<1x16xf32> to vector<16xf32>
    %c1_147 = arith.constant 1 : index
    %c20_148 = arith.constant 20 : index
    %c3_149 = arith.constant 3 : index
    %184 = vector.load %arg5[%c1_147, %c20_148, %c3_149] : memref<2x32x128xf32, #tpu.memory_space<vmem>>, vector<1x1x16xf32>
    %185 = vector.shape_cast %184 : vector<1x1x16xf32> to vector<16xf32>
    %186 = vector.shape_cast %183 : vector<16xf32> to vector<1x1x16xf32>
    tpu.vector_store %arg5[%c1_147, %c20_148, %c3_149], %186 {strides = array<i32>} : memref<2x32x128xf32, #tpu.memory_space<vmem>>, vector<1x1x16xf32>,
    %c1_150 = arith.constant 1 : index
    %c208_151 = arith.constant 208 : index
    %187 = vector.load %arg6[%c1_150, %c208_151] : memref<2x256xf32, #tpu.memory_space<vmem>>, vector<1x16xf32>
    %188 = vector.shape_cast %187 : vector<1x16xf32> to vector<16xf32>
    %c1_152 = arith.constant 1 : index
    %c21_153 = arith.constant 21 : index
    %c3_154 = arith.constant 3 : index
    %189 = vector.load %arg5[%c1_152, %c21_153, %c3_154] : memref<2x32x128xf32, #tpu.memory_space<vmem>>, vector<1x1x16xf32>
    %190 = vector.shape_cast %189 : vector<1x1x16xf32> to vector<16xf32>
    %191 = vector.shape_cast %188 : vector<16xf32> to vector<1x1x16xf32>
    tpu.vector_store %arg5[%c1_152, %c21_153, %c3_154], %191 {strides = array<i32>} : memref<2x32x128xf32, #tpu.memory_space<vmem>>, vector<1x1x16xf32>,
    %c1_155 = arith.constant 1 : index
    %c224_156 = arith.constant 224 : index
    %192 = vector.load %arg6[%c1_155, %c224_156] : memref<2x256xf32, #tpu.memory_space<vmem>>, vector<1x16xf32>
    %193 = vector.shape_cast %192 : vector<1x16xf32> to vector<16xf32>
    %c1_157 = arith.constant 1 : index
    %c22_158 = arith.constant 22 : index
    %c3_159 = arith.constant 3 : index
    %194 = vector.load %arg5[%c1_157, %c22_158, %c3_159] : memref<2x32x128xf32, #tpu.memory_space<vmem>>, vector<1x1x16xf32>
    %195 = vector.shape_cast %194 : vector<1x1x16xf32> to vector<16xf32>
    %196 = vector.shape_cast %193 : vector<16xf32> to vector<1x1x16xf32>
    tpu.vector_store %arg5[%c1_157, %c22_158, %c3_159], %196 {strides = array<i32>} : memref<2x32x128xf32, #tpu.memory_space<vmem>>, vector<1x1x16xf32>,
    %c1_160 = arith.constant 1 : index
    %c240_161 = arith.constant 240 : index
    %197 = vector.load %arg6[%c1_160, %c240_161] : memref<2x256xf32, #tpu.memory_space<vmem>>, vector<1x16xf32>
    %198 = vector.shape_cast %197 : vector<1x16xf32> to vector<16xf32>
    %c1_162 = arith.constant 1 : index
    %c23_163 = arith.constant 23 : index
    %c3_164 = arith.constant 3 : index
    %199 = vector.load %arg5[%c1_162, %c23_163, %c3_164] : memref<2x32x128xf32, #tpu.memory_space<vmem>>, vector<1x1x16xf32>
    %200 = vector.shape_cast %199 : vector<1x1x16xf32> to vector<16xf32>
    %201 = vector.shape_cast %198 : vector<16xf32> to vector<1x1x16xf32>
    tpu.vector_store %arg5[%c1_162, %c23_163, %c3_164], %201 {strides = array<i32>} : memref<2x32x128xf32, #tpu.memory_space<vmem>>, vector<1x1x16xf32>,
    %c0_165 = arith.constant 0 : index
    %202 = memref.load %arg2[%c0_165] : memref<1xf32, #tpu.memory_space<smem>>
    %cst_166 = arith.constant 0.000000e+00 : f32
    %203 = vector.broadcast %cst_166 : f32 to vector<16x16xf32>
    %cst_167 = arith.constant 0.000000e+00 : f32
    %204 = vector.broadcast %cst_167 : f32 to vector<16x16xf32>
    %cst_168 = arith.constant 0.000000e+00 : f32
    %205 = vector.broadcast %cst_168 : f32 to vector<16x16xf32>
    %cst_169 = arith.constant 0.000000e+00 : f32
    %206 = vector.broadcast %cst_169 : f32 to vector<16x16xf32>
    %c0_170 = arith.constant 0 : index
    %c5_171 = arith.constant 5 : index
    %c0_172 = arith.constant 0 : index
    %207 = vector.load %arg5[%c0_170, %c5_171, %c0_172] : memref<2x32x128xf32, #tpu.memory_space<vmem>>, vector<1x16x128xf32>
    %208 = vector.shape_cast %207 : vector<1x16x128xf32> to vector<16x128xf32>
    %c0_173 = arith.constant 0 : index
    %209 = memref.load %arg1[%c0_173] : memref<98xf32, #tpu.memory_space<smem>>
    %210 = vector.extract_strided_slice %208 {offsets = [0, 0], sizes = [16, 16], strides = [1, 1]} : vector<16x128xf32> to vector<16x16xf32>
    %211 = vector.broadcast %209 : f32 to vector<16x16xf32>
    %212 = arith.mulf %211, %210 : vector<16x16xf32>
    %213 = arith.addf %203, %212 : vector<16x16xf32>
    %c1_174 = arith.constant 1 : index
    %214 = memref.load %arg1[%c1_174] : memref<98xf32, #tpu.memory_space<smem>>
    %215 = vector.extract_strided_slice %208 {offsets = [0, 1], sizes = [16, 16], strides = [1, 1]} : vector<16x128xf32> to vector<16x16xf32>
    %216 = vector.broadcast %214 : f32 to vector<16x16xf32>
    %217 = arith.mulf %216, %215 : vector<16x16xf32>
    %218 = arith.addf %213, %217 : vector<16x16xf32>
    %c2 = arith.constant 2 : index
    %219 = memref.load %arg1[%c2] : memref<98xf32, #tpu.memory_space<smem>>
    %220 = vector.extract_strided_slice %208 {offsets = [0, 2], sizes = [16, 16], strides = [1, 1]} : vector<16x128xf32> to vector<16x16xf32>
    %221 = vector.broadcast %219 : f32 to vector<16x16xf32>
    %222 = arith.mulf %221, %220 : vector<16x16xf32>
    %223 = arith.addf %218, %222 : vector<16x16xf32>
    %c3_175 = arith.constant 3 : index
    %224 = memref.load %arg1[%c3_175] : memref<98xf32, #tpu.memory_space<smem>>
    %225 = vector.extract_strided_slice %208 {offsets = [0, 3], sizes = [16, 16], strides = [1, 1]} : vector<16x128xf32> to vector<16x16xf32>
    %226 = vector.broadcast %224 : f32 to vector<16x16xf32>
    %227 = arith.mulf %226, %225 : vector<16x16xf32>
    %228 = arith.addf %223, %227 : vector<16x16xf32>
    %c4 = arith.constant 4 : index
    %229 = memref.load %arg1[%c4] : memref<98xf32, #tpu.memory_space<smem>>
    %230 = vector.extract_strided_slice %208 {offsets = [0, 4], sizes = [16, 16], strides = [1, 1]} : vector<16x128xf32> to vector<16x16xf32>
    %231 = vector.broadcast %229 : f32 to vector<16x16xf32>
    %232 = arith.mulf %231, %230 : vector<16x16xf32>
    %233 = arith.addf %228, %232 : vector<16x16xf32>
    %c5_176 = arith.constant 5 : index
    %234 = memref.load %arg1[%c5_176] : memref<98xf32, #tpu.memory_space<smem>>
    %235 = vector.extract_strided_slice %208 {offsets = [0, 5], sizes = [16, 16], strides = [1, 1]} : vector<16x128xf32> to vector<16x16xf32>
    %236 = vector.broadcast %234 : f32 to vector<16x16xf32>
    %237 = arith.mulf %236, %235 : vector<16x16xf32>
    %238 = arith.addf %233, %237 : vector<16x16xf32>
    %c6 = arith.constant 6 : index
    %239 = memref.load %arg1[%c6] : memref<98xf32, #tpu.memory_space<smem>>
    %240 = vector.extract_strided_slice %208 {offsets = [0, 6], sizes = [16, 16], strides = [1, 1]} : vector<16x128xf32> to vector<16x16xf32>
    %241 = vector.broadcast %239 : f32 to vector<16x16xf32>
    %242 = arith.mulf %241, %240 : vector<16x16xf32>
    %243 = arith.addf %238, %242 : vector<16x16xf32>
    %c0_177 = arith.constant 0 : index
    %c6_178 = arith.constant 6 : index
    %c0_179 = arith.constant 0 : index
    %244 = vector.load %arg5[%c0_177, %c6_178, %c0_179] : memref<2x32x128xf32, #tpu.memory_space<vmem>>, vector<1x16x128xf32>
    %245 = vector.shape_cast %244 : vector<1x16x128xf32> to vector<16x128xf32>
    %c7 = arith.constant 7 : index
    %246 = memref.load %arg1[%c7] : memref<98xf32, #tpu.memory_space<smem>>
    %247 = vector.extract_strided_slice %245 {offsets = [0, 0], sizes = [16, 16], strides = [1, 1]} : vector<16x128xf32> to vector<16x16xf32>
    %248 = vector.broadcast %246 : f32 to vector<16x16xf32>
    %249 = arith.mulf %248, %247 : vector<16x16xf32>
    %250 = arith.addf %204, %249 : vector<16x16xf32>
    %c8_180 = arith.constant 8 : index
    %251 = memref.load %arg1[%c8_180] : memref<98xf32, #tpu.memory_space<smem>>
    %252 = vector.extract_strided_slice %245 {offsets = [0, 1], sizes = [16, 16], strides = [1, 1]} : vector<16x128xf32> to vector<16x16xf32>
    %253 = vector.broadcast %251 : f32 to vector<16x16xf32>
    %254 = arith.mulf %253, %252 : vector<16x16xf32>
    %255 = arith.addf %250, %254 : vector<16x16xf32>
    %c9_181 = arith.constant 9 : index
    %256 = memref.load %arg1[%c9_181] : memref<98xf32, #tpu.memory_space<smem>>
    %257 = vector.extract_strided_slice %245 {offsets = [0, 2], sizes = [16, 16], strides = [1, 1]} : vector<16x128xf32> to vector<16x16xf32>
    %258 = vector.broadcast %256 : f32 to vector<16x16xf32>
    %259 = arith.mulf %258, %257 : vector<16x16xf32>
    %260 = arith.addf %255, %259 : vector<16x16xf32>
    %c10_182 = arith.constant 10 : index
    %261 = memref.load %arg1[%c10_182] : memref<98xf32, #tpu.memory_space<smem>>
    %262 = vector.extract_strided_slice %245 {offsets = [0, 3], sizes = [16, 16], strides = [1, 1]} : vector<16x128xf32> to vector<16x16xf32>
    %263 = vector.broadcast %261 : f32 to vector<16x16xf32>
    %264 = arith.mulf %263, %262 : vector<16x16xf32>
    %265 = arith.addf %260, %264 : vector<16x16xf32>
    %c11_183 = arith.constant 11 : index
    %266 = memref.load %arg1[%c11_183] : memref<98xf32, #tpu.memory_space<smem>>
    %267 = vector.extract_strided_slice %245 {offsets = [0, 4], sizes = [16, 16], strides = [1, 1]} : vector<16x128xf32> to vector<16x16xf32>
    %268 = vector.broadcast %266 : f32 to vector<16x16xf32>
    %269 = arith.mulf %268, %267 : vector<16x16xf32>
    %270 = arith.addf %265, %269 : vector<16x16xf32>
    %c12_184 = arith.constant 12 : index
    %271 = memref.load %arg1[%c12_184] : memref<98xf32, #tpu.memory_space<smem>>
    %272 = vector.extract_strided_slice %245 {offsets = [0, 5], sizes = [16, 16], strides = [1, 1]} : vector<16x128xf32> to vector<16x16xf32>
    %273 = vector.broadcast %271 : f32 to vector<16x16xf32>
    %274 = arith.mulf %273, %272 : vector<16x16xf32>
    %275 = arith.addf %270, %274 : vector<16x16xf32>
    %c13_185 = arith.constant 13 : index
    %276 = memref.load %arg1[%c13_185] : memref<98xf32, #tpu.memory_space<smem>>
    %277 = vector.extract_strided_slice %245 {offsets = [0, 6], sizes = [16, 16], strides = [1, 1]} : vector<16x128xf32> to vector<16x16xf32>
    %278 = vector.broadcast %276 : f32 to vector<16x16xf32>
    %279 = arith.mulf %278, %277 : vector<16x16xf32>
    %280 = arith.addf %275, %279 : vector<16x16xf32>
    %c0_186 = arith.constant 0 : index
    %c7_187 = arith.constant 7 : index
    %c0_188 = arith.constant 0 : index
    %281 = vector.load %arg5[%c0_186, %c7_187, %c0_188] : memref<2x32x128xf32, #tpu.memory_space<vmem>>, vector<1x16x128xf32>
    %282 = vector.shape_cast %281 : vector<1x16x128xf32> to vector<16x128xf32>
    %c14_189 = arith.constant 14 : index
    %283 = memref.load %arg1[%c14_189] : memref<98xf32, #tpu.memory_space<smem>>
    %284 = vector.extract_strided_slice %282 {offsets = [0, 0], sizes = [16, 16], strides = [1, 1]} : vector<16x128xf32> to vector<16x16xf32>
    %285 = vector.broadcast %283 : f32 to vector<16x16xf32>
    %286 = arith.mulf %285, %284 : vector<16x16xf32>
    %287 = arith.addf %243, %286 : vector<16x16xf32>
    %c15_190 = arith.constant 15 : index
    %288 = memref.load %arg1[%c15_190] : memref<98xf32, #tpu.memory_space<smem>>
    %289 = vector.extract_strided_slice %282 {offsets = [0, 1], sizes = [16, 16], strides = [1, 1]} : vector<16x128xf32> to vector<16x16xf32>
    %290 = vector.broadcast %288 : f32 to vector<16x16xf32>
    %291 = arith.mulf %290, %289 : vector<16x16xf32>
    %292 = arith.addf %287, %291 : vector<16x16xf32>
    %c16_191 = arith.constant 16 : index
    %293 = memref.load %arg1[%c16_191] : memref<98xf32, #tpu.memory_space<smem>>
    %294 = vector.extract_strided_slice %282 {offsets = [0, 2], sizes = [16, 16], strides = [1, 1]} : vector<16x128xf32> to vector<16x16xf32>
    %295 = vector.broadcast %293 : f32 to vector<16x16xf32>
    %296 = arith.mulf %295, %294 : vector<16x16xf32>
    %297 = arith.addf %292, %296 : vector<16x16xf32>
    %c17_192 = arith.constant 17 : index
    %298 = memref.load %arg1[%c17_192] : memref<98xf32, #tpu.memory_space<smem>>
    %299 = vector.extract_strided_slice %282 {offsets = [0, 3], sizes = [16, 16], strides = [1, 1]} : vector<16x128xf32> to vector<16x16xf32>
    %300 = vector.broadcast %298 : f32 to vector<16x16xf32>
    %301 = arith.mulf %300, %299 : vector<16x16xf32>
    %302 = arith.addf %297, %301 : vector<16x16xf32>
    %c18_193 = arith.constant 18 : index
    %303 = memref.load %arg1[%c18_193] : memref<98xf32, #tpu.memory_space<smem>>
    %304 = vector.extract_strided_slice %282 {offsets = [0, 4], sizes = [16, 16], strides = [1, 1]} : vector<16x128xf32> to vector<16x16xf32>
    %305 = vector.broadcast %303 : f32 to vector<16x16xf32>
    %306 = arith.mulf %305, %304 : vector<16x16xf32>
    %307 = arith.addf %302, %306 : vector<16x16xf32>
    %c19_194 = arith.constant 19 : index
    %308 = memref.load %arg1[%c19_194] : memref<98xf32, #tpu.memory_space<smem>>
    %309 = vector.extract_strided_slice %282 {offsets = [0, 5], sizes = [16, 16], strides = [1, 1]} : vector<16x128xf32> to vector<16x16xf32>
    %310 = vector.broadcast %308 : f32 to vector<16x16xf32>
    %311 = arith.mulf %310, %309 : vector<16x16xf32>
    %312 = arith.addf %307, %311 : vector<16x16xf32>
    %c20_195 = arith.constant 20 : index
    %313 = memref.load %arg1[%c20_195] : memref<98xf32, #tpu.memory_space<smem>>
    %314 = vector.extract_strided_slice %282 {offsets = [0, 6], sizes = [16, 16], strides = [1, 1]} : vector<16x128xf32> to vector<16x16xf32>
    %315 = vector.broadcast %313 : f32 to vector<16x16xf32>
    %316 = arith.mulf %315, %314 : vector<16x16xf32>
    %317 = arith.addf %312, %316 : vector<16x16xf32>
    %c0_196 = arith.constant 0 : index
    %c8_197 = arith.constant 8 : index
    %c0_198 = arith.constant 0 : index
    %318 = vector.load %arg5[%c0_196, %c8_197, %c0_198] : memref<2x32x128xf32, #tpu.memory_space<vmem>>, vector<1x16x128xf32>
    %319 = vector.shape_cast %318 : vector<1x16x128xf32> to vector<16x128xf32>
    %c21_199 = arith.constant 21 : index
    %320 = memref.load %arg1[%c21_199] : memref<98xf32, #tpu.memory_space<smem>>
    %321 = vector.extract_strided_slice %319 {offsets = [0, 0], sizes = [16, 16], strides = [1, 1]} : vector<16x128xf32> to vector<16x16xf32>
    %322 = vector.broadcast %320 : f32 to vector<16x16xf32>
    %323 = arith.mulf %322, %321 : vector<16x16xf32>
    %324 = arith.addf %280, %323 : vector<16x16xf32>
    %c22_200 = arith.constant 22 : index
    %325 = memref.load %arg1[%c22_200] : memref<98xf32, #tpu.memory_space<smem>>
    %326 = vector.extract_strided_slice %319 {offsets = [0, 1], sizes = [16, 16], strides = [1, 1]} : vector<16x128xf32> to vector<16x16xf32>
    %327 = vector.broadcast %325 : f32 to vector<16x16xf32>
    %328 = arith.mulf %327, %326 : vector<16x16xf32>
    %329 = arith.addf %324, %328 : vector<16x16xf32>
    %c23_201 = arith.constant 23 : index
    %330 = memref.load %arg1[%c23_201] : memref<98xf32, #tpu.memory_space<smem>>
    %331 = vector.extract_strided_slice %319 {offsets = [0, 2], sizes = [16, 16], strides = [1, 1]} : vector<16x128xf32> to vector<16x16xf32>
    %332 = vector.broadcast %330 : f32 to vector<16x16xf32>
    %333 = arith.mulf %332, %331 : vector<16x16xf32>
    %334 = arith.addf %329, %333 : vector<16x16xf32>
    %c24_202 = arith.constant 24 : index
    %335 = memref.load %arg1[%c24_202] : memref<98xf32, #tpu.memory_space<smem>>
    %336 = vector.extract_strided_slice %319 {offsets = [0, 3], sizes = [16, 16], strides = [1, 1]} : vector<16x128xf32> to vector<16x16xf32>
    %337 = vector.broadcast %335 : f32 to vector<16x16xf32>
    %338 = arith.mulf %337, %336 : vector<16x16xf32>
    %339 = arith.addf %334, %338 : vector<16x16xf32>
    %c25 = arith.constant 25 : index
    %340 = memref.load %arg1[%c25] : memref<98xf32, #tpu.memory_space<smem>>
    %341 = vector.extract_strided_slice %319 {offsets = [0, 4], sizes = [16, 16], strides = [1, 1]} : vector<16x128xf32> to vector<16x16xf32>
    %342 = vector.broadcast %340 : f32 to vector<16x16xf32>
    %343 = arith.mulf %342, %341 : vector<16x16xf32>
    %344 = arith.addf %339, %343 : vector<16x16xf32>
    %c26 = arith.constant 26 : index
    %345 = memref.load %arg1[%c26] : memref<98xf32, #tpu.memory_space<smem>>
    %346 = vector.extract_strided_slice %319 {offsets = [0, 5], sizes = [16, 16], strides = [1, 1]} : vector<16x128xf32> to vector<16x16xf32>
    %347 = vector.broadcast %345 : f32 to vector<16x16xf32>
    %348 = arith.mulf %347, %346 : vector<16x16xf32>
    %349 = arith.addf %344, %348 : vector<16x16xf32>
    %c27 = arith.constant 27 : index
    %350 = memref.load %arg1[%c27] : memref<98xf32, #tpu.memory_space<smem>>
    %351 = vector.extract_strided_slice %319 {offsets = [0, 6], sizes = [16, 16], strides = [1, 1]} : vector<16x128xf32> to vector<16x16xf32>
    %352 = vector.broadcast %350 : f32 to vector<16x16xf32>
    %353 = arith.mulf %352, %351 : vector<16x16xf32>
    %354 = arith.addf %349, %353 : vector<16x16xf32>
    %c0_203 = arith.constant 0 : index
    %c9_204 = arith.constant 9 : index
    %c0_205 = arith.constant 0 : index
    %355 = vector.load %arg5[%c0_203, %c9_204, %c0_205] : memref<2x32x128xf32, #tpu.memory_space<vmem>>, vector<1x16x128xf32>
    %356 = vector.shape_cast %355 : vector<1x16x128xf32> to vector<16x128xf32>
    %c28 = arith.constant 28 : index
    %357 = memref.load %arg1[%c28] : memref<98xf32, #tpu.memory_space<smem>>
    %358 = vector.extract_strided_slice %356 {offsets = [0, 0], sizes = [16, 16], strides = [1, 1]} : vector<16x128xf32> to vector<16x16xf32>
    %359 = vector.broadcast %357 : f32 to vector<16x16xf32>
    %360 = arith.mulf %359, %358 : vector<16x16xf32>
    %361 = arith.addf %317, %360 : vector<16x16xf32>
    %c29 = arith.constant 29 : index
    %362 = memref.load %arg1[%c29] : memref<98xf32, #tpu.memory_space<smem>>
    %363 = vector.extract_strided_slice %356 {offsets = [0, 1], sizes = [16, 16], strides = [1, 1]} : vector<16x128xf32> to vector<16x16xf32>
    %364 = vector.broadcast %362 : f32 to vector<16x16xf32>
    %365 = arith.mulf %364, %363 : vector<16x16xf32>
    %366 = arith.addf %361, %365 : vector<16x16xf32>
    %c30 = arith.constant 30 : index
    %367 = memref.load %arg1[%c30] : memref<98xf32, #tpu.memory_space<smem>>
    %368 = vector.extract_strided_slice %356 {offsets = [0, 2], sizes = [16, 16], strides = [1, 1]} : vector<16x128xf32> to vector<16x16xf32>
    %369 = vector.broadcast %367 : f32 to vector<16x16xf32>
    %370 = arith.mulf %369, %368 : vector<16x16xf32>
    %371 = arith.addf %366, %370 : vector<16x16xf32>
    %c31 = arith.constant 31 : index
    %372 = memref.load %arg1[%c31] : memref<98xf32, #tpu.memory_space<smem>>
    %373 = vector.extract_strided_slice %356 {offsets = [0, 3], sizes = [16, 16], strides = [1, 1]} : vector<16x128xf32> to vector<16x16xf32>
    %374 = vector.broadcast %372 : f32 to vector<16x16xf32>
    %375 = arith.mulf %374, %373 : vector<16x16xf32>
    %376 = arith.addf %371, %375 : vector<16x16xf32>
    %c32_206 = arith.constant 32 : index
    %377 = memref.load %arg1[%c32_206] : memref<98xf32, #tpu.memory_space<smem>>
    %378 = vector.extract_strided_slice %356 {offsets = [0, 4], sizes = [16, 16], strides = [1, 1]} : vector<16x128xf32> to vector<16x16xf32>
    %379 = vector.broadcast %377 : f32 to vector<16x16xf32>
    %380 = arith.mulf %379, %378 : vector<16x16xf32>
    %381 = arith.addf %376, %380 : vector<16x16xf32>
    %c33 = arith.constant 33 : index
    %382 = memref.load %arg1[%c33] : memref<98xf32, #tpu.memory_space<smem>>
    %383 = vector.extract_strided_slice %356 {offsets = [0, 5], sizes = [16, 16], strides = [1, 1]} : vector<16x128xf32> to vector<16x16xf32>
    %384 = vector.broadcast %382 : f32 to vector<16x16xf32>
    %385 = arith.mulf %384, %383 : vector<16x16xf32>
    %386 = arith.addf %381, %385 : vector<16x16xf32>
    %c34 = arith.constant 34 : index
    %387 = memref.load %arg1[%c34] : memref<98xf32, #tpu.memory_space<smem>>
    %388 = vector.extract_strided_slice %356 {offsets = [0, 6], sizes = [16, 16], strides = [1, 1]} : vector<16x128xf32> to vector<16x16xf32>
    %389 = vector.broadcast %387 : f32 to vector<16x16xf32>
    %390 = arith.mulf %389, %388 : vector<16x16xf32>
    %391 = arith.addf %386, %390 : vector<16x16xf32>
    %c0_207 = arith.constant 0 : index
    %c10_208 = arith.constant 10 : index
    %c0_209 = arith.constant 0 : index
    %392 = vector.load %arg5[%c0_207, %c10_208, %c0_209] : memref<2x32x128xf32, #tpu.memory_space<vmem>>, vector<1x16x128xf32>
    %393 = vector.shape_cast %392 : vector<1x16x128xf32> to vector<16x128xf32>
    %c35 = arith.constant 35 : index
    %394 = memref.load %arg1[%c35] : memref<98xf32, #tpu.memory_space<smem>>
    %395 = vector.extract_strided_slice %393 {offsets = [0, 0], sizes = [16, 16], strides = [1, 1]} : vector<16x128xf32> to vector<16x16xf32>
    %396 = vector.broadcast %394 : f32 to vector<16x16xf32>
    %397 = arith.mulf %396, %395 : vector<16x16xf32>
    %398 = arith.addf %354, %397 : vector<16x16xf32>
    %c36 = arith.constant 36 : index
    %399 = memref.load %arg1[%c36] : memref<98xf32, #tpu.memory_space<smem>>
    %400 = vector.extract_strided_slice %393 {offsets = [0, 1], sizes = [16, 16], strides = [1, 1]} : vector<16x128xf32> to vector<16x16xf32>
    %401 = vector.broadcast %399 : f32 to vector<16x16xf32>
    %402 = arith.mulf %401, %400 : vector<16x16xf32>
    %403 = arith.addf %398, %402 : vector<16x16xf32>
    %c37 = arith.constant 37 : index
    %404 = memref.load %arg1[%c37] : memref<98xf32, #tpu.memory_space<smem>>
    %405 = vector.extract_strided_slice %393 {offsets = [0, 2], sizes = [16, 16], strides = [1, 1]} : vector<16x128xf32> to vector<16x16xf32>
    %406 = vector.broadcast %404 : f32 to vector<16x16xf32>
    %407 = arith.mulf %406, %405 : vector<16x16xf32>
    %408 = arith.addf %403, %407 : vector<16x16xf32>
    %c38 = arith.constant 38 : index
    %409 = memref.load %arg1[%c38] : memref<98xf32, #tpu.memory_space<smem>>
    %410 = vector.extract_strided_slice %393 {offsets = [0, 3], sizes = [16, 16], strides = [1, 1]} : vector<16x128xf32> to vector<16x16xf32>
    %411 = vector.broadcast %409 : f32 to vector<16x16xf32>
    %412 = arith.mulf %411, %410 : vector<16x16xf32>
    %413 = arith.addf %408, %412 : vector<16x16xf32>
    %c39 = arith.constant 39 : index
    %414 = memref.load %arg1[%c39] : memref<98xf32, #tpu.memory_space<smem>>
    %415 = vector.extract_strided_slice %393 {offsets = [0, 4], sizes = [16, 16], strides = [1, 1]} : vector<16x128xf32> to vector<16x16xf32>
    %416 = vector.broadcast %414 : f32 to vector<16x16xf32>
    %417 = arith.mulf %416, %415 : vector<16x16xf32>
    %418 = arith.addf %413, %417 : vector<16x16xf32>
    %c40 = arith.constant 40 : index
    %419 = memref.load %arg1[%c40] : memref<98xf32, #tpu.memory_space<smem>>
    %420 = vector.extract_strided_slice %393 {offsets = [0, 5], sizes = [16, 16], strides = [1, 1]} : vector<16x128xf32> to vector<16x16xf32>
    %421 = vector.broadcast %419 : f32 to vector<16x16xf32>
    %422 = arith.mulf %421, %420 : vector<16x16xf32>
    %423 = arith.addf %418, %422 : vector<16x16xf32>
    %c41 = arith.constant 41 : index
    %424 = memref.load %arg1[%c41] : memref<98xf32, #tpu.memory_space<smem>>
    %425 = vector.extract_strided_slice %393 {offsets = [0, 6], sizes = [16, 16], strides = [1, 1]} : vector<16x128xf32> to vector<16x16xf32>
    %426 = vector.broadcast %424 : f32 to vector<16x16xf32>
    %427 = arith.mulf %426, %425 : vector<16x16xf32>
    %428 = arith.addf %423, %427 : vector<16x16xf32>
    %c0_210 = arith.constant 0 : index
    %c11_211 = arith.constant 11 : index
    %c0_212 = arith.constant 0 : index
    %429 = vector.load %arg5[%c0_210, %c11_211, %c0_212] : memref<2x32x128xf32, #tpu.memory_space<vmem>>, vector<1x16x128xf32>
    %430 = vector.shape_cast %429 : vector<1x16x128xf32> to vector<16x128xf32>
    %c42 = arith.constant 42 : index
    %431 = memref.load %arg1[%c42] : memref<98xf32, #tpu.memory_space<smem>>
    %432 = vector.extract_strided_slice %430 {offsets = [0, 0], sizes = [16, 16], strides = [1, 1]} : vector<16x128xf32> to vector<16x16xf32>
    %433 = vector.broadcast %431 : f32 to vector<16x16xf32>
    %434 = arith.mulf %433, %432 : vector<16x16xf32>
    %435 = arith.addf %391, %434 : vector<16x16xf32>
    %c43 = arith.constant 43 : index
    %436 = memref.load %arg1[%c43] : memref<98xf32, #tpu.memory_space<smem>>
    %437 = vector.extract_strided_slice %430 {offsets = [0, 1], sizes = [16, 16], strides = [1, 1]} : vector<16x128xf32> to vector<16x16xf32>
    %438 = vector.broadcast %436 : f32 to vector<16x16xf32>
    %439 = arith.mulf %438, %437 : vector<16x16xf32>
    %440 = arith.addf %435, %439 : vector<16x16xf32>
    %c44 = arith.constant 44 : index
    %441 = memref.load %arg1[%c44] : memref<98xf32, #tpu.memory_space<smem>>
    %442 = vector.extract_strided_slice %430 {offsets = [0, 2], sizes = [16, 16], strides = [1, 1]} : vector<16x128xf32> to vector<16x16xf32>
    %443 = vector.broadcast %441 : f32 to vector<16x16xf32>
    %444 = arith.mulf %443, %442 : vector<16x16xf32>
    %445 = arith.addf %440, %444 : vector<16x16xf32>
    %c45 = arith.constant 45 : index
    %446 = memref.load %arg1[%c45] : memref<98xf32, #tpu.memory_space<smem>>
    %447 = vector.extract_strided_slice %430 {offsets = [0, 3], sizes = [16, 16], strides = [1, 1]} : vector<16x128xf32> to vector<16x16xf32>
    %448 = vector.broadcast %446 : f32 to vector<16x16xf32>
    %449 = arith.mulf %448, %447 : vector<16x16xf32>
    %450 = arith.addf %445, %449 : vector<16x16xf32>
    %c46 = arith.constant 46 : index
    %451 = memref.load %arg1[%c46] : memref<98xf32, #tpu.memory_space<smem>>
    %452 = vector.extract_strided_slice %430 {offsets = [0, 4], sizes = [16, 16], strides = [1, 1]} : vector<16x128xf32> to vector<16x16xf32>
    %453 = vector.broadcast %451 : f32 to vector<16x16xf32>
    %454 = arith.mulf %453, %452 : vector<16x16xf32>
    %455 = arith.addf %450, %454 : vector<16x16xf32>
    %c47 = arith.constant 47 : index
    %456 = memref.load %arg1[%c47] : memref<98xf32, #tpu.memory_space<smem>>
    %457 = vector.extract_strided_slice %430 {offsets = [0, 5], sizes = [16, 16], strides = [1, 1]} : vector<16x128xf32> to vector<16x16xf32>
    %458 = vector.broadcast %456 : f32 to vector<16x16xf32>
    %459 = arith.mulf %458, %457 : vector<16x16xf32>
    %460 = arith.addf %455, %459 : vector<16x16xf32>
    %c48_213 = arith.constant 48 : index
    %461 = memref.load %arg1[%c48_213] : memref<98xf32, #tpu.memory_space<smem>>
    %462 = vector.extract_strided_slice %430 {offsets = [0, 6], sizes = [16, 16], strides = [1, 1]} : vector<16x128xf32> to vector<16x16xf32>
    %463 = vector.broadcast %461 : f32 to vector<16x16xf32>
    %464 = arith.mulf %463, %462 : vector<16x16xf32>
    %465 = arith.addf %460, %464 : vector<16x16xf32>
    %c1_214 = arith.constant 1 : index
    %c5_215 = arith.constant 5 : index
    %c0_216 = arith.constant 0 : index
    %466 = vector.load %arg5[%c1_214, %c5_215, %c0_216] : memref<2x32x128xf32, #tpu.memory_space<vmem>>, vector<1x16x128xf32>
    %467 = vector.shape_cast %466 : vector<1x16x128xf32> to vector<16x128xf32>
    %c49 = arith.constant 49 : index
    %468 = memref.load %arg1[%c49] : memref<98xf32, #tpu.memory_space<smem>>
    %469 = vector.extract_strided_slice %467 {offsets = [0, 0], sizes = [16, 16], strides = [1, 1]} : vector<16x128xf32> to vector<16x16xf32>
    %470 = vector.broadcast %468 : f32 to vector<16x16xf32>
    %471 = arith.mulf %470, %469 : vector<16x16xf32>
    %472 = arith.addf %205, %471 : vector<16x16xf32>
    %c50 = arith.constant 50 : index
    %473 = memref.load %arg1[%c50] : memref<98xf32, #tpu.memory_space<smem>>
    %474 = vector.extract_strided_slice %467 {offsets = [0, 1], sizes = [16, 16], strides = [1, 1]} : vector<16x128xf32> to vector<16x16xf32>
    %475 = vector.broadcast %473 : f32 to vector<16x16xf32>
    %476 = arith.mulf %475, %474 : vector<16x16xf32>
    %477 = arith.addf %472, %476 : vector<16x16xf32>
    %c51 = arith.constant 51 : index
    %478 = memref.load %arg1[%c51] : memref<98xf32, #tpu.memory_space<smem>>
    %479 = vector.extract_strided_slice %467 {offsets = [0, 2], sizes = [16, 16], strides = [1, 1]} : vector<16x128xf32> to vector<16x16xf32>
    %480 = vector.broadcast %478 : f32 to vector<16x16xf32>
    %481 = arith.mulf %480, %479 : vector<16x16xf32>
    %482 = arith.addf %477, %481 : vector<16x16xf32>
    %c52 = arith.constant 52 : index
    %483 = memref.load %arg1[%c52] : memref<98xf32, #tpu.memory_space<smem>>
    %484 = vector.extract_strided_slice %467 {offsets = [0, 3], sizes = [16, 16], strides = [1, 1]} : vector<16x128xf32> to vector<16x16xf32>
    %485 = vector.broadcast %483 : f32 to vector<16x16xf32>
    %486 = arith.mulf %485, %484 : vector<16x16xf32>
    %487 = arith.addf %482, %486 : vector<16x16xf32>
    %c53 = arith.constant 53 : index
    %488 = memref.load %arg1[%c53] : memref<98xf32, #tpu.memory_space<smem>>
    %489 = vector.extract_strided_slice %467 {offsets = [0, 4], sizes = [16, 16], strides = [1, 1]} : vector<16x128xf32> to vector<16x16xf32>
    %490 = vector.broadcast %488 : f32 to vector<16x16xf32>
    %491 = arith.mulf %490, %489 : vector<16x16xf32>
    %492 = arith.addf %487, %491 : vector<16x16xf32>
    %c54 = arith.constant 54 : index
    %493 = memref.load %arg1[%c54] : memref<98xf32, #tpu.memory_space<smem>>
    %494 = vector.extract_strided_slice %467 {offsets = [0, 5], sizes = [16, 16], strides = [1, 1]} : vector<16x128xf32> to vector<16x16xf32>
    %495 = vector.broadcast %493 : f32 to vector<16x16xf32>
    %496 = arith.mulf %495, %494 : vector<16x16xf32>
    %497 = arith.addf %492, %496 : vector<16x16xf32>
    %c55 = arith.constant 55 : index
    %498 = memref.load %arg1[%c55] : memref<98xf32, #tpu.memory_space<smem>>
    %499 = vector.extract_strided_slice %467 {offsets = [0, 6], sizes = [16, 16], strides = [1, 1]} : vector<16x128xf32> to vector<16x16xf32>
    %500 = vector.broadcast %498 : f32 to vector<16x16xf32>
    %501 = arith.mulf %500, %499 : vector<16x16xf32>
    %502 = arith.addf %497, %501 : vector<16x16xf32>
    %c1_217 = arith.constant 1 : index
    %c6_218 = arith.constant 6 : index
    %c0_219 = arith.constant 0 : index
    %503 = vector.load %arg5[%c1_217, %c6_218, %c0_219] : memref<2x32x128xf32, #tpu.memory_space<vmem>>, vector<1x16x128xf32>
    %504 = vector.shape_cast %503 : vector<1x16x128xf32> to vector<16x128xf32>
    %c56 = arith.constant 56 : index
    %505 = memref.load %arg1[%c56] : memref<98xf32, #tpu.memory_space<smem>>
    %506 = vector.extract_strided_slice %504 {offsets = [0, 0], sizes = [16, 16], strides = [1, 1]} : vector<16x128xf32> to vector<16x16xf32>
    %507 = vector.broadcast %505 : f32 to vector<16x16xf32>
    %508 = arith.mulf %507, %506 : vector<16x16xf32>
    %509 = arith.addf %206, %508 : vector<16x16xf32>
    %c57 = arith.constant 57 : index
    %510 = memref.load %arg1[%c57] : memref<98xf32, #tpu.memory_space<smem>>
    %511 = vector.extract_strided_slice %504 {offsets = [0, 1], sizes = [16, 16], strides = [1, 1]} : vector<16x128xf32> to vector<16x16xf32>
    %512 = vector.broadcast %510 : f32 to vector<16x16xf32>
    %513 = arith.mulf %512, %511 : vector<16x16xf32>
    %514 = arith.addf %509, %513 : vector<16x16xf32>
    %c58 = arith.constant 58 : index
    %515 = memref.load %arg1[%c58] : memref<98xf32, #tpu.memory_space<smem>>
    %516 = vector.extract_strided_slice %504 {offsets = [0, 2], sizes = [16, 16], strides = [1, 1]} : vector<16x128xf32> to vector<16x16xf32>
    %517 = vector.broadcast %515 : f32 to vector<16x16xf32>
    %518 = arith.mulf %517, %516 : vector<16x16xf32>
    %519 = arith.addf %514, %518 : vector<16x16xf32>
    %c59 = arith.constant 59 : index
    %520 = memref.load %arg1[%c59] : memref<98xf32, #tpu.memory_space<smem>>
    %521 = vector.extract_strided_slice %504 {offsets = [0, 3], sizes = [16, 16], strides = [1, 1]} : vector<16x128xf32> to vector<16x16xf32>
    %522 = vector.broadcast %520 : f32 to vector<16x16xf32>
    %523 = arith.mulf %522, %521 : vector<16x16xf32>
    %524 = arith.addf %519, %523 : vector<16x16xf32>
    %c60 = arith.constant 60 : index
    %525 = memref.load %arg1[%c60] : memref<98xf32, #tpu.memory_space<smem>>
    %526 = vector.extract_strided_slice %504 {offsets = [0, 4], sizes = [16, 16], strides = [1, 1]} : vector<16x128xf32> to vector<16x16xf32>
    %527 = vector.broadcast %525 : f32 to vector<16x16xf32>
    %528 = arith.mulf %527, %526 : vector<16x16xf32>
    %529 = arith.addf %524, %528 : vector<16x16xf32>
    %c61 = arith.constant 61 : index
    %530 = memref.load %arg1[%c61] : memref<98xf32, #tpu.memory_space<smem>>
    %531 = vector.extract_strided_slice %504 {offsets = [0, 5], sizes = [16, 16], strides = [1, 1]} : vector<16x128xf32> to vector<16x16xf32>
    %532 = vector.broadcast %530 : f32 to vector<16x16xf32>
    %533 = arith.mulf %532, %531 : vector<16x16xf32>
    %534 = arith.addf %529, %533 : vector<16x16xf32>
    %c62 = arith.constant 62 : index
    %535 = memref.load %arg1[%c62] : memref<98xf32, #tpu.memory_space<smem>>
    %536 = vector.extract_strided_slice %504 {offsets = [0, 6], sizes = [16, 16], strides = [1, 1]} : vector<16x128xf32> to vector<16x16xf32>
    %537 = vector.broadcast %535 : f32 to vector<16x16xf32>
    %538 = arith.mulf %537, %536 : vector<16x16xf32>
    %539 = arith.addf %534, %538 : vector<16x16xf32>
    %c1_220 = arith.constant 1 : index
    %c7_221 = arith.constant 7 : index
    %c0_222 = arith.constant 0 : index
    %540 = vector.load %arg5[%c1_220, %c7_221, %c0_222] : memref<2x32x128xf32, #tpu.memory_space<vmem>>, vector<1x16x128xf32>
    %541 = vector.shape_cast %540 : vector<1x16x128xf32> to vector<16x128xf32>
    %c63 = arith.constant 63 : index
    %542 = memref.load %arg1[%c63] : memref<98xf32, #tpu.memory_space<smem>>
    %543 = vector.extract_strided_slice %541 {offsets = [0, 0], sizes = [16, 16], strides = [1, 1]} : vector<16x128xf32> to vector<16x16xf32>
    %544 = vector.broadcast %542 : f32 to vector<16x16xf32>
    %545 = arith.mulf %544, %543 : vector<16x16xf32>
    %546 = arith.addf %502, %545 : vector<16x16xf32>
    %c64_223 = arith.constant 64 : index
    %547 = memref.load %arg1[%c64_223] : memref<98xf32, #tpu.memory_space<smem>>
    %548 = vector.extract_strided_slice %541 {offsets = [0, 1], sizes = [16, 16], strides = [1, 1]} : vector<16x128xf32> to vector<16x16xf32>
    %549 = vector.broadcast %547 : f32 to vector<16x16xf32>
    %550 = arith.mulf %549, %548 : vector<16x16xf32>
    %551 = arith.addf %546, %550 : vector<16x16xf32>
    %c65 = arith.constant 65 : index
    %552 = memref.load %arg1[%c65] : memref<98xf32, #tpu.memory_space<smem>>
    %553 = vector.extract_strided_slice %541 {offsets = [0, 2], sizes = [16, 16], strides = [1, 1]} : vector<16x128xf32> to vector<16x16xf32>
    %554 = vector.broadcast %552 : f32 to vector<16x16xf32>
    %555 = arith.mulf %554, %553 : vector<16x16xf32>
    %556 = arith.addf %551, %555 : vector<16x16xf32>
    %c66 = arith.constant 66 : index
    %557 = memref.load %arg1[%c66] : memref<98xf32, #tpu.memory_space<smem>>
    %558 = vector.extract_strided_slice %541 {offsets = [0, 3], sizes = [16, 16], strides = [1, 1]} : vector<16x128xf32> to vector<16x16xf32>
    %559 = vector.broadcast %557 : f32 to vector<16x16xf32>
    %560 = arith.mulf %559, %558 : vector<16x16xf32>
    %561 = arith.addf %556, %560 : vector<16x16xf32>
    %c67 = arith.constant 67 : index
    %562 = memref.load %arg1[%c67] : memref<98xf32, #tpu.memory_space<smem>>
    %563 = vector.extract_strided_slice %541 {offsets = [0, 4], sizes = [16, 16], strides = [1, 1]} : vector<16x128xf32> to vector<16x16xf32>
    %564 = vector.broadcast %562 : f32 to vector<16x16xf32>
    %565 = arith.mulf %564, %563 : vector<16x16xf32>
    %566 = arith.addf %561, %565 : vector<16x16xf32>
    %c68 = arith.constant 68 : index
    %567 = memref.load %arg1[%c68] : memref<98xf32, #tpu.memory_space<smem>>
    %568 = vector.extract_strided_slice %541 {offsets = [0, 5], sizes = [16, 16], strides = [1, 1]} : vector<16x128xf32> to vector<16x16xf32>
    %569 = vector.broadcast %567 : f32 to vector<16x16xf32>
    %570 = arith.mulf %569, %568 : vector<16x16xf32>
    %571 = arith.addf %566, %570 : vector<16x16xf32>
    %c69 = arith.constant 69 : index
    %572 = memref.load %arg1[%c69] : memref<98xf32, #tpu.memory_space<smem>>
    %573 = vector.extract_strided_slice %541 {offsets = [0, 6], sizes = [16, 16], strides = [1, 1]} : vector<16x128xf32> to vector<16x16xf32>
    %574 = vector.broadcast %572 : f32 to vector<16x16xf32>
    %575 = arith.mulf %574, %573 : vector<16x16xf32>
    %576 = arith.addf %571, %575 : vector<16x16xf32>
    %c1_224 = arith.constant 1 : index
    %c8_225 = arith.constant 8 : index
    %c0_226 = arith.constant 0 : index
    %577 = vector.load %arg5[%c1_224, %c8_225, %c0_226] : memref<2x32x128xf32, #tpu.memory_space<vmem>>, vector<1x16x128xf32>
    %578 = vector.shape_cast %577 : vector<1x16x128xf32> to vector<16x128xf32>
    %c70 = arith.constant 70 : index
    %579 = memref.load %arg1[%c70] : memref<98xf32, #tpu.memory_space<smem>>
    %580 = vector.extract_strided_slice %578 {offsets = [0, 0], sizes = [16, 16], strides = [1, 1]} : vector<16x128xf32> to vector<16x16xf32>
    %581 = vector.broadcast %579 : f32 to vector<16x16xf32>
    %582 = arith.mulf %581, %580 : vector<16x16xf32>
    %583 = arith.addf %539, %582 : vector<16x16xf32>
    %c71 = arith.constant 71 : index
    %584 = memref.load %arg1[%c71] : memref<98xf32, #tpu.memory_space<smem>>
    %585 = vector.extract_strided_slice %578 {offsets = [0, 1], sizes = [16, 16], strides = [1, 1]} : vector<16x128xf32> to vector<16x16xf32>
    %586 = vector.broadcast %584 : f32 to vector<16x16xf32>
    %587 = arith.mulf %586, %585 : vector<16x16xf32>
    %588 = arith.addf %583, %587 : vector<16x16xf32>
    %c72 = arith.constant 72 : index
    %589 = memref.load %arg1[%c72] : memref<98xf32, #tpu.memory_space<smem>>
    %590 = vector.extract_strided_slice %578 {offsets = [0, 2], sizes = [16, 16], strides = [1, 1]} : vector<16x128xf32> to vector<16x16xf32>
    %591 = vector.broadcast %589 : f32 to vector<16x16xf32>
    %592 = arith.mulf %591, %590 : vector<16x16xf32>
    %593 = arith.addf %588, %592 : vector<16x16xf32>
    %c73 = arith.constant 73 : index
    %594 = memref.load %arg1[%c73] : memref<98xf32, #tpu.memory_space<smem>>
    %595 = vector.extract_strided_slice %578 {offsets = [0, 3], sizes = [16, 16], strides = [1, 1]} : vector<16x128xf32> to vector<16x16xf32>
    %596 = vector.broadcast %594 : f32 to vector<16x16xf32>
    %597 = arith.mulf %596, %595 : vector<16x16xf32>
    %598 = arith.addf %593, %597 : vector<16x16xf32>
    %c74 = arith.constant 74 : index
    %599 = memref.load %arg1[%c74] : memref<98xf32, #tpu.memory_space<smem>>
    %600 = vector.extract_strided_slice %578 {offsets = [0, 4], sizes = [16, 16], strides = [1, 1]} : vector<16x128xf32> to vector<16x16xf32>
    %601 = vector.broadcast %599 : f32 to vector<16x16xf32>
    %602 = arith.mulf %601, %600 : vector<16x16xf32>
    %603 = arith.addf %598, %602 : vector<16x16xf32>
    %c75 = arith.constant 75 : index
    %604 = memref.load %arg1[%c75] : memref<98xf32, #tpu.memory_space<smem>>
    %605 = vector.extract_strided_slice %578 {offsets = [0, 5], sizes = [16, 16], strides = [1, 1]} : vector<16x128xf32> to vector<16x16xf32>
    %606 = vector.broadcast %604 : f32 to vector<16x16xf32>
    %607 = arith.mulf %606, %605 : vector<16x16xf32>
    %608 = arith.addf %603, %607 : vector<16x16xf32>
    %c76 = arith.constant 76 : index
    %609 = memref.load %arg1[%c76] : memref<98xf32, #tpu.memory_space<smem>>
    %610 = vector.extract_strided_slice %578 {offsets = [0, 6], sizes = [16, 16], strides = [1, 1]} : vector<16x128xf32> to vector<16x16xf32>
    %611 = vector.broadcast %609 : f32 to vector<16x16xf32>
    %612 = arith.mulf %611, %610 : vector<16x16xf32>
    %613 = arith.addf %608, %612 : vector<16x16xf32>
    %c1_227 = arith.constant 1 : index
    %c9_228 = arith.constant 9 : index
    %c0_229 = arith.constant 0 : index
    %614 = vector.load %arg5[%c1_227, %c9_228, %c0_229] : memref<2x32x128xf32, #tpu.memory_space<vmem>>, vector<1x16x128xf32>
    %615 = vector.shape_cast %614 : vector<1x16x128xf32> to vector<16x128xf32>
    %c77 = arith.constant 77 : index
    %616 = memref.load %arg1[%c77] : memref<98xf32, #tpu.memory_space<smem>>
    %617 = vector.extract_strided_slice %615 {offsets = [0, 0], sizes = [16, 16], strides = [1, 1]} : vector<16x128xf32> to vector<16x16xf32>
    %618 = vector.broadcast %616 : f32 to vector<16x16xf32>
    %619 = arith.mulf %618, %617 : vector<16x16xf32>
    %620 = arith.addf %576, %619 : vector<16x16xf32>
    %c78 = arith.constant 78 : index
    %621 = memref.load %arg1[%c78] : memref<98xf32, #tpu.memory_space<smem>>
    %622 = vector.extract_strided_slice %615 {offsets = [0, 1], sizes = [16, 16], strides = [1, 1]} : vector<16x128xf32> to vector<16x16xf32>
    %623 = vector.broadcast %621 : f32 to vector<16x16xf32>
    %624 = arith.mulf %623, %622 : vector<16x16xf32>
    %625 = arith.addf %620, %624 : vector<16x16xf32>
    %c79 = arith.constant 79 : index
    %626 = memref.load %arg1[%c79] : memref<98xf32, #tpu.memory_space<smem>>
    %627 = vector.extract_strided_slice %615 {offsets = [0, 2], sizes = [16, 16], strides = [1, 1]} : vector<16x128xf32> to vector<16x16xf32>
    %628 = vector.broadcast %626 : f32 to vector<16x16xf32>
    %629 = arith.mulf %628, %627 : vector<16x16xf32>
    %630 = arith.addf %625, %629 : vector<16x16xf32>
    %c80_230 = arith.constant 80 : index
    %631 = memref.load %arg1[%c80_230] : memref<98xf32, #tpu.memory_space<smem>>
    %632 = vector.extract_strided_slice %615 {offsets = [0, 3], sizes = [16, 16], strides = [1, 1]} : vector<16x128xf32> to vector<16x16xf32>
    %633 = vector.broadcast %631 : f32 to vector<16x16xf32>
    %634 = arith.mulf %633, %632 : vector<16x16xf32>
    %635 = arith.addf %630, %634 : vector<16x16xf32>
    %c81 = arith.constant 81 : index
    %636 = memref.load %arg1[%c81] : memref<98xf32, #tpu.memory_space<smem>>
    %637 = vector.extract_strided_slice %615 {offsets = [0, 4], sizes = [16, 16], strides = [1, 1]} : vector<16x128xf32> to vector<16x16xf32>
    %638 = vector.broadcast %636 : f32 to vector<16x16xf32>
    %639 = arith.mulf %638, %637 : vector<16x16xf32>
    %640 = arith.addf %635, %639 : vector<16x16xf32>
    %c82 = arith.constant 82 : index
    %641 = memref.load %arg1[%c82] : memref<98xf32, #tpu.memory_space<smem>>
    %642 = vector.extract_strided_slice %615 {offsets = [0, 5], sizes = [16, 16], strides = [1, 1]} : vector<16x128xf32> to vector<16x16xf32>
    %643 = vector.broadcast %641 : f32 to vector<16x16xf32>
    %644 = arith.mulf %643, %642 : vector<16x16xf32>
    %645 = arith.addf %640, %644 : vector<16x16xf32>
    %c83 = arith.constant 83 : index
    %646 = memref.load %arg1[%c83] : memref<98xf32, #tpu.memory_space<smem>>
    %647 = vector.extract_strided_slice %615 {offsets = [0, 6], sizes = [16, 16], strides = [1, 1]} : vector<16x128xf32> to vector<16x16xf32>
    %648 = vector.broadcast %646 : f32 to vector<16x16xf32>
    %649 = arith.mulf %648, %647 : vector<16x16xf32>
    %650 = arith.addf %645, %649 : vector<16x16xf32>
    %c1_231 = arith.constant 1 : index
    %c10_232 = arith.constant 10 : index
    %c0_233 = arith.constant 0 : index
    %651 = vector.load %arg5[%c1_231, %c10_232, %c0_233] : memref<2x32x128xf32, #tpu.memory_space<vmem>>, vector<1x16x128xf32>
    %652 = vector.shape_cast %651 : vector<1x16x128xf32> to vector<16x128xf32>
    %c84 = arith.constant 84 : index
    %653 = memref.load %arg1[%c84] : memref<98xf32, #tpu.memory_space<smem>>
    %654 = vector.extract_strided_slice %652 {offsets = [0, 0], sizes = [16, 16], strides = [1, 1]} : vector<16x128xf32> to vector<16x16xf32>
    %655 = vector.broadcast %653 : f32 to vector<16x16xf32>
    %656 = arith.mulf %655, %654 : vector<16x16xf32>
    %657 = arith.addf %613, %656 : vector<16x16xf32>
    %c85 = arith.constant 85 : index
    %658 = memref.load %arg1[%c85] : memref<98xf32, #tpu.memory_space<smem>>
    %659 = vector.extract_strided_slice %652 {offsets = [0, 1], sizes = [16, 16], strides = [1, 1]} : vector<16x128xf32> to vector<16x16xf32>
    %660 = vector.broadcast %658 : f32 to vector<16x16xf32>
    %661 = arith.mulf %660, %659 : vector<16x16xf32>
    %662 = arith.addf %657, %661 : vector<16x16xf32>
    %c86 = arith.constant 86 : index
    %663 = memref.load %arg1[%c86] : memref<98xf32, #tpu.memory_space<smem>>
    %664 = vector.extract_strided_slice %652 {offsets = [0, 2], sizes = [16, 16], strides = [1, 1]} : vector<16x128xf32> to vector<16x16xf32>
    %665 = vector.broadcast %663 : f32 to vector<16x16xf32>
    %666 = arith.mulf %665, %664 : vector<16x16xf32>
    %667 = arith.addf %662, %666 : vector<16x16xf32>
    %c87 = arith.constant 87 : index
    %668 = memref.load %arg1[%c87] : memref<98xf32, #tpu.memory_space<smem>>
    %669 = vector.extract_strided_slice %652 {offsets = [0, 3], sizes = [16, 16], strides = [1, 1]} : vector<16x128xf32> to vector<16x16xf32>
    %670 = vector.broadcast %668 : f32 to vector<16x16xf32>
    %671 = arith.mulf %670, %669 : vector<16x16xf32>
    %672 = arith.addf %667, %671 : vector<16x16xf32>
    %c88 = arith.constant 88 : index
    %673 = memref.load %arg1[%c88] : memref<98xf32, #tpu.memory_space<smem>>
    %674 = vector.extract_strided_slice %652 {offsets = [0, 4], sizes = [16, 16], strides = [1, 1]} : vector<16x128xf32> to vector<16x16xf32>
    %675 = vector.broadcast %673 : f32 to vector<16x16xf32>
    %676 = arith.mulf %675, %674 : vector<16x16xf32>
    %677 = arith.addf %672, %676 : vector<16x16xf32>
    %c89 = arith.constant 89 : index
    %678 = memref.load %arg1[%c89] : memref<98xf32, #tpu.memory_space<smem>>
    %679 = vector.extract_strided_slice %652 {offsets = [0, 5], sizes = [16, 16], strides = [1, 1]} : vector<16x128xf32> to vector<16x16xf32>
    %680 = vector.broadcast %678 : f32 to vector<16x16xf32>
    %681 = arith.mulf %680, %679 : vector<16x16xf32>
    %682 = arith.addf %677, %681 : vector<16x16xf32>
    %c90 = arith.constant 90 : index
    %683 = memref.load %arg1[%c90] : memref<98xf32, #tpu.memory_space<smem>>
    %684 = vector.extract_strided_slice %652 {offsets = [0, 6], sizes = [16, 16], strides = [1, 1]} : vector<16x128xf32> to vector<16x16xf32>
    %685 = vector.broadcast %683 : f32 to vector<16x16xf32>
    %686 = arith.mulf %685, %684 : vector<16x16xf32>
    %687 = arith.addf %682, %686 : vector<16x16xf32>
    %c1_234 = arith.constant 1 : index
    %c11_235 = arith.constant 11 : index
    %c0_236 = arith.constant 0 : index
    %688 = vector.load %arg5[%c1_234, %c11_235, %c0_236] : memref<2x32x128xf32, #tpu.memory_space<vmem>>, vector<1x16x128xf32>
    %689 = vector.shape_cast %688 : vector<1x16x128xf32> to vector<16x128xf32>
    %c91 = arith.constant 91 : index
    %690 = memref.load %arg1[%c91] : memref<98xf32, #tpu.memory_space<smem>>
    %691 = vector.extract_strided_slice %689 {offsets = [0, 0], sizes = [16, 16], strides = [1, 1]} : vector<16x128xf32> to vector<16x16xf32>
    %692 = vector.broadcast %690 : f32 to vector<16x16xf32>
    %693 = arith.mulf %692, %691 : vector<16x16xf32>
    %694 = arith.addf %650, %693 : vector<16x16xf32>
    %c92 = arith.constant 92 : index
    %695 = memref.load %arg1[%c92] : memref<98xf32, #tpu.memory_space<smem>>
    %696 = vector.extract_strided_slice %689 {offsets = [0, 1], sizes = [16, 16], strides = [1, 1]} : vector<16x128xf32> to vector<16x16xf32>
    %697 = vector.broadcast %695 : f32 to vector<16x16xf32>
    %698 = arith.mulf %697, %696 : vector<16x16xf32>
    %699 = arith.addf %694, %698 : vector<16x16xf32>
    %c93 = arith.constant 93 : index
    %700 = memref.load %arg1[%c93] : memref<98xf32, #tpu.memory_space<smem>>
    %701 = vector.extract_strided_slice %689 {offsets = [0, 2], sizes = [16, 16], strides = [1, 1]} : vector<16x128xf32> to vector<16x16xf32>
    %702 = vector.broadcast %700 : f32 to vector<16x16xf32>
    %703 = arith.mulf %702, %701 : vector<16x16xf32>
    %704 = arith.addf %699, %703 : vector<16x16xf32>
    %c94 = arith.constant 94 : index
    %705 = memref.load %arg1[%c94] : memref<98xf32, #tpu.memory_space<smem>>
    %706 = vector.extract_strided_slice %689 {offsets = [0, 3], sizes = [16, 16], strides = [1, 1]} : vector<16x128xf32> to vector<16x16xf32>
    %707 = vector.broadcast %705 : f32 to vector<16x16xf32>
    %708 = arith.mulf %707, %706 : vector<16x16xf32>
    %709 = arith.addf %704, %708 : vector<16x16xf32>
    %c95 = arith.constant 95 : index
    %710 = memref.load %arg1[%c95] : memref<98xf32, #tpu.memory_space<smem>>
    %711 = vector.extract_strided_slice %689 {offsets = [0, 4], sizes = [16, 16], strides = [1, 1]} : vector<16x128xf32> to vector<16x16xf32>
    %712 = vector.broadcast %710 : f32 to vector<16x16xf32>
    %713 = arith.mulf %712, %711 : vector<16x16xf32>
    %714 = arith.addf %709, %713 : vector<16x16xf32>
    %c96_237 = arith.constant 96 : index
    %715 = memref.load %arg1[%c96_237] : memref<98xf32, #tpu.memory_space<smem>>
    %716 = vector.extract_strided_slice %689 {offsets = [0, 5], sizes = [16, 16], strides = [1, 1]} : vector<16x128xf32> to vector<16x16xf32>
    %717 = vector.broadcast %715 : f32 to vector<16x16xf32>
    %718 = arith.mulf %717, %716 : vector<16x16xf32>
    %719 = arith.addf %714, %718 : vector<16x16xf32>
    %c97 = arith.constant 97 : index
    %720 = memref.load %arg1[%c97] : memref<98xf32, #tpu.memory_space<smem>>
    %721 = vector.extract_strided_slice %689 {offsets = [0, 6], sizes = [16, 16], strides = [1, 1]} : vector<16x128xf32> to vector<16x16xf32>
    %722 = vector.broadcast %720 : f32 to vector<16x16xf32>
    %723 = arith.mulf %722, %721 : vector<16x16xf32>
    %724 = arith.addf %719, %723 : vector<16x16xf32>
    %725 = arith.addf %465, %428 : vector<16x16xf32>
    %726 = arith.addf %724, %687 : vector<16x16xf32>
    %727 = arith.addf %725, %726 : vector<16x16xf32>
    %728 = vector.broadcast %202 : f32 to vector<16x16xf32>
    %729 = arith.addf %727, %728 : vector<16x16xf32>
    %730 = arith.negf %729 : vector<16x16xf32>
    %731 = math.exp %730 : vector<16x16xf32>
    %cst_238 = arith.constant 1.000000e+00 : f32
    %732 = vector.broadcast %cst_238 : f32 to vector<16x16xf32>
    %733 = arith.addf %732, %731 : vector<16x16xf32>
    %734 = arith.divf %732, %733 : vector<16x16xf32>
    %735 = vector.extract_strided_slice %734 {offsets = [0, 0], sizes = [1, 16], strides = [1, 1]} : vector<16x16xf32> to vector<1x16xf32>
    %736 = vector.shape_cast %735 : vector<1x16xf32> to vector<16xf32>
    %c0_239 = arith.constant 0 : index
    %c0_240 = arith.constant 0 : index
    %737 = vector.load %arg7[%c0_239, %c0_240] : memref<1x256xf32, #tpu.memory_space<vmem>>, vector<1x16xf32>
    %738 = vector.shape_cast %737 : vector<1x16xf32> to vector<16xf32>
    %739 = vector.shape_cast %736 : vector<16xf32> to vector<1x16xf32>
    tpu.vector_store %arg7[%c0_239, %c0_240], %739 {strides = array<i32>} : memref<1x256xf32, #tpu.memory_space<vmem>>, vector<1x16xf32>,
    %740 = vector.extract_strided_slice %734 {offsets = [1, 0], sizes = [1, 16], strides = [1, 1]} : vector<16x16xf32> to vector<1x16xf32>
    %741 = vector.shape_cast %740 : vector<1x16xf32> to vector<16xf32>
    %c0_241 = arith.constant 0 : index
    %c16_242 = arith.constant 16 : index
    %742 = vector.load %arg7[%c0_241, %c16_242] : memref<1x256xf32, #tpu.memory_space<vmem>>, vector<1x16xf32>
    %743 = vector.shape_cast %742 : vector<1x16xf32> to vector<16xf32>
    %744 = vector.shape_cast %741 : vector<16xf32> to vector<1x16xf32>
    tpu.vector_store %arg7[%c0_241, %c16_242], %744 {strides = array<i32>} : memref<1x256xf32, #tpu.memory_space<vmem>>, vector<1x16xf32>,
    %745 = vector.extract_strided_slice %734 {offsets = [2, 0], sizes = [1, 16], strides = [1, 1]} : vector<16x16xf32> to vector<1x16xf32>
    %746 = vector.shape_cast %745 : vector<1x16xf32> to vector<16xf32>
    %c0_243 = arith.constant 0 : index
    %c32_244 = arith.constant 32 : index
    %747 = vector.load %arg7[%c0_243, %c32_244] : memref<1x256xf32, #tpu.memory_space<vmem>>, vector<1x16xf32>
    %748 = vector.shape_cast %747 : vector<1x16xf32> to vector<16xf32>
    %749 = vector.shape_cast %746 : vector<16xf32> to vector<1x16xf32>
    tpu.vector_store %arg7[%c0_243, %c32_244], %749 {strides = array<i32>} : memref<1x256xf32, #tpu.memory_space<vmem>>, vector<1x16xf32>,
    %750 = vector.extract_strided_slice %734 {offsets = [3, 0], sizes = [1, 16], strides = [1, 1]} : vector<16x16xf32> to vector<1x16xf32>
    %751 = vector.shape_cast %750 : vector<1x16xf32> to vector<16xf32>
    %c0_245 = arith.constant 0 : index
    %c48_246 = arith.constant 48 : index
    %752 = vector.load %arg7[%c0_245, %c48_246] : memref<1x256xf32, #tpu.memory_space<vmem>>, vector<1x16xf32>
    %753 = vector.shape_cast %752 : vector<1x16xf32> to vector<16xf32>
    %754 = vector.shape_cast %751 : vector<16xf32> to vector<1x16xf32>
    tpu.vector_store %arg7[%c0_245, %c48_246], %754 {strides = array<i32>} : memref<1x256xf32, #tpu.memory_space<vmem>>, vector<1x16xf32>,
    %755 = vector.extract_strided_slice %734 {offsets = [4, 0], sizes = [1, 16], strides = [1, 1]} : vector<16x16xf32> to vector<1x16xf32>
    %756 = vector.shape_cast %755 : vector<1x16xf32> to vector<16xf32>
    %c0_247 = arith.constant 0 : index
    %c64_248 = arith.constant 64 : index
    %757 = vector.load %arg7[%c0_247, %c64_248] : memref<1x256xf32, #tpu.memory_space<vmem>>, vector<1x16xf32>
    %758 = vector.shape_cast %757 : vector<1x16xf32> to vector<16xf32>
    %759 = vector.shape_cast %756 : vector<16xf32> to vector<1x16xf32>
    tpu.vector_store %arg7[%c0_247, %c64_248], %759 {strides = array<i32>} : memref<1x256xf32, #tpu.memory_space<vmem>>, vector<1x16xf32>,
    %760 = vector.extract_strided_slice %734 {offsets = [5, 0], sizes = [1, 16], strides = [1, 1]} : vector<16x16xf32> to vector<1x16xf32>
    %761 = vector.shape_cast %760 : vector<1x16xf32> to vector<16xf32>
    %c0_249 = arith.constant 0 : index
    %c80_250 = arith.constant 80 : index
    %762 = vector.load %arg7[%c0_249, %c80_250] : memref<1x256xf32, #tpu.memory_space<vmem>>, vector<1x16xf32>
    %763 = vector.shape_cast %762 : vector<1x16xf32> to vector<16xf32>
    %764 = vector.shape_cast %761 : vector<16xf32> to vector<1x16xf32>
    tpu.vector_store %arg7[%c0_249, %c80_250], %764 {strides = array<i32>} : memref<1x256xf32, #tpu.memory_space<vmem>>, vector<1x16xf32>,
    %765 = vector.extract_strided_slice %734 {offsets = [6, 0], sizes = [1, 16], strides = [1, 1]} : vector<16x16xf32> to vector<1x16xf32>
    %766 = vector.shape_cast %765 : vector<1x16xf32> to vector<16xf32>
    %c0_251 = arith.constant 0 : index
    %c96_252 = arith.constant 96 : index
    %767 = vector.load %arg7[%c0_251, %c96_252] : memref<1x256xf32, #tpu.memory_space<vmem>>, vector<1x16xf32>
    %768 = vector.shape_cast %767 : vector<1x16xf32> to vector<16xf32>
    %769 = vector.shape_cast %766 : vector<16xf32> to vector<1x16xf32>
    tpu.vector_store %arg7[%c0_251, %c96_252], %769 {strides = array<i32>} : memref<1x256xf32, #tpu.memory_space<vmem>>, vector<1x16xf32>,
    %770 = vector.extract_strided_slice %734 {offsets = [7, 0], sizes = [1, 16], strides = [1, 1]} : vector<16x16xf32> to vector<1x16xf32>
    %771 = vector.shape_cast %770 : vector<1x16xf32> to vector<16xf32>
    %c0_253 = arith.constant 0 : index
    %c112_254 = arith.constant 112 : index
    %772 = vector.load %arg7[%c0_253, %c112_254] : memref<1x256xf32, #tpu.memory_space<vmem>>, vector<1x16xf32>
    %773 = vector.shape_cast %772 : vector<1x16xf32> to vector<16xf32>
    %774 = vector.shape_cast %771 : vector<16xf32> to vector<1x16xf32>
    tpu.vector_store %arg7[%c0_253, %c112_254], %774 {strides = array<i32>} : memref<1x256xf32, #tpu.memory_space<vmem>>, vector<1x16xf32>,
    %775 = vector.extract_strided_slice %734 {offsets = [8, 0], sizes = [1, 16], strides = [1, 1]} : vector<16x16xf32> to vector<1x16xf32>
    %776 = vector.shape_cast %775 : vector<1x16xf32> to vector<16xf32>
    %c0_255 = arith.constant 0 : index
    %c128_256 = arith.constant 128 : index
    %777 = vector.load %arg7[%c0_255, %c128_256] : memref<1x256xf32, #tpu.memory_space<vmem>>, vector<1x16xf32>
    %778 = vector.shape_cast %777 : vector<1x16xf32> to vector<16xf32>
    %779 = vector.shape_cast %776 : vector<16xf32> to vector<1x16xf32>
    tpu.vector_store %arg7[%c0_255, %c128_256], %779 {strides = array<i32>} : memref<1x256xf32, #tpu.memory_space<vmem>>, vector<1x16xf32>,
    %780 = vector.extract_strided_slice %734 {offsets = [9, 0], sizes = [1, 16], strides = [1, 1]} : vector<16x16xf32> to vector<1x16xf32>
    %781 = vector.shape_cast %780 : vector<1x16xf32> to vector<16xf32>
    %c0_257 = arith.constant 0 : index
    %c144_258 = arith.constant 144 : index
    %782 = vector.load %arg7[%c0_257, %c144_258] : memref<1x256xf32, #tpu.memory_space<vmem>>, vector<1x16xf32>
    %783 = vector.shape_cast %782 : vector<1x16xf32> to vector<16xf32>
    %784 = vector.shape_cast %781 : vector<16xf32> to vector<1x16xf32>
    tpu.vector_store %arg7[%c0_257, %c144_258], %784 {strides = array<i32>} : memref<1x256xf32, #tpu.memory_space<vmem>>, vector<1x16xf32>,
    %785 = vector.extract_strided_slice %734 {offsets = [10, 0], sizes = [1, 16], strides = [1, 1]} : vector<16x16xf32> to vector<1x16xf32>
    %786 = vector.shape_cast %785 : vector<1x16xf32> to vector<16xf32>
    %c0_259 = arith.constant 0 : index
    %c160_260 = arith.constant 160 : index
    %787 = vector.load %arg7[%c0_259, %c160_260] : memref<1x256xf32, #tpu.memory_space<vmem>>, vector<1x16xf32>
    %788 = vector.shape_cast %787 : vector<1x16xf32> to vector<16xf32>
    %789 = vector.shape_cast %786 : vector<16xf32> to vector<1x16xf32>
    tpu.vector_store %arg7[%c0_259, %c160_260], %789 {strides = array<i32>} : memref<1x256xf32, #tpu.memory_space<vmem>>, vector<1x16xf32>,
    %790 = vector.extract_strided_slice %734 {offsets = [11, 0], sizes = [1, 16], strides = [1, 1]} : vector<16x16xf32> to vector<1x16xf32>
    %791 = vector.shape_cast %790 : vector<1x16xf32> to vector<16xf32>
    %c0_261 = arith.constant 0 : index
    %c176_262 = arith.constant 176 : index
    %792 = vector.load %arg7[%c0_261, %c176_262] : memref<1x256xf32, #tpu.memory_space<vmem>>, vector<1x16xf32>
    %793 = vector.shape_cast %792 : vector<1x16xf32> to vector<16xf32>
    %794 = vector.shape_cast %791 : vector<16xf32> to vector<1x16xf32>
    tpu.vector_store %arg7[%c0_261, %c176_262], %794 {strides = array<i32>} : memref<1x256xf32, #tpu.memory_space<vmem>>, vector<1x16xf32>,
    %795 = vector.extract_strided_slice %734 {offsets = [12, 0], sizes = [1, 16], strides = [1, 1]} : vector<16x16xf32> to vector<1x16xf32>
    %796 = vector.shape_cast %795 : vector<1x16xf32> to vector<16xf32>
    %c0_263 = arith.constant 0 : index
    %c192_264 = arith.constant 192 : index
    %797 = vector.load %arg7[%c0_263, %c192_264] : memref<1x256xf32, #tpu.memory_space<vmem>>, vector<1x16xf32>
    %798 = vector.shape_cast %797 : vector<1x16xf32> to vector<16xf32>
    %799 = vector.shape_cast %796 : vector<16xf32> to vector<1x16xf32>
    tpu.vector_store %arg7[%c0_263, %c192_264], %799 {strides = array<i32>} : memref<1x256xf32, #tpu.memory_space<vmem>>, vector<1x16xf32>,
    %800 = vector.extract_strided_slice %734 {offsets = [13, 0], sizes = [1, 16], strides = [1, 1]} : vector<16x16xf32> to vector<1x16xf32>
    %801 = vector.shape_cast %800 : vector<1x16xf32> to vector<16xf32>
    %c0_265 = arith.constant 0 : index
    %c208_266 = arith.constant 208 : index
    %802 = vector.load %arg7[%c0_265, %c208_266] : memref<1x256xf32, #tpu.memory_space<vmem>>, vector<1x16xf32>
    %803 = vector.shape_cast %802 : vector<1x16xf32> to vector<16xf32>
    %804 = vector.shape_cast %801 : vector<16xf32> to vector<1x16xf32>
    tpu.vector_store %arg7[%c0_265, %c208_266], %804 {strides = array<i32>} : memref<1x256xf32, #tpu.memory_space<vmem>>, vector<1x16xf32>,
    %805 = vector.extract_strided_slice %734 {offsets = [14, 0], sizes = [1, 16], strides = [1, 1]} : vector<16x16xf32> to vector<1x16xf32>
    %806 = vector.shape_cast %805 : vector<1x16xf32> to vector<16xf32>
    %c0_267 = arith.constant 0 : index
    %c224_268 = arith.constant 224 : index
    %807 = vector.load %arg7[%c0_267, %c224_268] : memref<1x256xf32, #tpu.memory_space<vmem>>, vector<1x16xf32>
    %808 = vector.shape_cast %807 : vector<1x16xf32> to vector<16xf32>
    %809 = vector.shape_cast %806 : vector<16xf32> to vector<1x16xf32>
    tpu.vector_store %arg7[%c0_267, %c224_268], %809 {strides = array<i32>} : memref<1x256xf32, #tpu.memory_space<vmem>>, vector<1x16xf32>,
    %810 = vector.extract_strided_slice %734 {offsets = [15, 0], sizes = [1, 16], strides = [1, 1]} : vector<16x16xf32> to vector<1x16xf32>
    %811 = vector.shape_cast %810 : vector<1x16xf32> to vector<16xf32>
    %c0_269 = arith.constant 0 : index
    %c240_270 = arith.constant 240 : index
    %812 = vector.load %arg7[%c0_269, %c240_270] : memref<1x256xf32, #tpu.memory_space<vmem>>, vector<1x16xf32>
    %813 = vector.shape_cast %812 : vector<1x16xf32> to vector<16xf32>
    %814 = vector.shape_cast %811 : vector<16xf32> to vector<1x16xf32>
    tpu.vector_store %arg7[%c0_269, %c240_270], %814 {strides = array<i32>} : memref<1x256xf32, #tpu.memory_space<vmem>>, vector<1x16xf32>,
    %c0_271 = arith.constant 0 : index
    %c0_272 = arith.constant 0 : index
    %815 = vector.load %arg7[%c0_271, %c0_272] : memref<1x256xf32, #tpu.memory_space<vmem>>, vector<1x256xf32>
    %816 = vector.shape_cast %815 : vector<1x256xf32> to vector<256xf32>
    %817 = vector.shape_cast %816 : vector<256xf32> to vector<1x256xf32>
    %818 = vector.broadcast %817 : vector<1x256xf32> to vector<8x256xf32>
    %c0_273 = arith.constant 0 : index
    %c0_274 = arith.constant 0 : index
    %c0_275 = arith.constant 0 : index
    %819 = vector.load %arg3[%c0_273, %c0_274, %c0_275] : memref<1x4x256xf32, #tpu.memory_space<vmem>>, vector<1x4x256xf32>
    %820 = vector.shape_cast %819 : vector<1x4x256xf32> to vector<4x256xf32>
    %821 = vector.extract_strided_slice %818 {offsets = [0, 0], sizes = [4, 256], strides = [1, 1]} : vector<8x256xf32> to vector<4x256xf32>
    %822 = arith.mulf %820, %821 : vector<4x256xf32>
    %c0_276 = arith.constant 0 : index
    %c0_277 = arith.constant 0 : index
    %c0_278 = arith.constant 0 : index
    %823 = vector.load %arg4[%c0_276, %c0_277, %c0_278] : memref<1x4x256xf32, #tpu.memory_space<vmem>>, vector<1x4x256xf32>
    %824 = vector.shape_cast %823 : vector<1x4x256xf32> to vector<4x256xf32>
    %825 = vector.shape_cast %822 : vector<4x256xf32> to vector<1x4x256xf32>
    tpu.vector_store %arg4[%c0_276, %c0_277, %c0_278], %825 {strides = array<i32>} : memref<1x4x256xf32, #tpu.memory_space<vmem>>, vector<1x4x256xf32>,
    return
  }
  func.func @transform_0(%arg0: i32) -> i32 {
    %c0_i32 = arith.constant 0 : i32
    %c0_i32_0 = arith.constant 0 : i32
    return %c0_i32 : i32
  }
  func.func @transform_1(%arg0: i32) -> i32 {
    %c0_i32 = arith.constant 0 : i32
    %c0_i32_0 = arith.constant 0 : i32
    return %c0_i32 : i32
  }
  func.func @transform_2(%arg0: i32) -> (i32, i32, i32) {
    %c0_i32 = arith.constant 0 : i32
    %c0_i32_0 = arith.constant 0 : i32
    %c0_i32_1 = arith.constant 0 : i32
    return %arg0, %c0_i32, %c0_i32_0 : i32, i32, i32
  }
  func.func @transform_3(%arg0: i32) -> (i32, i32, i32) {
    %c0_i32 = arith.constant 0 : i32
    %c0_i32_0 = arith.constant 0 : i32
    %c0_i32_1 = arith.constant 0 : i32
    return %arg0, %c0_i32, %c0_i32_0 : i32, i32, i32
  }
}

</mosaic_0001>

<llo_original>
// kernel: tpu_custom_call.1
$region0: #{tpu_custom_call.1}
  #allocation0 [shape = 'u32[]', space=smem, size = 0x4, offset = 0x4, fixed_abs, tag = 'smem constant byte address 0x4 - core index']
  #allocation1 [shape = 'u32[144,128]{1,0:T(1,128)}', space=vmem, size = 0x12000, scoped, tag = 'internal scratch']
  #allocation2 [shape = 'f32[2,32,128]{2,1,0:T(8,128)}', space=vmem, size = 0x8000, scoped, tag = 'scratch operand']
  #allocation3 [shape = 'f32[2,256]{1,0:T(2,128)}', space=vmem, size = 0x800, scoped, tag = 'scratch operand']
  #allocation4 [shape = 'f32[1,256]{1,0:T(1,128)}', space=vmem, size = 0x400, scoped, tag = 'scratch operand']
  #allocation5 [shape = 'f32[1]{0:T(128)S(6)}', space=smem, size = 0x200, scoped, tag = 'scoped memory for tpu_custom_call.1']
  %s0 = inlined_call_operand.vmem [shape: f32[98], index: 0, kind: input, shape index: {}]
  %s1 = inlined_call_operand.<no memory space> [shape: f32[1], index: 1, kind: input, shape index: {}]
  %s2 = inlined_call_operand.hbm [shape: f32[2,4,256], index: 2, kind: input, shape index: {}]
  %s3 = inlined_call_operand.hbm [shape: f32[2,4,256], index: 3, kind: output, shape index: {}]
  %s4 = sld [smem:[#allocation0]]
  $region53: #{tpu_custom_call.1} parent=0
    _
  %s6 = ssub.s32 1, %s4
  %s7 = scalar_select 0, %s6, %s4
  %8 = sst [smem:[#allocation5]] %s1
  $region1: #{tpu_custom_call.1} parent=0
    #allocation6 [shape = 'u8[512]{0}', space=smem, size = 0x200, scoped, tag = 'input window, operand 0, single buffered']
    #allocation7 [shape = 's32[2]{0}', space=sflag, size = 0x8, scoped, tag = 'scoped memory for tpu_custom_call.1']
    #allocation8 [shape = 's32[2]{0}', space=sflag, size = 0x8, scoped, tag = 'scoped memory for tpu_custom_call.1']
    #allocation9 [shape = 's32[2]{0}', space=sflag, size = 0x8, scoped, tag = 'scoped memory for tpu_custom_call.1']
    #allocation10 [shape = 'u8[8192]{0}', space=vmem, size = 0x2000, scoped, tag = 'input window, operand 2']
    #allocation11 [shape = 'u8[8192]{0}', space=vmem, size = 0x2000, scoped, tag = 'output window, operand 0']
    %9 = vsyncpa [#allocation9], 0
    %10 = vsyncpa [#allocation7], 0
    %s11 = scalar_lea.sflag [#allocation7], 1
    %12 = vsyncpa %s11, 0
    %13 = vsyncpa [#allocation8], 0
    %s14 = scalar_lea.sflag [#allocation8], 1
    %15 = vsyncpa %s14, 0
    loop: start=0, step=1, limit=4
    $region2: #{tpu_custom_call.1} parent=1 // loop_pre_header
      _
    $region3: #{tpu_custom_call.1} parent=1 // loop_header
      %s17 = sphi 0, %s21
      %p18 = scmp.ge.s32.totalorder %s17, 4
      %s25 = sphi 0, %s25
      %s27 = sphi 0, %s25
      %s28 = sphi 0, %s27
      %s42 = sphi 0, %s28
      %s46 = sphi 0, %s46
      %s48 = sphi 0, %s46
      %s49 = sphi 0, %s48
      %s63 = sphi 0, %s49
      %s69 = sphi 0, %s71
      %s72 = sphi 0, %s69
      %s73 = sphi 0, %s72
      %s89 = sphi 0, %s73
      %s95 = sphi 0, %s97
      %s98 = sphi 0, %s95
      %s99 = sphi 0, %s98
      %s115 = sphi 0, %s99
    $region4: #{tpu_custom_call.1} parent=1 // loop_header_branch
      %20 = sbr.rel (%p18) target = $region8
    $region5: #{tpu_custom_call.1} parent=1 // loop_body
      %s22 = ssub.s32 %s17, 1
      %s23 = ssub.s32 %s17, 2
      %s24 = sadd.s32 %s17, 1
      %s26 = sadd.s32 %s25, 1
      %p29 = scmp.eq.s32.totalorder %s17, 1
      %p30 = scmp.ne.s32.totalorder %s25, %s27
      %p31 = scmp.eq.s32.totalorder %s17, 0
      %p32 = por %p30, %p31
      %p33 = scmp.ne.s32.totalorder %s25, %s27
      %p34 = scmp.eq.s32.totalorder %s22, 1
      %p35 = por %p33, %p34
      %p36 = scmp.ne.s32.totalorder %s27, %s28
      %p37 = scmp.eq.s32.totalorder %s22, 0
      %p38 = por %p36, %p37
      %p39 = scmp.ne.s32.totalorder %s27, %s28
      %p40 = scmp.eq.s32.totalorder %s23, 1
      %p41 = por %p39, %p40
      %p43 = scmp.ne.s32.totalorder %s28, %s42
      %p44 = scmp.eq.s32.totalorder %s23, 0
      %p45 = por %p43, %p44
      %s47 = sadd.s32 %s46, 1
      %p50 = scmp.eq.s32.totalorder %s17, 1
      %p51 = scmp.ne.s32.totalorder %s46, %s48
      %p52 = scmp.eq.s32.totalorder %s17, 0
      %p53 = por %p51, %p52
      %p54 = scmp.ne.s32.totalorder %s46, %s48
      %p55 = scmp.eq.s32.totalorder %s22, 1
      %p56 = por %p54, %p55
      %p57 = scmp.ne.s32.totalorder %s48, %s49
      %p58 = scmp.eq.s32.totalorder %s22, 0
      %p59 = por %p57, %p58
      %p60 = scmp.ne.s32.totalorder %s48, %s49
      %p61 = scmp.eq.s32.totalorder %s23, 1
      %p62 = por %p60, %p61
      %p64 = scmp.ne.s32.totalorder %s49, %s63
      %p65 = scmp.eq.s32.totalorder %s23, 0
      %p66 = por %p64, %p65
      %s67 = ssub.s32 %s17, %s24
      %p68 = scmp.eq.s32.totalorder %s67, 0
      %s70 = sadd.s32 %s69, 1
      %s71 = scalar_select %p68, %s69, %s70
      %p74 = pneg %p68
      %p75 = scmp.eq.s32.totalorder %s17, 1
      %p76 = por %p74, %p75
      %p77 = scmp.ne.s32.totalorder %s69, %s72
      %p78 = scmp.eq.s32.totalorder %s17, 0
      %p79 = por %p77, %p78
      %p80 = scmp.ne.s32.totalorder %s69, %s72
      %p81 = scmp.eq.s32.totalorder %s22, 1
      %p82 = por %p80, %p81
      %p83 = scmp.ne.s32.totalorder %s72, %s73
      %p84 = scmp.eq.s32.totalorder %s22, 0
      %p85 = por %p83, %p84
      %p86 = scmp.ne.s32.totalorder %s72, %s73
      %p87 = scmp.eq.s32.totalorder %s23, 1
      %p88 = por %p86, %p87
      %p90 = scmp.ne.s32.totalorder %s73, %s89
      %p91 = scmp.eq.s32.totalorder %s23, 0
      %p92 = por %p90, %p91
      %s93 = ssub.s32 %s17, %s24
      %p94 = scmp.eq.s32.totalorder %s93, 0
      %s96 = sadd.s32 %s95, 1
      %s97 = scalar_select %p94, %s95, %s96
      %p100 = pneg %p94
      %p101 = scmp.eq.s32.totalorder %s17, 1
      %p102 = por %p100, %p101
      %p103 = scmp.ne.s32.totalorder %s95, %s98
      %p104 = scmp.eq.s32.totalorder %s17, 0
      %p105 = por %p103, %p104
      %p106 = scmp.ne.s32.totalorder %s95, %s98
      %p107 = scmp.eq.s32.totalorder %s22, 1
      %p108 = por %p106, %p107
      %p109 = scmp.ne.s32.totalorder %s98, %s99
      %p110 = scmp.eq.s32.totalorder %s22, 0
      %p111 = por %p109, %p110
      %p112 = scmp.ne.s32.totalorder %s98, %s99
      %p113 = scmp.eq.s32.totalorder %s23, 1
      %p114 = por %p112, %p113
      %p116 = scmp.ne.s32.totalorder %s99, %s115
      %p117 = scmp.eq.s32.totalorder %s23, 0
      %p118 = por %p116, %p117
      %p119 = scmp.le.s32.totalorder 1, %s17
      %p120 = scmp.lt.s32.totalorder %s17, 3
      %p121 = pnand %p119, %p120
      %p122 = pneg %p121
      // Predicated region
      $region9: #{tpu_custom_call.1} parent=5 // pred_check
        _
      $region10: #{tpu_custom_call.1} parent=5 // pred_check_branch
        %124 = sbr.rel (%p121) target = $region12
      $region11: #{tpu_custom_call.1} parent=5 // pred_region
        %s125 = ssub.s32 %s17, 1
        // Predicated region
        $region13: #{tpu_custom_call.1} parent=11 // pred_check
          %p126 = pneg %p38
        $region14: #{tpu_custom_call.1} parent=11 // pred_check_branch
          %128 = sbr.rel (%p126) target = $region16
        $region15: #{tpu_custom_call.1} parent=11 // pred_region
          %s130 = ssub.s32 16, 16
          %131 = vsyncadd [#allocation9], %s130
          %s133 = sshll.u32 %s0, 4
          %s134 = int_to_ptr.vmem [resolvable:$true] %s133
          %136 = dma.vmem_to_smem %s134, 16, [#allocation6], [#allocation9]
        $region16: #{tpu_custom_call.1} parent=11 // pred_fallthru
          _
        // Predicated region
        $region17: #{tpu_custom_call.1} parent=11 // pred_check
          %p137 = pneg %p59
        $region18: #{tpu_custom_call.1} parent=11 // pred_check_branch
          %139 = sbr.rel (%p137) target = $region20
        $region19: #{tpu_custom_call.1} parent=11 // pred_region
          _
        $region20: #{tpu_custom_call.1} parent=11 // pred_fallthru
          _
      $region12: #{tpu_custom_call.1} parent=5 // pred_fallthru
        _
      %p140 = scmp.lt.s32.totalorder %s17, 2
      // Predicated region
      $region21: #{tpu_custom_call.1} parent=5 // pred_check
        %p141 = pneg %p140
      $region22: #{tpu_custom_call.1} parent=5 // pred_check_branch
        %143 = sbr.rel (%p141) target = $region24
      $region23: #{tpu_custom_call.1} parent=5 // pred_region
        // Predicated region
        $region25: #{tpu_custom_call.1} parent=23 // pred_check
          %p144 = pneg %p79
        $region26: #{tpu_custom_call.1} parent=23 // pred_check_branch
          %146 = sbr.rel (%p144) target = $region28
        $region27: #{tpu_custom_call.1} parent=23 // pred_region
          %s147 = sand.u32 %s69, 1
          %s148 = scalar_lea.sflag [#allocation7], %s147
          %s149 = sand.u32 %s69, 1
          %s150 = smul.addr %s149, 8
          %s151 = scalar_lea.vmem [#allocation10], %s150
          %s153 = ssub.s32 128, 128
          %154 = vsyncadd %s148, %s153
          %s155 = smul.addr %s17, 2
          %s156 = smul.addr %s155, 64
          %s157 = scalar_lea.hbm %s2, %s156
          %s159 = sshll.u32 %s151, 4
          %s160 = int_to_ptr.vmem [resolvable:$true] %s159
          %162 = dma.hbm_to_vmem [thread:$0]  %s157, 128, %s160, %s148
        $region28: #{tpu_custom_call.1} parent=23 // pred_fallthru
          _
      $region24: #{tpu_custom_call.1} parent=5 // pred_fallthru
        _
      %p163 = scmp.le.s32.totalorder 1, %s17
      %p164 = scmp.lt.s32.totalorder %s17, 3
      %p165 = pnand %p163, %p164
      %p166 = pneg %p165
      // Predicated region
      $region29: #{tpu_custom_call.1} parent=5 // pred_check
        _
      $region30: #{tpu_custom_call.1} parent=5 // pred_check_branch
        %168 = sbr.rel (%p165) target = $region32
      $region31: #{tpu_custom_call.1} parent=5 // pred_region
        %s169 = ssub.s32 %s17, 1
        // Predicated region
        $region33: #{tpu_custom_call.1} parent=31 // pred_check
          %p170 = pneg %p38
        $region34: #{tpu_custom_call.1} parent=31 // pred_check_branch
          %172 = sbr.rel (%p170) target = $region36
        $region35: #{tpu_custom_call.1} parent=31 // pred_region
          %173 = dma.done [#allocation9], 16
        $region36: #{tpu_custom_call.1} parent=31 // pred_fallthru
          _
        %s174 = sand.u32 %s72, 1
        %s175 = scalar_lea.sflag [#allocation7], %s174
        %s176 = sand.u32 %s72, 1
        %s177 = smul.addr %s176, 8
        %s178 = scalar_lea.vmem [#allocation10], %s177
        // Predicated region
        $region37: #{tpu_custom_call.1} parent=31 // pred_check
          %p179 = pneg %p85
        $region38: #{tpu_custom_call.1} parent=31 // pred_check_branch
          %181 = sbr.rel (%p179) target = $region40
        $region39: #{tpu_custom_call.1} parent=31 // pred_region
          %182 = dma.done %s175, 128
        $region40: #{tpu_custom_call.1} parent=31 // pred_fallthru
          _
        %183 = sfence
        %p184 = pneg %p38
        %p185 = pneg %p35
        %p186 = pneg %p59
        %p187 = pneg %p56
        %s188 = sand.u32 %s72, 1
        %s189 = scalar_lea.sflag [#allocation7], %s188
        %s190 = sand.u32 %s72, 1
        %s191 = smul.addr %s190, 8
        %s192 = scalar_lea.vmem [#allocation10], %s191
        %p193 = pneg %p85
        %p194 = pneg %p82
        %p195 = pneg %p111
        %p196 = pneg %p108
        %s197 = sand.u32 %s98, 1
        %s198 = scalar_lea.sflag [#allocation8], %s197
        %s199 = sand.u32 %s98, 1
        %s200 = smul.addr %s199, 8
        %s201 = scalar_lea.vmem [#allocation11], %s200
        %v202 = vld [vmem:[%s178] sm:$0xff]
        %v204 = vcombine.high %v202, %v202
        %vm206 = vcmask 1043456
        %v207 = vsel %vm206, %v202, -inf
        %v208 = vrot.slane %v207, 4
        %v209 = vmax.f32 %v207, %v208
        %v210 = vrot.slane %v209, 2
        %v211 = vmax.f32 %v209, %v210
        %v212 = vrot.slane %v211, 1
        %v213 = vmax.f32 %v211, %v212
        %v214 = vsel %vm206, %v204, -inf
        %v215 = vrot.slane %v214, 4
        %v216 = vmax.f32 %v214, %v215
        %v217 = vrot.slane %v216, 2
        %v218 = vmax.f32 %v216, %v217
        %v219 = vrot.slane %v218, 1
        %v220 = vmax.f32 %v218, %v219
        %v221 = vsel %vm206, %v202, 0.0
        %v222 = vrot.slane %v221, 4
        %v223 = vadd.f32 %v221, %v222
        %v224 = vrot.slane %v223, 2
        %v225 = vadd.f32 %v223, %v224
        %v226 = vrot.slane %v225, 1
        %v227 = vadd.f32 %v225, %v226
        %v228 = vsel %vm206, %v204, 0.0
        %v229 = vrot.slane %v228, 4
        %v230 = vadd.f32 %v228, %v229
        %v231 = vrot.slane %v230, 2
        %v232 = vadd.f32 %v230, %v231
        %v233 = vrot.slane %v232, 1
        %v234 = vadd.f32 %v232, %v233
        %v237 = vcombine.low %v213, %v220
        %v239 = vunpack.c.l.s4 1966171168
        %v240 = vunpack.c.0.s8 %v239
        %v241 = vlaneseq
        %v242 = vshrl.u32 %v241, 7
        %v243 = vsub.s32 %v240, %v242
        %v244 = vrot.slane %v237, %v243
        %v246 = vunpack.c.l.s4 1966171168
        %v247 = vunpack.c.0.s8 %v246
        %v248 = vlaneseq
        %v249 = vshrl.u32 %v248, 7
        %v250 = vsub.s32 %v247, %v249
        %v251 = vrot.slane %v244, %v250
        %v253 = vlaneseq
        %vm254 = vcmp.ge.s32.totalorder %v253, 0
        %vm255 = vcmp.lt.s32.totalorder %v253, 256
        %vm256 = vmand %vm254, %vm255
        %257 = vst.msk [vmem:[#allocation3] ss:$2 sm:$0x3] %vm256, %v251
        %v260 = vcombine.low %v227, %v234
        %v262 = vunpack.c.l.s4 1966171168
        %v263 = vunpack.c.0.s8 %v262
        %v264 = vlaneseq
        %v265 = vshrl.u32 %v264, 7
        %v266 = vsub.s32 %v263, %v265
        %v267 = vrot.slane %v260, %v266
        %v269 = vunpack.c.l.s4 1966171168
        %v270 = vunpack.c.0.s8 %v269
        %v271 = vlaneseq
        %v272 = vshrl.u32 %v271, 7
        %v273 = vsub.s32 %v270, %v272
        %v274 = vrot.slane %v267, %v273
        %s276 = scalar_lea.vmem [#allocation3], 1
        %277 = vst.msk [vmem:[%s276] ss:$2 sm:$0x3] %vm256, %v274
        %278 = vst [vmem:[#allocation2 + $0x5] sm:$0x7] 0.0
        %279 = vst [vmem:[#allocation2 + $0x18] sm:$0x7] 0.0
        %vm280 = vcmask 23552
        %281 = vst.msk [vmem:[#allocation2 + $0x8] sm:$0xff] %vm280, 0.0
        %282 = vst.msk [vmem:[#allocation2 + $0x10] sm:$0xff] %vm280, 0.0
        %vm283 = vcmask 179352
        %284 = vst.msk [vmem:[#allocation2 + $0x8] sm:$0xff] %vm283, 0.0
        %285 = vst.msk [vmem:[#allocation2 + $0x10] sm:$0xff] %vm283, 0.0
        %v286 = vld [vmem:[#allocation3] sm:$0x1]
        %v288 = vlaneseq
        %v289 = vshrl.u32 %v288, 7
        %v290 = vsub.s32 0, %v289
        %v291 = vrot.slane %v286, %v290
        %292 = vrot.lane.b32.xlu0 %v291, 3
        %v293 = vpop.permute.xlu0 %292
        %vm295 = vcmask 147480
        %296 = vst.msk [vmem:[#allocation2 + $0x8] sm:$0x1] %vm295, %v293
        %v297 = vld [vmem:[#allocation3] sm:$0x1]
        %v299 = vlaneseq
        %v300 = vshrl.u32 %v299, 7
        %v301 = vsub.s32 0, %v300
        %v302 = vrot.slane %v297, %v301
        %303 = vrot.lane.b32.xlu0 %v302, 115
        %v304 = vpop.permute.xlu0 %303
        %306 = vst.msk [vmem:[#allocation2 + $0x9] sm:$0x1] %vm295, %v304
        %v307 = vld [vmem:[#allocation3] sm:$0x1]
        %v309 = vlaneseq
        %v310 = vshrl.u32 %v309, 7
        %v311 = vsub.s32 0, %v310
        %v312 = vrot.slane %v307, %v311
        %313 = vrot.lane.b32.xlu0 %v312, 99
        %v314 = vpop.permute.xlu0 %313
        %316 = vst.msk [vmem:[#allocation2 + $0xa] sm:$0x1] %vm295, %v314
        %v317 = vld [vmem:[#allocation3] sm:$0x1]
        %v319 = vlaneseq
        %v320 = vshrl.u32 %v319, 7
        %v321 = vsub.s32 0, %v320
        %v322 = vrot.slane %v317, %v321
        %323 = vrot.lane.b32.xlu0 %v322, 83
        %v324 = vpop.permute.xlu0 %323
        %326 = vst.msk [vmem:[#allocation2 + $0xb] sm:$0x1] %vm295, %v324
        %v327 = vld [vmem:[#allocation3] sm:$0x1]
        %v329 = vlaneseq
        %v330 = vshrl.u32 %v329, 7
        %v331 = vsub.s32 0, %v330
        %v332 = vrot.slane %v327, %v331
        %333 = vrot.lane.b32.xlu0 %v332, 67
        %v334 = vpop.permute.xlu0 %333
        %336 = vst.msk [vmem:[#allocation2 + $0xc] sm:$0x1] %vm295, %v334
        %v337 = vld [vmem:[#allocation3] sm:$0x1]
        %v339 = vlaneseq
        %v340 = vshrl.u32 %v339, 7
        %v341 = vsub.s32 0, %v340
        %v342 = vrot.slane %v337, %v341
        %343 = vrot.lane.b32.xlu0 %v342, 51
        %v344 = vpop.permute.xlu0 %343
        %346 = vst.msk [vmem:[#allocation2 + $0xd] sm:$0x1] %vm295, %v344
        %v347 = vld [vmem:[#allocation3] sm:$0x1]
        %v349 = vlaneseq
        %v350 = vshrl.u32 %v349, 7
        %v351 = vsub.s32 0, %v350
        %v352 = vrot.slane %v347, %v351
        %353 = vrot.lane.b32.xlu0 %v352, 35
        %v354 = vpop.permute.xlu0 %353
        %356 = vst.msk [vmem:[#allocation2 + $0xe] sm:$0x1] %vm295, %v354
        %v357 = vld [vmem:[#allocation3] sm:$0x1]
        %v359 = vlaneseq
        %v360 = vshrl.u32 %v359, 7
        %v361 = vsub.s32 0, %v360
        %v362 = vrot.slane %v357, %v361
        %363 = vrot.lane.b32.xlu0 %v362, 19
        %v364 = vpop.permute.xlu0 %363
        %366 = vst.msk [vmem:[#allocation2 + $0xf] sm:$0x1] %vm295, %v364
        %v367 = vld [vmem:[#allocation3 + $0x2] sm:$0x1]
        %v369 = vlaneseq
        %v370 = vshrl.u32 %v369, 7
        %v371 = vsub.s32 0, %v370
        %v372 = vrot.slane %v367, %v371
        %373 = vrot.lane.b32.xlu0 %v372, 3
        %v374 = vpop.permute.xlu0 %373
        %376 = vst.msk [vmem:[#allocation2 + $0x10] sm:$0x1] %vm295, %v374
        %v377 = vld [vmem:[#allocation3 + $0x2] sm:$0x1]
        %v379 = vlaneseq
        %v380 = vshrl.u32 %v379, 7
        %v381 = vsub.s32 0, %v380
        %v382 = vrot.slane %v377, %v381
        %383 = vrot.lane.b32.xlu0 %v382, 115
        %v384 = vpop.permute.xlu0 %383
        %386 = vst.msk [vmem:[#allocation2 + $0x11] sm:$0x1] %vm295, %v384
        %v387 = vld [vmem:[#allocation3 + $0x2] sm:$0x1]
        %v389 = vlaneseq
        %v390 = vshrl.u32 %v389, 7
        %v391 = vsub.s32 0, %v390
        %v392 = vrot.slane %v387, %v391
        %393 = vrot.lane.b32.xlu0 %v392, 99
        %v394 = vpop.permute.xlu0 %393
        %396 = vst.msk [vmem:[#allocation2 + $0x12] sm:$0x1] %vm295, %v394
        %v397 = vld [vmem:[#allocation3 + $0x2] sm:$0x1]
        %v399 = vlaneseq
        %v400 = vshrl.u32 %v399, 7
        %v401 = vsub.s32 0, %v400
        %v402 = vrot.slane %v397, %v401
        %403 = vrot.lane.b32.xlu0 %v402, 83
        %v404 = vpop.permute.xlu0 %403
        %406 = vst.msk [vmem:[#allocation2 + $0x13] sm:$0x1] %vm295, %v404
        %v407 = vld [vmem:[#allocation3 + $0x2] sm:$0x1]
        %v409 = vlaneseq
        %v410 = vshrl.u32 %v409, 7
        %v411 = vsub.s32 0, %v410
        %v412 = vrot.slane %v407, %v411
        %413 = vrot.lane.b32.xlu0 %v412, 67
        %v414 = vpop.permute.xlu0 %413
        %416 = vst.msk [vmem:[#allocation2 + $0x14] sm:$0x1] %vm295, %v414
        %v417 = vld [vmem:[#allocation3 + $0x2] sm:$0x1]
        %v419 = vlaneseq
        %v420 = vshrl.u32 %v419, 7
        %v421 = vsub.s32 0, %v420
        %v422 = vrot.slane %v417, %v421
        %423 = vrot.lane.b32.xlu0 %v422, 51
        %v424 = vpop.permute.xlu0 %423
        %426 = vst.msk [vmem:[#allocation2 + $0x15] sm:$0x1] %vm295, %v424
        %v427 = vld [vmem:[#allocation3 + $0x2] sm:$0x1]
        %v429 = vlaneseq
        %v430 = vshrl.u32 %v429, 7
        %v431 = vsub.s32 0, %v430
        %v432 = vrot.slane %v427, %v431
        %433 = vrot.lane.b32.xlu0 %v432, 35
        %v434 = vpop.permute.xlu0 %433
        %436 = vst.msk [vmem:[#allocation2 + $0x16] sm:$0x1] %vm295, %v434
        %v437 = vld [vmem:[#allocation3 + $0x2] sm:$0x1]
        %v439 = vlaneseq
        %v440 = vshrl.u32 %v439, 7
        %v441 = vsub.s32 0, %v440
        %v442 = vrot.slane %v437, %v441
        %443 = vrot.lane.b32.xlu0 %v442, 19
        %v444 = vpop.permute.xlu0 %443
        %446 = vst.msk [vmem:[#allocation2 + $0x17] sm:$0x1] %vm295, %v444
        %s447 = scalar_lea.vmem [#allocation2], 32
        %448 = vst [vmem:[%s447 + $0x5] sm:$0x7] 0.0
        %449 = vst [vmem:[%s447 + $0x18] sm:$0x7] 0.0
        %450 = vst.msk [vmem:[%s447 + $0x8] sm:$0xff] %vm280, 0.0
        %451 = vst.msk [vmem:[%s447 + $0x10] sm:$0xff] %vm280, 0.0
        %452 = vst.msk [vmem:[%s447 + $0x8] sm:$0xff] %vm283, 0.0
        %453 = vst.msk [vmem:[%s447 + $0x10] sm:$0xff] %vm283, 0.0
        %v454 = vld [vmem:[#allocation3 + $0x1] sm:$0x1]
        %v456 = vlaneseq
        %v457 = vshrl.u32 %v456, 7
        %v458 = vsub.s32 0, %v457
        %v459 = vrot.slane %v454, %v458
        %460 = vrot.lane.b32.xlu0 %v459, 3
        %v461 = vpop.permute.xlu0 %460
        %463 = vst.msk [vmem:[%s447 + $0x8] sm:$0x1] %vm295, %v461
        %v464 = vld [vmem:[#allocation3 + $0x1] sm:$0x1]
        %v466 = vlaneseq
        %v467 = vshrl.u32 %v466, 7
        %v468 = vsub.s32 0, %v467
        %v469 = vrot.slane %v464, %v468
        %470 = vrot.lane.b32.xlu0 %v469, 115
        %v471 = vpop.permute.xlu0 %470
        %473 = vst.msk [vmem:[%s447 + $0x9] sm:$0x1] %vm295, %v471
        %v474 = vld [vmem:[#allocation3 + $0x1] sm:$0x1]
        %v476 = vlaneseq
        %v477 = vshrl.u32 %v476, 7
        %v478 = vsub.s32 0, %v477
        %v479 = vrot.slane %v474, %v478
        %480 = vrot.lane.b32.xlu0 %v479, 99
        %v481 = vpop.permute.xlu0 %480
        %483 = vst.msk [vmem:[%s447 + $0xa] sm:$0x1] %vm295, %v481
        %v484 = vld [vmem:[#allocation3 + $0x1] sm:$0x1]
        %v486 = vlaneseq
        %v487 = vshrl.u32 %v486, 7
        %v488 = vsub.s32 0, %v487
        %v489 = vrot.slane %v484, %v488
        %490 = vrot.lane.b32.xlu0 %v489, 83
        %v491 = vpop.permute.xlu0 %490
        %493 = vst.msk [vmem:[%s447 + $0xb] sm:$0x1] %vm295, %v491
        %v494 = vld [vmem:[#allocation3 + $0x1] sm:$0x1]
        %v496 = vlaneseq
        %v497 = vshrl.u32 %v496, 7
        %v498 = vsub.s32 0, %v497
        %v499 = vrot.slane %v494, %v498
        %500 = vrot.lane.b32.xlu0 %v499, 67
        %v501 = vpop.permute.xlu0 %500
        %503 = vst.msk [vmem:[%s447 + $0xc] sm:$0x1] %vm295, %v501
        %v504 = vld [vmem:[#allocation3 + $0x1] sm:$0x1]
        %v506 = vlaneseq
        %v507 = vshrl.u32 %v506, 7
        %v508 = vsub.s32 0, %v507
        %v509 = vrot.slane %v504, %v508
        %510 = vrot.lane.b32.xlu0 %v509, 51
        %v511 = vpop.permute.xlu0 %510
        %513 = vst.msk [vmem:[%s447 + $0xd] sm:$0x1] %vm295, %v511
        %v514 = vld [vmem:[#allocation3 + $0x1] sm:$0x1]
        %v516 = vlaneseq
        %v517 = vshrl.u32 %v516, 7
        %v518 = vsub.s32 0, %v517
        %v519 = vrot.slane %v514, %v518
        %520 = vrot.lane.b32.xlu0 %v519, 35
        %v521 = vpop.permute.xlu0 %520
        %523 = vst.msk [vmem:[%s447 + $0xe] sm:$0x1] %vm295, %v521
        %v524 = vld [vmem:[#allocation3 + $0x1] sm:$0x1]
        %v526 = vlaneseq
        %v527 = vshrl.u32 %v526, 7
        %v528 = vsub.s32 0, %v527
        %v529 = vrot.slane %v524, %v528
        %530 = vrot.lane.b32.xlu0 %v529, 19
        %v531 = vpop.permute.xlu0 %530
        %533 = vst.msk [vmem:[%s447 + $0xf] sm:$0x1] %vm295, %v531
        %v534 = vld [vmem:[#allocation3 + $0x3] sm:$0x1]
        %v536 = vlaneseq
        %v537 = vshrl.u32 %v536, 7
        %v538 = vsub.s32 0, %v537
        %v539 = vrot.slane %v534, %v538
        %540 = vrot.lane.b32.xlu0 %v539, 3
        %v541 = vpop.permute.xlu0 %540
        %543 = vst.msk [vmem:[%s447 + $0x10] sm:$0x1] %vm295, %v541
        %v544 = vld [vmem:[#allocation3 + $0x3] sm:$0x1]
        %v546 = vlaneseq
        %v547 = vshrl.u32 %v546, 7
        %v548 = vsub.s32 0, %v547
        %v549 = vrot.slane %v544, %v548
        %550 = vrot.lane.b32.xlu0 %v549, 115
        %v551 = vpop.permute.xlu0 %550
        %553 = vst.msk [vmem:[%s447 + $0x11] sm:$0x1] %vm295, %v551
        %v554 = vld [vmem:[#allocation3 + $0x3] sm:$0x1]
        %v556 = vlaneseq
        %v557 = vshrl.u32 %v556, 7
        %v558 = vsub.s32 0, %v557
        %v559 = vrot.slane %v554, %v558
        %560 = vrot.lane.b32.xlu0 %v559, 99
        %v561 = vpop.permute.xlu0 %560
        %563 = vst.msk [vmem:[%s447 + $0x12] sm:$0x1] %vm295, %v561
        %v564 = vld [vmem:[#allocation3 + $0x3] sm:$0x1]
        %v566 = vlaneseq
        %v567 = vshrl.u32 %v566, 7
        %v568 = vsub.s32 0, %v567
        %v569 = vrot.slane %v564, %v568
        %570 = vrot.lane.b32.xlu0 %v569, 83
        %v571 = vpop.permute.xlu0 %570
        %573 = vst.msk [vmem:[%s447 + $0x13] sm:$0x1] %vm295, %v571
        %v574 = vld [vmem:[#allocation3 + $0x3] sm:$0x1]
        %v576 = vlaneseq
        %v577 = vshrl.u32 %v576, 7
        %v578 = vsub.s32 0, %v577
        %v579 = vrot.slane %v574, %v578
        %580 = vrot.lane.b32.xlu0 %v579, 67
        %v581 = vpop.permute.xlu0 %580
        %583 = vst.msk [vmem:[%s447 + $0x14] sm:$0x1] %vm295, %v581
        %v584 = vld [vmem:[#allocation3 + $0x3] sm:$0x1]
        %v586 = vlaneseq
        %v587 = vshrl.u32 %v586, 7
        %v588 = vsub.s32 0, %v587
        %v589 = vrot.slane %v584, %v588
        %590 = vrot.lane.b32.xlu0 %v589, 51
        %v591 = vpop.permute.xlu0 %590
        %593 = vst.msk [vmem:[%s447 + $0x15] sm:$0x1] %vm295, %v591
        %v594 = vld [vmem:[#allocation3 + $0x3] sm:$0x1]
        %v596 = vlaneseq
        %v597 = vshrl.u32 %v596, 7
        %v598 = vsub.s32 0, %v597
        %v599 = vrot.slane %v594, %v598
        %600 = vrot.lane.b32.xlu0 %v599, 35
        %v601 = vpop.permute.xlu0 %600
        %603 = vst.msk [vmem:[%s447 + $0x16] sm:$0x1] %vm295, %v601
        %v604 = vld [vmem:[#allocation3 + $0x3] sm:$0x1]
        %v606 = vlaneseq
        %v607 = vshrl.u32 %v606, 7
        %v608 = vsub.s32 0, %v607
        %v609 = vrot.slane %v604, %v608
        %610 = vrot.lane.b32.xlu0 %v609, 19
        %v611 = vpop.permute.xlu0 %610
        %613 = vst.msk [vmem:[%s447 + $0x17] sm:$0x1] %vm295, %v611
        %s614 = sld [smem:[#allocation5]]
        %v615 = vld [vmem:[#allocation2 + $0x5] sm:$0xff]
        %v616 = vld [vmem:[#allocation2 + $0xd] sm:$0xff]
        %s617 = sld [smem:[#allocation6]]
        %v618 = vstv %s617
        %v619 = vmul.f32 %v618, %v615
        %v620 = vmul.f32 %v618, %v616
        %v621 = vadd.f32 %v619, 0.0
        %v622 = vadd.f32 %v620, 0.0
        %s623 = sld [smem:[#allocation6 + $0x1]]
        %v624 = vstv %s623
        %v625 = vmul.f32 %v624, %v615
        %v626 = vmul.f32 %v624, %v616
        %629 = vrot.lane.b32.xlu0 %v625, 127
        %v630 = vpop.permute.xlu0 %629
        %631 = vrot.lane.b32.xlu0 %v626, 127
        %v632 = vpop.permute.xlu0 %631
        %v635 = vadd.f32 %v621, %v630
        %v636 = vadd.f32 %v622, %v632
        %s637 = sld [smem:[#allocation6 + $0x2]]
        %v638 = vstv %s637
        %v639 = vmul.f32 %v638, %v615
        %v640 = vmul.f32 %v638, %v616
        %643 = vrot.lane.b32.xlu0 %v639, 126
        %v644 = vpop.permute.xlu0 %643
        %645 = vrot.lane.b32.xlu0 %v640, 126
        %v646 = vpop.permute.xlu0 %645
        %v649 = vadd.f32 %v635, %v644
        %v650 = vadd.f32 %v636, %v646
        %s651 = sld [smem:[#allocation6 + $0x3]]
        %v652 = vstv %s651
        %v653 = vmul.f32 %v652, %v615
        %v654 = vmul.f32 %v652, %v616
        %657 = vrot.lane.b32.xlu0 %v653, 125
        %v658 = vpop.permute.xlu0 %657
        %659 = vrot.lane.b32.xlu0 %v654, 125
        %v660 = vpop.permute.xlu0 %659
        %v663 = vadd.f32 %v649, %v658
        %v664 = vadd.f32 %v650, %v660
        %s665 = sld [smem:[#allocation6 + $0x4]]
        %v666 = vstv %s665
        %v667 = vmul.f32 %v666, %v615
        %v668 = vmul.f32 %v666, %v616
        %671 = vrot.lane.b32.xlu0 %v667, 124
        %v672 = vpop.permute.xlu0 %671
        %673 = vrot.lane.b32.xlu0 %v668, 124
        %v674 = vpop.permute.xlu0 %673
        %v677 = vadd.f32 %v663, %v672
        %v678 = vadd.f32 %v664, %v674
        %s679 = sld [smem:[#allocation6 + $0x5]]
        %v680 = vstv %s679
        %v681 = vmul.f32 %v680, %v615
        %v682 = vmul.f32 %v680, %v616
        %685 = vrot.lane.b32.xlu0 %v681, 123
        %v686 = vpop.permute.xlu0 %685
        %687 = vrot.lane.b32.xlu0 %v682, 123
        %v688 = vpop.permute.xlu0 %687
        %v691 = vadd.f32 %v677, %v686
        %v692 = vadd.f32 %v678, %v688
        %s693 = sld [smem:[#allocation6 + $0x6]]
        %v694 = vstv %s693
        %v695 = vmul.f32 %v694, %v615
        %v696 = vmul.f32 %v694, %v616
        %699 = vrot.lane.b32.xlu0 %v695, 122
        %v700 = vpop.permute.xlu0 %699
        %701 = vrot.lane.b32.xlu0 %v696, 122
        %v702 = vpop.permute.xlu0 %701
        %v705 = vadd.f32 %v691, %v700
        %v706 = vadd.f32 %v692, %v702
        %v707 = vld [vmem:[#allocation2 + $0x6] sm:$0xff]
        %v708 = vld [vmem:[#allocation2 + $0xe] sm:$0xff]
        %s709 = sld [smem:[#allocation6 + $0x7]]
        %v710 = vstv %s709
        %v711 = vmul.f32 %v710, %v707
        %v712 = vmul.f32 %v710, %v708
        %v713 = vadd.f32 %v711, 0.0
        %v714 = vadd.f32 %v712, 0.0
        %s715 = sld [smem:[#allocation6 + $0x8]]
        %v716 = vstv %s715
        %v717 = vmul.f32 %v716, %v707
        %v718 = vmul.f32 %v716, %v708
        %721 = vrot.lane.b32.xlu0 %v717, 127
        %v722 = vpop.permute.xlu0 %721
        %723 = vrot.lane.b32.xlu0 %v718, 127
        %v724 = vpop.permute.xlu0 %723
        %v727 = vadd.f32 %v713, %v722
        %v728 = vadd.f32 %v714, %v724
        %s729 = sld [smem:[#allocation6 + $0x9]]
        %v730 = vstv %s729
        %v731 = vmul.f32 %v730, %v707
        %v732 = vmul.f32 %v730, %v708
        %735 = vrot.lane.b32.xlu0 %v731, 126
        %v736 = vpop.permute.xlu0 %735
        %737 = vrot.lane.b32.xlu0 %v732, 126
        %v738 = vpop.permute.xlu0 %737
        %v741 = vadd.f32 %v727, %v736
        %v742 = vadd.f32 %v728, %v738
        %s743 = sld [smem:[#allocation6 + $0xa]]
        %v744 = vstv %s743
        %v745 = vmul.f32 %v744, %v707
        %v746 = vmul.f32 %v744, %v708
        %749 = vrot.lane.b32.xlu0 %v745, 125
        %v750 = vpop.permute.xlu0 %749
        %751 = vrot.lane.b32.xlu0 %v746, 125
        %v752 = vpop.permute.xlu0 %751
        %v755 = vadd.f32 %v741, %v750
        %v756 = vadd.f32 %v742, %v752
        %s757 = sld [smem:[#allocation6 + $0xb]]
        %v758 = vstv %s757
        %v759 = vmul.f32 %v758, %v707
        %v760 = vmul.f32 %v758, %v708
        %763 = vrot.lane.b32.xlu0 %v759, 124
        %v764 = vpop.permute.xlu0 %763
        %765 = vrot.lane.b32.xlu0 %v760, 124
        %v766 = vpop.permute.xlu0 %765
        %v769 = vadd.f32 %v755, %v764
        %v770 = vadd.f32 %v756, %v766
        %s771 = sld [smem:[#allocation6 + $0xc]]
        %v772 = vstv %s771
        %v773 = vmul.f32 %v772, %v707
        %v774 = vmul.f32 %v772, %v708
        %777 = vrot.lane.b32.xlu0 %v773, 123
        %v778 = vpop.permute.xlu0 %777
        %779 = vrot.lane.b32.xlu0 %v774, 123
        %v780 = vpop.permute.xlu0 %779
        %v783 = vadd.f32 %v769, %v778
        %v784 = vadd.f32 %v770, %v780
        %s785 = sld [smem:[#allocation6 + $0xd]]
        %v786 = vstv %s785
        %v787 = vmul.f32 %v786, %v707
        %v788 = vmul.f32 %v786, %v708
        %791 = vrot.lane.b32.xlu0 %v787, 122
        %v792 = vpop.permute.xlu0 %791
        %793 = vrot.lane.b32.xlu0 %v788, 122
        %v794 = vpop.permute.xlu0 %793
        %v797 = vadd.f32 %v783, %v792
        %v798 = vadd.f32 %v784, %v794
        %v799 = vld [vmem:[#allocation2 + $0x7] sm:$0xff]
        %v800 = vld [vmem:[#allocation2 + $0xf] sm:$0xff]
        %s801 = sld [smem:[#allocation6 + $0xe]]
        %v802 = vstv %s801
        %v803 = vmul.f32 %v802, %v799
        %v804 = vmul.f32 %v802, %v800
        %v805 = vadd.f32 %v705, %v803
        %v806 = vadd.f32 %v706, %v804
        %s807 = sld [smem:[#allocation6 + $0xf]]
        %v808 = vstv %s807
        %v809 = vmul.f32 %v808, %v799
        %v810 = vmul.f32 %v808, %v800
        %813 = vrot.lane.b32.xlu0 %v809, 127
        %v814 = vpop.permute.xlu0 %813
        %815 = vrot.lane.b32.xlu0 %v810, 127
        %v816 = vpop.permute.xlu0 %815
        %v819 = vadd.f32 %v805, %v814
        %v820 = vadd.f32 %v806, %v816
        %s821 = sld [smem:[#allocation6 + $0x10]]
        %v822 = vstv %s821
        %v823 = vmul.f32 %v822, %v799
        %v824 = vmul.f32 %v822, %v800
        %827 = vrot.lane.b32.xlu0 %v823, 126
        %v828 = vpop.permute.xlu0 %827
        %829 = vrot.lane.b32.xlu0 %v824, 126
        %v830 = vpop.permute.xlu0 %829
        %v833 = vadd.f32 %v819, %v828
        %v834 = vadd.f32 %v820, %v830
        %s835 = sld [smem:[#allocation6 + $0x11]]
        %v836 = vstv %s835
        %v837 = vmul.f32 %v836, %v799
        %v838 = vmul.f32 %v836, %v800
        %841 = vrot.lane.b32.xlu0 %v837, 125
        %v842 = vpop.permute.xlu0 %841
        %843 = vrot.lane.b32.xlu0 %v838, 125
        %v844 = vpop.permute.xlu0 %843
        %v847 = vadd.f32 %v833, %v842
        %v848 = vadd.f32 %v834, %v844
        %s849 = sld [smem:[#allocation6 + $0x12]]
        %v850 = vstv %s849
        %v851 = vmul.f32 %v850, %v799
        %v852 = vmul.f32 %v850, %v800
        %855 = vrot.lane.b32.xlu0 %v851, 124
        %v856 = vpop.permute.xlu0 %855
        %857 = vrot.lane.b32.xlu0 %v852, 124
        %v858 = vpop.permute.xlu0 %857
        %v861 = vadd.f32 %v847, %v856
        %v862 = vadd.f32 %v848, %v858
        %s863 = sld [smem:[#allocation6 + $0x13]]
        %v864 = vstv %s863
        %v865 = vmul.f32 %v864, %v799
        %v866 = vmul.f32 %v864, %v800
        %869 = vrot.lane.b32.xlu0 %v865, 123
        %v870 = vpop.permute.xlu0 %869
        %871 = vrot.lane.b32.xlu0 %v866, 123
        %v872 = vpop.permute.xlu0 %871
        %v875 = vadd.f32 %v861, %v870
        %v876 = vadd.f32 %v862, %v872
        %s877 = sld [smem:[#allocation6 + $0x14]]
        %v878 = vstv %s877
        %v879 = vmul.f32 %v878, %v799
        %v880 = vmul.f32 %v878, %v800
        %883 = vrot.lane.b32.xlu0 %v879, 122
        %v884 = vpop.permute.xlu0 %883
        %885 = vrot.lane.b32.xlu0 %v880, 122
        %v886 = vpop.permute.xlu0 %885
        %v889 = vadd.f32 %v875, %v884
        %v890 = vadd.f32 %v876, %v886
        %v891 = vld [vmem:[#allocation2 + $0x8] sm:$0xff]
        %v892 = vld [vmem:[#allocation2 + $0x10] sm:$0xff]
        %s893 = sld [smem:[#allocation6 + $0x15]]
        %v894 = vstv %s893
        %v895 = vmul.f32 %v894, %v891
        %v896 = vmul.f32 %v894, %v892
        %v897 = vadd.f32 %v797, %v895
        %v898 = vadd.f32 %v798, %v896
        %s899 = sld [smem:[#allocation6 + $0x16]]
        %v900 = vstv %s899
        %v901 = vmul.f32 %v900, %v891
        %v902 = vmul.f32 %v900, %v892
        %905 = vrot.lane.b32.xlu0 %v901, 127
        %v906 = vpop.permute.xlu0 %905
        %907 = vrot.lane.b32.xlu0 %v902, 127
        %v908 = vpop.permute.xlu0 %907
        %v911 = vadd.f32 %v897, %v906
        %v912 = vadd.f32 %v898, %v908
        %s913 = sld [smem:[#allocation6 + $0x17]]
        %v914 = vstv %s913
        %v915 = vmul.f32 %v914, %v891
        %v916 = vmul.f32 %v914, %v892
        %919 = vrot.lane.b32.xlu0 %v915, 126
        %v920 = vpop.permute.xlu0 %919
        %921 = vrot.lane.b32.xlu0 %v916, 126
        %v922 = vpop.permute.xlu0 %921
        %v925 = vadd.f32 %v911, %v920
        %v926 = vadd.f32 %v912, %v922
        %s927 = sld [smem:[#allocation6 + $0x18]]
        %v928 = vstv %s927
        %v929 = vmul.f32 %v928, %v891
        %v930 = vmul.f32 %v928, %v892
        %933 = vrot.lane.b32.xlu0 %v929, 125
        %v934 = vpop.permute.xlu0 %933
        %935 = vrot.lane.b32.xlu0 %v930, 125
        %v936 = vpop.permute.xlu0 %935
        %v939 = vadd.f32 %v925, %v934
        %v940 = vadd.f32 %v926, %v936
        %s941 = sld [smem:[#allocation6 + $0x19]]
        %v942 = vstv %s941
        %v943 = vmul.f32 %v942, %v891
        %v944 = vmul.f32 %v942, %v892
        %947 = vrot.lane.b32.xlu0 %v943, 124
        %v948 = vpop.permute.xlu0 %947
        %949 = vrot.lane.b32.xlu0 %v944, 124
        %v950 = vpop.permute.xlu0 %949
        %v953 = vadd.f32 %v939, %v948
        %v954 = vadd.f32 %v940, %v950
        %s955 = sld [smem:[#allocation6 + $0x1a]]
        %v956 = vstv %s955
        %v957 = vmul.f32 %v956, %v891
        %v958 = vmul.f32 %v956, %v892
        %961 = vrot.lane.b32.xlu0 %v957, 123
        %v962 = vpop.permute.xlu0 %961
        %963 = vrot.lane.b32.xlu0 %v958, 123
        %v964 = vpop.permute.xlu0 %963
        %v967 = vadd.f32 %v953, %v962
        %v968 = vadd.f32 %v954, %v964
        %s969 = sld [smem:[#allocation6 + $0x1b]]
        %v970 = vstv %s969
        %v971 = vmul.f32 %v970, %v891
        %v972 = vmul.f32 %v970, %v892
        %975 = vrot.lane.b32.xlu0 %v971, 122
        %v976 = vpop.permute.xlu0 %975
        %977 = vrot.lane.b32.xlu0 %v972, 122
        %v978 = vpop.permute.xlu0 %977
        %v981 = vadd.f32 %v967, %v976
        %v982 = vadd.f32 %v968, %v978
        %v983 = vld [vmem:[#allocation2 + $0x9] sm:$0xff]
        %v984 = vld [vmem:[#allocation2 + $0x11] sm:$0xff]
        %s985 = sld [smem:[#allocation6 + $0x1c]]
        %v986 = vstv %s985
        %v987 = vmul.f32 %v986, %v983
        %v988 = vmul.f32 %v986, %v984
        %v989 = vadd.f32 %v889, %v987
        %v990 = vadd.f32 %v890, %v988
        %s991 = sld [smem:[#allocation6 + $0x1d]]
        %v992 = vstv %s991
        %v993 = vmul.f32 %v992, %v983
        %v994 = vmul.f32 %v992, %v984
        %997 = vrot.lane.b32.xlu0 %v993, 127
        %v998 = vpop.permute.xlu0 %997
        %999 = vrot.lane.b32.xlu0 %v994, 127
        %v1000 = vpop.permute.xlu0 %999
        %v1003 = vadd.f32 %v989, %v998
        %v1004 = vadd.f32 %v990, %v1000
        %s1005 = sld [smem:[#allocation6 + $0x1e]]
        %v1006 = vstv %s1005
        %v1007 = vmul.f32 %v1006, %v983
        %v1008 = vmul.f32 %v1006, %v984
        %1011 = vrot.lane.b32.xlu0 %v1007, 126
        %v1012 = vpop.permute.xlu0 %1011
        %1013 = vrot.lane.b32.xlu0 %v1008, 126
        %v1014 = vpop.permute.xlu0 %1013
        %v1017 = vadd.f32 %v1003, %v1012
        %v1018 = vadd.f32 %v1004, %v1014
        %s1019 = sld [smem:[#allocation6 + $0x1f]]
        %v1020 = vstv %s1019
        %v1021 = vmul.f32 %v1020, %v983
        %v1022 = vmul.f32 %v1020, %v984
        %1025 = vrot.lane.b32.xlu0 %v1021, 125
        %v1026 = vpop.permute.xlu0 %1025
        %1027 = vrot.lane.b32.xlu0 %v1022, 125
        %v1028 = vpop.permute.xlu0 %1027
        %v1031 = vadd.f32 %v1017, %v1026
        %v1032 = vadd.f32 %v1018, %v1028
        %s1033 = sld [smem:[#allocation6 + $0x20]]
        %v1034 = vstv %s1033
        %v1035 = vmul.f32 %v1034, %v983
        %v1036 = vmul.f32 %v1034, %v984
        %1039 = vrot.lane.b32.xlu0 %v1035, 124
        %v1040 = vpop.permute.xlu0 %1039
        %1041 = vrot.lane.b32.xlu0 %v1036, 124
        %v1042 = vpop.permute.xlu0 %1041
        %v1045 = vadd.f32 %v1031, %v1040
        %v1046 = vadd.f32 %v1032, %v1042
        %s1047 = sld [smem:[#allocation6 + $0x21]]
        %v1048 = vstv %s1047
        %v1049 = vmul.f32 %v1048, %v983
        %v1050 = vmul.f32 %v1048, %v984
        %1053 = vrot.lane.b32.xlu0 %v1049, 123
        %v1054 = vpop.permute.xlu0 %1053
        %1055 = vrot.lane.b32.xlu0 %v1050, 123
        %v1056 = vpop.permute.xlu0 %1055
        %v1059 = vadd.f32 %v1045, %v1054
        %v1060 = vadd.f32 %v1046, %v1056
        %s1061 = sld [smem:[#allocation6 + $0x22]]
        %v1062 = vstv %s1061
        %v1063 = vmul.f32 %v1062, %v983
        %v1064 = vmul.f32 %v1062, %v984
        %1067 = vrot.lane.b32.xlu0 %v1063, 122
        %v1068 = vpop.permute.xlu0 %1067
        %1069 = vrot.lane.b32.xlu0 %v1064, 122
        %v1070 = vpop.permute.xlu0 %1069
        %v1073 = vadd.f32 %v1059, %v1068
        %v1074 = vadd.f32 %v1060, %v1070
        %v1075 = vld [vmem:[#allocation2 + $0xa] sm:$0xff]
        %v1076 = vld [vmem:[#allocation2 + $0x12] sm:$0xff]
        %s1077 = sld [smem:[#allocation6 + $0x23]]
        %v1078 = vstv %s1077
        %v1079 = vmul.f32 %v1078, %v1075
        %v1080 = vmul.f32 %v1078, %v1076
        %v1081 = vadd.f32 %v981, %v1079
        %v1082 = vadd.f32 %v982, %v1080
        %s1083 = sld [smem:[#allocation6 + $0x24]]
        %v1084 = vstv %s1083
        %v1085 = vmul.f32 %v1084, %v1075
        %v1086 = vmul.f32 %v1084, %v1076
        %1089 = vrot.lane.b32.xlu0 %v1085, 127
        %v1090 = vpop.permute.xlu0 %1089
        %1091 = vrot.lane.b32.xlu0 %v1086, 127
        %v1092 = vpop.permute.xlu0 %1091
        %v1095 = vadd.f32 %v1081, %v1090
        %v1096 = vadd.f32 %v1082, %v1092
        %s1097 = sld [smem:[#allocation6 + $0x25]]
        %v1098 = vstv %s1097
        %v1099 = vmul.f32 %v1098, %v1075
        %v1100 = vmul.f32 %v1098, %v1076
        %1103 = vrot.lane.b32.xlu0 %v1099, 126
        %v1104 = vpop.permute.xlu0 %1103
        %1105 = vrot.lane.b32.xlu0 %v1100, 126
        %v1106 = vpop.permute.xlu0 %1105
        %v1109 = vadd.f32 %v1095, %v1104
        %v1110 = vadd.f32 %v1096, %v1106
        %s1111 = sld [smem:[#allocation6 + $0x26]]
        %v1112 = vstv %s1111
        %v1113 = vmul.f32 %v1112, %v1075
        %v1114 = vmul.f32 %v1112, %v1076
        %1117 = vrot.lane.b32.xlu0 %v1113, 125
        %v1118 = vpop.permute.xlu0 %1117
        %1119 = vrot.lane.b32.xlu0 %v1114, 125
        %v1120 = vpop.permute.xlu0 %1119
        %v1123 = vadd.f32 %v1109, %v1118
        %v1124 = vadd.f32 %v1110, %v1120
        %s1125 = sld [smem:[#allocation6 + $0x27]]
        %v1126 = vstv %s1125
        %v1127 = vmul.f32 %v1126, %v1075
        %v1128 = vmul.f32 %v1126, %v1076
        %1131 = vrot.lane.b32.xlu0 %v1127, 124
        %v1132 = vpop.permute.xlu0 %1131
        %1133 = vrot.lane.b32.xlu0 %v1128, 124
        %v1134 = vpop.permute.xlu0 %1133
        %v1137 = vadd.f32 %v1123, %v1132
        %v1138 = vadd.f32 %v1124, %v1134
        %s1139 = sld [smem:[#allocation6 + $0x28]]
        %v1140 = vstv %s1139
        %v1141 = vmul.f32 %v1140, %v1075
        %v1142 = vmul.f32 %v1140, %v1076
        %1145 = vrot.lane.b32.xlu0 %v1141, 123
        %v1146 = vpop.permute.xlu0 %1145
        %1147 = vrot.lane.b32.xlu0 %v1142, 123
        %v1148 = vpop.permute.xlu0 %1147
        %v1151 = vadd.f32 %v1137, %v1146
        %v1152 = vadd.f32 %v1138, %v1148
        %s1153 = sld [smem:[#allocation6 + $0x29]]
        %v1154 = vstv %s1153
        %v1155 = vmul.f32 %v1154, %v1075
        %v1156 = vmul.f32 %v1154, %v1076
        %1159 = vrot.lane.b32.xlu0 %v1155, 122
        %v1160 = vpop.permute.xlu0 %1159
        %1161 = vrot.lane.b32.xlu0 %v1156, 122
        %v1162 = vpop.permute.xlu0 %1161
        %v1165 = vadd.f32 %v1151, %v1160
        %v1166 = vadd.f32 %v1152, %v1162
        %v1167 = vld [vmem:[#allocation2 + $0xb] sm:$0xff]
        %v1168 = vld [vmem:[#allocation2 + $0x13] sm:$0xff]
        %s1169 = sld [smem:[#allocation6 + $0x2a]]
        %v1170 = vstv %s1169
        %v1171 = vmul.f32 %v1170, %v1167
        %v1172 = vmul.f32 %v1170, %v1168
        %v1173 = vadd.f32 %v1073, %v1171
        %v1174 = vadd.f32 %v1074, %v1172
        %s1175 = sld [smem:[#allocation6 + $0x2b]]
        %v1176 = vstv %s1175
        %v1177 = vmul.f32 %v1176, %v1167
        %v1178 = vmul.f32 %v1176, %v1168
        %1181 = vrot.lane.b32.xlu0 %v1177, 127
        %v1182 = vpop.permute.xlu0 %1181
        %1183 = vrot.lane.b32.xlu0 %v1178, 127
        %v1184 = vpop.permute.xlu0 %1183
        %v1187 = vadd.f32 %v1173, %v1182
        %v1188 = vadd.f32 %v1174, %v1184
        %s1189 = sld [smem:[#allocation6 + $0x2c]]
        %v1190 = vstv %s1189
        %v1191 = vmul.f32 %v1190, %v1167
        %v1192 = vmul.f32 %v1190, %v1168
        %1195 = vrot.lane.b32.xlu0 %v1191, 126
        %v1196 = vpop.permute.xlu0 %1195
        %1197 = vrot.lane.b32.xlu0 %v1192, 126
        %v1198 = vpop.permute.xlu0 %1197
        %v1201 = vadd.f32 %v1187, %v1196
        %v1202 = vadd.f32 %v1188, %v1198
        %s1203 = sld [smem:[#allocation6 + $0x2d]]
        %v1204 = vstv %s1203
        %v1205 = vmul.f32 %v1204, %v1167
        %v1206 = vmul.f32 %v1204, %v1168
        %1209 = vrot.lane.b32.xlu0 %v1205, 125
        %v1210 = vpop.permute.xlu0 %1209
        %1211 = vrot.lane.b32.xlu0 %v1206, 125
        %v1212 = vpop.permute.xlu0 %1211
        %v1215 = vadd.f32 %v1201, %v1210
        %v1216 = vadd.f32 %v1202, %v1212
        %s1217 = sld [smem:[#allocation6 + $0x2e]]
        %v1218 = vstv %s1217
        %v1219 = vmul.f32 %v1218, %v1167
        %v1220 = vmul.f32 %v1218, %v1168
        %1223 = vrot.lane.b32.xlu0 %v1219, 124
        %v1224 = vpop.permute.xlu0 %1223
        %1225 = vrot.lane.b32.xlu0 %v1220, 124
        %v1226 = vpop.permute.xlu0 %1225
        %v1229 = vadd.f32 %v1215, %v1224
        %v1230 = vadd.f32 %v1216, %v1226
        %s1231 = sld [smem:[#allocation6 + $0x2f]]
        %v1232 = vstv %s1231
        %v1233 = vmul.f32 %v1232, %v1167
        %v1234 = vmul.f32 %v1232, %v1168
        %1237 = vrot.lane.b32.xlu0 %v1233, 123
        %v1238 = vpop.permute.xlu0 %1237
        %1239 = vrot.lane.b32.xlu0 %v1234, 123
        %v1240 = vpop.permute.xlu0 %1239
        %v1243 = vadd.f32 %v1229, %v1238
        %v1244 = vadd.f32 %v1230, %v1240
        %s1245 = sld [smem:[#allocation6 + $0x30]]
        %v1246 = vstv %s1245
        %v1247 = vmul.f32 %v1246, %v1167
        %v1248 = vmul.f32 %v1246, %v1168
        %1251 = vrot.lane.b32.xlu0 %v1247, 122
        %v1252 = vpop.permute.xlu0 %1251
        %1253 = vrot.lane.b32.xlu0 %v1248, 122
        %v1254 = vpop.permute.xlu0 %1253
        %v1257 = vadd.f32 %v1243, %v1252
        %v1258 = vadd.f32 %v1244, %v1254
        %v1259 = vld [vmem:[%s447 + $0x5] sm:$0xff]
        %v1260 = vld [vmem:[%s447 + $0xd] sm:$0xff]
        %s1261 = sld [smem:[#allocation6 + $0x31]]
        %v1262 = vstv %s1261
        %v1263 = vmul.f32 %v1262, %v1259
        %v1264 = vmul.f32 %v1262, %v1260
        %v1265 = vadd.f32 %v1263, 0.0
        %v1266 = vadd.f32 %v1264, 0.0
        %s1267 = sld [smem:[#allocation6 + $0x32]]
        %v1268 = vstv %s1267
        %v1269 = vmul.f32 %v1268, %v1259
        %v1270 = vmul.f32 %v1268, %v1260
        %1273 = vrot.lane.b32.xlu0 %v1269, 127
        %v1274 = vpop.permute.xlu0 %1273
        %1275 = vrot.lane.b32.xlu0 %v1270, 127
        %v1276 = vpop.permute.xlu0 %1275
        %v1279 = vadd.f32 %v1265, %v1274
        %v1280 = vadd.f32 %v1266, %v1276
        %s1281 = sld [smem:[#allocation6 + $0x33]]
        %v1282 = vstv %s1281
        %v1283 = vmul.f32 %v1282, %v1259
        %v1284 = vmul.f32 %v1282, %v1260
        %1287 = vrot.lane.b32.xlu0 %v1283, 126
        %v1288 = vpop.permute.xlu0 %1287
        %1289 = vrot.lane.b32.xlu0 %v1284, 126
        %v1290 = vpop.permute.xlu0 %1289
        %v1293 = vadd.f32 %v1279, %v1288
        %v1294 = vadd.f32 %v1280, %v1290
        %s1295 = sld [smem:[#allocation6 + $0x34]]
        %v1296 = vstv %s1295
        %v1297 = vmul.f32 %v1296, %v1259
        %v1298 = vmul.f32 %v1296, %v1260
        %1301 = vrot.lane.b32.xlu0 %v1297, 125
        %v1302 = vpop.permute.xlu0 %1301
        %1303 = vrot.lane.b32.xlu0 %v1298, 125
        %v1304 = vpop.permute.xlu0 %1303
        %v1307 = vadd.f32 %v1293, %v1302
        %v1308 = vadd.f32 %v1294, %v1304
        %s1309 = sld [smem:[#allocation6 + $0x35]]
        %v1310 = vstv %s1309
        %v1311 = vmul.f32 %v1310, %v1259
        %v1312 = vmul.f32 %v1310, %v1260
        %1315 = vrot.lane.b32.xlu0 %v1311, 124
        %v1316 = vpop.permute.xlu0 %1315
        %1317 = vrot.lane.b32.xlu0 %v1312, 124
        %v1318 = vpop.permute.xlu0 %1317
        %v1321 = vadd.f32 %v1307, %v1316
        %v1322 = vadd.f32 %v1308, %v1318
        %s1323 = sld [smem:[#allocation6 + $0x36]]
        %v1324 = vstv %s1323
        %v1325 = vmul.f32 %v1324, %v1259
        %v1326 = vmul.f32 %v1324, %v1260
        %1329 = vrot.lane.b32.xlu0 %v1325, 123
        %v1330 = vpop.permute.xlu0 %1329
        %1331 = vrot.lane.b32.xlu0 %v1326, 123
        %v1332 = vpop.permute.xlu0 %1331
        %v1335 = vadd.f32 %v1321, %v1330
        %v1336 = vadd.f32 %v1322, %v1332
        %s1337 = sld [smem:[#allocation6 + $0x37]]
        %v1338 = vstv %s1337
        %v1339 = vmul.f32 %v1338, %v1259
        %v1340 = vmul.f32 %v1338, %v1260
        %1343 = vrot.lane.b32.xlu0 %v1339, 122
        %v1344 = vpop.permute.xlu0 %1343
        %1345 = vrot.lane.b32.xlu0 %v1340, 122
        %v1346 = vpop.permute.xlu0 %1345
        %v1349 = vadd.f32 %v1335, %v1344
        %v1350 = vadd.f32 %v1336, %v1346
        %v1351 = vld [vmem:[%s447 + $0x6] sm:$0xff]
        %v1352 = vld [vmem:[%s447 + $0xe] sm:$0xff]
        %s1353 = sld [smem:[#allocation6 + $0x38]]
        %v1354 = vstv %s1353
        %v1355 = vmul.f32 %v1354, %v1351
        %v1356 = vmul.f32 %v1354, %v1352
        %v1357 = vadd.f32 %v1355, 0.0
        %v1358 = vadd.f32 %v1356, 0.0
        %s1359 = sld [smem:[#allocation6 + $0x39]]
        %v1360 = vstv %s1359
        %v1361 = vmul.f32 %v1360, %v1351
        %v1362 = vmul.f32 %v1360, %v1352
        %1365 = vrot.lane.b32.xlu0 %v1361, 127
        %v1366 = vpop.permute.xlu0 %1365
        %1367 = vrot.lane.b32.xlu0 %v1362, 127
        %v1368 = vpop.permute.xlu0 %1367
        %v1371 = vadd.f32 %v1357, %v1366
        %v1372 = vadd.f32 %v1358, %v1368
        %s1373 = sld [smem:[#allocation6 + $0x3a]]
        %v1374 = vstv %s1373
        %v1375 = vmul.f32 %v1374, %v1351
        %v1376 = vmul.f32 %v1374, %v1352
        %1379 = vrot.lane.b32.xlu0 %v1375, 126
        %v1380 = vpop.permute.xlu0 %1379
        %1381 = vrot.lane.b32.xlu0 %v1376, 126
        %v1382 = vpop.permute.xlu0 %1381
        %v1385 = vadd.f32 %v1371, %v1380
        %v1386 = vadd.f32 %v1372, %v1382
        %s1387 = sld [smem:[#allocation6 + $0x3b]]
        %v1388 = vstv %s1387
        %v1389 = vmul.f32 %v1388, %v1351
        %v1390 = vmul.f32 %v1388, %v1352
        %1393 = vrot.lane.b32.xlu0 %v1389, 125
        %v1394 = vpop.permute.xlu0 %1393
        %1395 = vrot.lane.b32.xlu0 %v1390, 125
        %v1396 = vpop.permute.xlu0 %1395
        %v1399 = vadd.f32 %v1385, %v1394
        %v1400 = vadd.f32 %v1386, %v1396
        %s1401 = sld [smem:[#allocation6 + $0x3c]]
        %v1402 = vstv %s1401
        %v1403 = vmul.f32 %v1402, %v1351
        %v1404 = vmul.f32 %v1402, %v1352
        %1407 = vrot.lane.b32.xlu0 %v1403, 124
        %v1408 = vpop.permute.xlu0 %1407
        %1409 = vrot.lane.b32.xlu0 %v1404, 124
        %v1410 = vpop.permute.xlu0 %1409
        %v1413 = vadd.f32 %v1399, %v1408
        %v1414 = vadd.f32 %v1400, %v1410
        %s1415 = sld [smem:[#allocation6 + $0x3d]]
        %v1416 = vstv %s1415
        %v1417 = vmul.f32 %v1416, %v1351
        %v1418 = vmul.f32 %v1416, %v1352
        %1421 = vrot.lane.b32.xlu0 %v1417, 123
        %v1422 = vpop.permute.xlu0 %1421
        %1423 = vrot.lane.b32.xlu0 %v1418, 123
        %v1424 = vpop.permute.xlu0 %1423
        %v1427 = vadd.f32 %v1413, %v1422
        %v1428 = vadd.f32 %v1414, %v1424
        %s1429 = sld [smem:[#allocation6 + $0x3e]]
        %v1430 = vstv %s1429
        %v1431 = vmul.f32 %v1430, %v1351
        %v1432 = vmul.f32 %v1430, %v1352
        %1435 = vrot.lane.b32.xlu0 %v1431, 122
        %v1436 = vpop.permute.xlu0 %1435
        %1437 = vrot.lane.b32.xlu0 %v1432, 122
        %v1438 = vpop.permute.xlu0 %1437
        %v1441 = vadd.f32 %v1427, %v1436
        %v1442 = vadd.f32 %v1428, %v1438
        %v1443 = vld [vmem:[%s447 + $0x7] sm:$0xff]
        %v1444 = vld [vmem:[%s447 + $0xf] sm:$0xff]
        %s1445 = sld [smem:[#allocation6 + $0x3f]]
        %v1446 = vstv %s1445
        %v1447 = vmul.f32 %v1446, %v1443
        %v1448 = vmul.f32 %v1446, %v1444
        %v1449 = vadd.f32 %v1349, %v1447
        %v1450 = vadd.f32 %v1350, %v1448
        %s1451 = sld [smem:[#allocation6 + $0x40]]
        %v1452 = vstv %s1451
        %v1453 = vmul.f32 %v1452, %v1443
        %v1454 = vmul.f32 %v1452, %v1444
        %1457 = vrot.lane.b32.xlu0 %v1453, 127
        %v1458 = vpop.permute.xlu0 %1457
        %1459 = vrot.lane.b32.xlu0 %v1454, 127
        %v1460 = vpop.permute.xlu0 %1459
        %v1463 = vadd.f32 %v1449, %v1458
        %v1464 = vadd.f32 %v1450, %v1460
        %s1465 = sld [smem:[#allocation6 + $0x41]]
        %v1466 = vstv %s1465
        %v1467 = vmul.f32 %v1466, %v1443
        %v1468 = vmul.f32 %v1466, %v1444
        %1471 = vrot.lane.b32.xlu0 %v1467, 126
        %v1472 = vpop.permute.xlu0 %1471
        %1473 = vrot.lane.b32.xlu0 %v1468, 126
        %v1474 = vpop.permute.xlu0 %1473
        %v1477 = vadd.f32 %v1463, %v1472
        %v1478 = vadd.f32 %v1464, %v1474
        %s1479 = sld [smem:[#allocation6 + $0x42]]
        %v1480 = vstv %s1479
        %v1481 = vmul.f32 %v1480, %v1443
        %v1482 = vmul.f32 %v1480, %v1444
        %1485 = vrot.lane.b32.xlu0 %v1481, 125
        %v1486 = vpop.permute.xlu0 %1485
        %1487 = vrot.lane.b32.xlu0 %v1482, 125
        %v1488 = vpop.permute.xlu0 %1487
        %v1491 = vadd.f32 %v1477, %v1486
        %v1492 = vadd.f32 %v1478, %v1488
        %s1493 = sld [smem:[#allocation6 + $0x43]]
        %v1494 = vstv %s1493
        %v1495 = vmul.f32 %v1494, %v1443
        %v1496 = vmul.f32 %v1494, %v1444
        %1499 = vrot.lane.b32.xlu0 %v1495, 124
        %v1500 = vpop.permute.xlu0 %1499
        %1501 = vrot.lane.b32.xlu0 %v1496, 124
        %v1502 = vpop.permute.xlu0 %1501
        %v1505 = vadd.f32 %v1491, %v1500
        %v1506 = vadd.f32 %v1492, %v1502
        %s1507 = sld [smem:[#allocation6 + $0x44]]
        %v1508 = vstv %s1507
        %v1509 = vmul.f32 %v1508, %v1443
        %v1510 = vmul.f32 %v1508, %v1444
        %1513 = vrot.lane.b32.xlu0 %v1509, 123
        %v1514 = vpop.permute.xlu0 %1513
        %1515 = vrot.lane.b32.xlu0 %v1510, 123
        %v1516 = vpop.permute.xlu0 %1515
        %v1519 = vadd.f32 %v1505, %v1514
        %v1520 = vadd.f32 %v1506, %v1516
        %s1521 = sld [smem:[#allocation6 + $0x45]]
        %v1522 = vstv %s1521
        %v1523 = vmul.f32 %v1522, %v1443
        %v1524 = vmul.f32 %v1522, %v1444
        %1527 = vrot.lane.b32.xlu0 %v1523, 122
        %v1528 = vpop.permute.xlu0 %1527
        %1529 = vrot.lane.b32.xlu0 %v1524, 122
        %v1530 = vpop.permute.xlu0 %1529
        %v1533 = vadd.f32 %v1519, %v1528
        %v1534 = vadd.f32 %v1520, %v1530
        %v1535 = vld [vmem:[%s447 + $0x8] sm:$0xff]
        %v1536 = vld [vmem:[%s447 + $0x10] sm:$0xff]
        %s1537 = sld [smem:[#allocation6 + $0x46]]
        %v1538 = vstv %s1537
        %v1539 = vmul.f32 %v1538, %v1535
        %v1540 = vmul.f32 %v1538, %v1536
        %v1541 = vadd.f32 %v1441, %v1539
        %v1542 = vadd.f32 %v1442, %v1540
        %s1543 = sld [smem:[#allocation6 + $0x47]]
        %v1544 = vstv %s1543
        %v1545 = vmul.f32 %v1544, %v1535
        %v1546 = vmul.f32 %v1544, %v1536
        %1549 = vrot.lane.b32.xlu0 %v1545, 127
        %v1550 = vpop.permute.xlu0 %1549
        %1551 = vrot.lane.b32.xlu0 %v1546, 127
        %v1552 = vpop.permute.xlu0 %1551
        %v1555 = vadd.f32 %v1541, %v1550
        %v1556 = vadd.f32 %v1542, %v1552
        %s1557 = sld [smem:[#allocation6 + $0x48]]
        %v1558 = vstv %s1557
        %v1559 = vmul.f32 %v1558, %v1535
        %v1560 = vmul.f32 %v1558, %v1536
        %1563 = vrot.lane.b32.xlu0 %v1559, 126
        %v1564 = vpop.permute.xlu0 %1563
        %1565 = vrot.lane.b32.xlu0 %v1560, 126
        %v1566 = vpop.permute.xlu0 %1565
        %v1569 = vadd.f32 %v1555, %v1564
        %v1570 = vadd.f32 %v1556, %v1566
        %s1571 = sld [smem:[#allocation6 + $0x49]]
        %v1572 = vstv %s1571
        %v1573 = vmul.f32 %v1572, %v1535
        %v1574 = vmul.f32 %v1572, %v1536
        %1577 = vrot.lane.b32.xlu0 %v1573, 125
        %v1578 = vpop.permute.xlu0 %1577
        %1579 = vrot.lane.b32.xlu0 %v1574, 125
        %v1580 = vpop.permute.xlu0 %1579
        %v1583 = vadd.f32 %v1569, %v1578
        %v1584 = vadd.f32 %v1570, %v1580
        %s1585 = sld [smem:[#allocation6 + $0x4a]]
        %v1586 = vstv %s1585
        %v1587 = vmul.f32 %v1586, %v1535
        %v1588 = vmul.f32 %v1586, %v1536
        %1591 = vrot.lane.b32.xlu0 %v1587, 124
        %v1592 = vpop.permute.xlu0 %1591
        %1593 = vrot.lane.b32.xlu0 %v1588, 124
        %v1594 = vpop.permute.xlu0 %1593
        %v1597 = vadd.f32 %v1583, %v1592
        %v1598 = vadd.f32 %v1584, %v1594
        %s1599 = sld [smem:[#allocation6 + $0x4b]]
        %v1600 = vstv %s1599
        %v1601 = vmul.f32 %v1600, %v1535
        %v1602 = vmul.f32 %v1600, %v1536
        %1605 = vrot.lane.b32.xlu0 %v1601, 123
        %v1606 = vpop.permute.xlu0 %1605
        %1607 = vrot.lane.b32.xlu0 %v1602, 123
        %v1608 = vpop.permute.xlu0 %1607
        %v1611 = vadd.f32 %v1597, %v1606
        %v1612 = vadd.f32 %v1598, %v1608
        %s1613 = sld [smem:[#allocation6 + $0x4c]]
        %v1614 = vstv %s1613
        %v1615 = vmul.f32 %v1614, %v1535
        %v1616 = vmul.f32 %v1614, %v1536
        %1619 = vrot.lane.b32.xlu0 %v1615, 122
        %v1620 = vpop.permute.xlu0 %1619
        %1621 = vrot.lane.b32.xlu0 %v1616, 122
        %v1622 = vpop.permute.xlu0 %1621
        %v1625 = vadd.f32 %v1611, %v1620
        %v1626 = vadd.f32 %v1612, %v1622
        %v1627 = vld [vmem:[%s447 + $0x9] sm:$0xff]
        %v1628 = vld [vmem:[%s447 + $0x11] sm:$0xff]
        %s1629 = sld [smem:[#allocation6 + $0x4d]]
        %v1630 = vstv %s1629
        %v1631 = vmul.f32 %v1630, %v1627
        %v1632 = vmul.f32 %v1630, %v1628
        %v1633 = vadd.f32 %v1533, %v1631
        %v1634 = vadd.f32 %v1534, %v1632
        %s1635 = sld [smem:[#allocation6 + $0x4e]]
        %v1636 = vstv %s1635
        %v1637 = vmul.f32 %v1636, %v1627
        %v1638 = vmul.f32 %v1636, %v1628
        %1641 = vrot.lane.b32.xlu0 %v1637, 127
        %v1642 = vpop.permute.xlu0 %1641
        %1643 = vrot.lane.b32.xlu0 %v1638, 127
        %v1644 = vpop.permute.xlu0 %1643
        %v1647 = vadd.f32 %v1633, %v1642
        %v1648 = vadd.f32 %v1634, %v1644
        %s1649 = sld [smem:[#allocation6 + $0x4f]]
        %v1650 = vstv %s1649
        %v1651 = vmul.f32 %v1650, %v1627
        %v1652 = vmul.f32 %v1650, %v1628
        %1655 = vrot.lane.b32.xlu0 %v1651, 126
        %v1656 = vpop.permute.xlu0 %1655
        %1657 = vrot.lane.b32.xlu0 %v1652, 126
        %v1658 = vpop.permute.xlu0 %1657
        %v1661 = vadd.f32 %v1647, %v1656
        %v1662 = vadd.f32 %v1648, %v1658
        %s1663 = sld [smem:[#allocation6 + $0x50]]
        %v1664 = vstv %s1663
        %v1665 = vmul.f32 %v1664, %v1627
        %v1666 = vmul.f32 %v1664, %v1628
        %1669 = vrot.lane.b32.xlu0 %v1665, 125
        %v1670 = vpop.permute.xlu0 %1669
        %1671 = vrot.lane.b32.xlu0 %v1666, 125
        %v1672 = vpop.permute.xlu0 %1671
        %v1675 = vadd.f32 %v1661, %v1670
        %v1676 = vadd.f32 %v1662, %v1672
        %s1677 = sld [smem:[#allocation6 + $0x51]]
        %v1678 = vstv %s1677
        %v1679 = vmul.f32 %v1678, %v1627
        %v1680 = vmul.f32 %v1678, %v1628
        %1683 = vrot.lane.b32.xlu0 %v1679, 124
        %v1684 = vpop.permute.xlu0 %1683
        %1685 = vrot.lane.b32.xlu0 %v1680, 124
        %v1686 = vpop.permute.xlu0 %1685
        %v1689 = vadd.f32 %v1675, %v1684
        %v1690 = vadd.f32 %v1676, %v1686
        %s1691 = sld [smem:[#allocation6 + $0x52]]
        %v1692 = vstv %s1691
        %v1693 = vmul.f32 %v1692, %v1627
        %v1694 = vmul.f32 %v1692, %v1628
        %1697 = vrot.lane.b32.xlu0 %v1693, 123
        %v1698 = vpop.permute.xlu0 %1697
        %1699 = vrot.lane.b32.xlu0 %v1694, 123
        %v1700 = vpop.permute.xlu0 %1699
        %v1703 = vadd.f32 %v1689, %v1698
        %v1704 = vadd.f32 %v1690, %v1700
        %s1705 = sld [smem:[#allocation6 + $0x53]]
        %v1706 = vstv %s1705
        %v1707 = vmul.f32 %v1706, %v1627
        %v1708 = vmul.f32 %v1706, %v1628
        %1711 = vrot.lane.b32.xlu0 %v1707, 122
        %v1712 = vpop.permute.xlu0 %1711
        %1713 = vrot.lane.b32.xlu0 %v1708, 122
        %v1714 = vpop.permute.xlu0 %1713
        %v1717 = vadd.f32 %v1703, %v1712
        %v1718 = vadd.f32 %v1704, %v1714
        %v1719 = vld [vmem:[%s447 + $0xa] sm:$0xff]
        %v1720 = vld [vmem:[%s447 + $0x12] sm:$0xff]
        %s1721 = sld [smem:[#allocation6 + $0x54]]
        %v1722 = vstv %s1721
        %v1723 = vmul.f32 %v1722, %v1719
        %v1724 = vmul.f32 %v1722, %v1720
        %v1725 = vadd.f32 %v1625, %v1723
        %v1726 = vadd.f32 %v1626, %v1724
        %s1727 = sld [smem:[#allocation6 + $0x55]]
        %v1728 = vstv %s1727
        %v1729 = vmul.f32 %v1728, %v1719
        %v1730 = vmul.f32 %v1728, %v1720
        %1733 = vrot.lane.b32.xlu0 %v1729, 127
        %v1734 = vpop.permute.xlu0 %1733
        %1735 = vrot.lane.b32.xlu0 %v1730, 127
        %v1736 = vpop.permute.xlu0 %1735
        %v1739 = vadd.f32 %v1725, %v1734
        %v1740 = vadd.f32 %v1726, %v1736
        %s1741 = sld [smem:[#allocation6 + $0x56]]
        %v1742 = vstv %s1741
        %v1743 = vmul.f32 %v1742, %v1719
        %v1744 = vmul.f32 %v1742, %v1720
        %1747 = vrot.lane.b32.xlu0 %v1743, 126
        %v1748 = vpop.permute.xlu0 %1747
        %1749 = vrot.lane.b32.xlu0 %v1744, 126
        %v1750 = vpop.permute.xlu0 %1749
        %v1753 = vadd.f32 %v1739, %v1748
        %v1754 = vadd.f32 %v1740, %v1750
        %s1755 = sld [smem:[#allocation6 + $0x57]]
        %v1756 = vstv %s1755
        %v1757 = vmul.f32 %v1756, %v1719
        %v1758 = vmul.f32 %v1756, %v1720
        %1761 = vrot.lane.b32.xlu0 %v1757, 125
        %v1762 = vpop.permute.xlu0 %1761
        %1763 = vrot.lane.b32.xlu0 %v1758, 125
        %v1764 = vpop.permute.xlu0 %1763
        %v1767 = vadd.f32 %v1753, %v1762
        %v1768 = vadd.f32 %v1754, %v1764
        %s1769 = sld [smem:[#allocation6 + $0x58]]
        %v1770 = vstv %s1769
        %v1771 = vmul.f32 %v1770, %v1719
        %v1772 = vmul.f32 %v1770, %v1720
        %1775 = vrot.lane.b32.xlu0 %v1771, 124
        %v1776 = vpop.permute.xlu0 %1775
        %1777 = vrot.lane.b32.xlu0 %v1772, 124
        %v1778 = vpop.permute.xlu0 %1777
        %v1781 = vadd.f32 %v1767, %v1776
        %v1782 = vadd.f32 %v1768, %v1778
        %s1783 = sld [smem:[#allocation6 + $0x59]]
        %v1784 = vstv %s1783
        %v1785 = vmul.f32 %v1784, %v1719
        %v1786 = vmul.f32 %v1784, %v1720
        %1789 = vrot.lane.b32.xlu0 %v1785, 123
        %v1790 = vpop.permute.xlu0 %1789
        %1791 = vrot.lane.b32.xlu0 %v1786, 123
        %v1792 = vpop.permute.xlu0 %1791
        %v1795 = vadd.f32 %v1781, %v1790
        %v1796 = vadd.f32 %v1782, %v1792
        %s1797 = sld [smem:[#allocation6 + $0x5a]]
        %v1798 = vstv %s1797
        %v1799 = vmul.f32 %v1798, %v1719
        %v1800 = vmul.f32 %v1798, %v1720
        %1803 = vrot.lane.b32.xlu0 %v1799, 122
        %v1804 = vpop.permute.xlu0 %1803
        %1805 = vrot.lane.b32.xlu0 %v1800, 122
        %v1806 = vpop.permute.xlu0 %1805
        %v1809 = vadd.f32 %v1795, %v1804
        %v1810 = vadd.f32 %v1796, %v1806
        %v1811 = vld [vmem:[%s447 + $0xb] sm:$0xff]
        %v1812 = vld [vmem:[%s447 + $0x13] sm:$0xff]
        %s1813 = sld [smem:[#allocation6 + $0x5b]]
        %v1814 = vstv %s1813
        %v1815 = vmul.f32 %v1814, %v1811
        %v1816 = vmul.f32 %v1814, %v1812
        %v1817 = vadd.f32 %v1717, %v1815
        %v1818 = vadd.f32 %v1718, %v1816
        %s1819 = sld [smem:[#allocation6 + $0x5c]]
        %v1820 = vstv %s1819
        %v1821 = vmul.f32 %v1820, %v1811
        %v1822 = vmul.f32 %v1820, %v1812
        %1825 = vrot.lane.b32.xlu0 %v1821, 127
        %v1826 = vpop.permute.xlu0 %1825
        %1827 = vrot.lane.b32.xlu0 %v1822, 127
        %v1828 = vpop.permute.xlu0 %1827
        %v1831 = vadd.f32 %v1817, %v1826
        %v1832 = vadd.f32 %v1818, %v1828
        %s1833 = sld [smem:[#allocation6 + $0x5d]]
        %v1834 = vstv %s1833
        %v1835 = vmul.f32 %v1834, %v1811
        %v1836 = vmul.f32 %v1834, %v1812
        %1839 = vrot.lane.b32.xlu0 %v1835, 126
        %v1840 = vpop.permute.xlu0 %1839
        %1841 = vrot.lane.b32.xlu0 %v1836, 126
        %v1842 = vpop.permute.xlu0 %1841
        %v1845 = vadd.f32 %v1831, %v1840
        %v1846 = vadd.f32 %v1832, %v1842
        %s1847 = sld [smem:[#allocation6 + $0x5e]]
        %v1848 = vstv %s1847
        %v1849 = vmul.f32 %v1848, %v1811
        %v1850 = vmul.f32 %v1848, %v1812
        %1853 = vrot.lane.b32.xlu0 %v1849, 125
        %v1854 = vpop.permute.xlu0 %1853
        %1855 = vrot.lane.b32.xlu0 %v1850, 125
        %v1856 = vpop.permute.xlu0 %1855
        %v1859 = vadd.f32 %v1845, %v1854
        %v1860 = vadd.f32 %v1846, %v1856
        %s1861 = sld [smem:[#allocation6 + $0x5f]]
        %v1862 = vstv %s1861
        %v1863 = vmul.f32 %v1862, %v1811
        %v1864 = vmul.f32 %v1862, %v1812
        %1867 = vrot.lane.b32.xlu0 %v1863, 124
        %v1868 = vpop.permute.xlu0 %1867
        %1869 = vrot.lane.b32.xlu0 %v1864, 124
        %v1870 = vpop.permute.xlu0 %1869
        %v1873 = vadd.f32 %v1859, %v1868
        %v1874 = vadd.f32 %v1860, %v1870
        %s1875 = sld [smem:[#allocation6 + $0x60]]
        %v1876 = vstv %s1875
        %v1877 = vmul.f32 %v1876, %v1811
        %v1878 = vmul.f32 %v1876, %v1812
        %1881 = vrot.lane.b32.xlu0 %v1877, 123
        %v1882 = vpop.permute.xlu0 %1881
        %1883 = vrot.lane.b32.xlu0 %v1878, 123
        %v1884 = vpop.permute.xlu0 %1883
        %v1887 = vadd.f32 %v1873, %v1882
        %v1888 = vadd.f32 %v1874, %v1884
        %s1889 = sld [smem:[#allocation6 + $0x61]]
        %v1890 = vstv %s1889
        %v1891 = vmul.f32 %v1890, %v1811
        %v1892 = vmul.f32 %v1890, %v1812
        %1895 = vrot.lane.b32.xlu0 %v1891, 122
        %v1896 = vpop.permute.xlu0 %1895
        %1897 = vrot.lane.b32.xlu0 %v1892, 122
        %v1898 = vpop.permute.xlu0 %1897
        %v1901 = vadd.f32 %v1887, %v1896
        %v1902 = vadd.f32 %v1888, %v1898
        %v1903 = vadd.f32 %v1257, %v1165
        %v1904 = vadd.f32 %v1258, %v1166
        %v1905 = vadd.f32 %v1901, %v1809
        %v1906 = vadd.f32 %v1902, %v1810
        %v1907 = vadd.f32 %v1903, %v1905
        %v1908 = vadd.f32 %v1904, %v1906
        %v1909 = vstv %s614
        %v1910 = vadd.f32 %v1907, %v1909
        %v1911 = vadd.f32 %v1908, %v1909
        %v1912 = vxor.u32 %v1910, 2147483648
        %v1913 = vxor.u32 %v1911, 2147483648
        %v1914 = vmul.f32 %v1912, 1.442695
        %v1915 = vpow.pop %v1914
        %v1916 = vmul.f32 %v1913, 1.442695
        %v1917 = vpow.pop %v1916
        %v1918 = vadd.f32 %v1915, 1.0
        %v1919 = vadd.f32 %v1917, 1.0
        %v1920 = vrcp.pop %v1918
        %v1921 = vmul.f32 1.0, %v1920
        %v1922 = vrcp.pop %v1919
        %v1923 = vmul.f32 1.0, %v1922
        %vm1924 = vcmp.lt.s32.totalorder %v253, 16
        %vm1925 = vmand %vm254, %vm1924
        %1926 = vst.msk [vmem:[#allocation4] sm:$0x1] %vm1925, %v1921
        %v1929 = vunpack.c.l.s4 1966171168
        %v1930 = vunpack.c.0.s8 %v1929
        %v1931 = vlaneseq
        %v1932 = vshrl.u32 %v1931, 7
        %v1933 = vsub.s32 %v1930, %v1932
        %v1934 = vrot.slane %v1921, %v1933
        %v1935 = vcombine.high %v1934, %v1934
        %v1937 = vunpack.c.l.s4 1966171168
        %v1938 = vunpack.c.0.s8 %v1937
        %v1939 = vlaneseq
        %v1940 = vshrl.u32 %v1939, 7
        %v1941 = vsub.s32 %v1938, %v1940
        %v1942 = vrot.slane %v1934, %v1941
        %v1944 = vunpack.c.l.s4 1966171168
        %v1945 = vunpack.c.0.s8 %v1944
        %v1946 = vlaneseq
        %v1947 = vshrl.u32 %v1946, 7
        %v1948 = vsub.s32 %v1945, %v1947
        %v1949 = vrot.slane %v1935, %v1948
        %1950 = vrot.lane.b32.xlu0 %v1949, 16
        %v1951 = vpop.permute.xlu0 %1950
        %vm1953 = vcmp.ge.s32.totalorder %v253, 16
        %vm1954 = vcmp.lt.s32.totalorder %v253, 32
        %vm1955 = vmand %vm1953, %vm1954
        %1956 = vst.msk [vmem:[#allocation4] sm:$0x1] %vm1955, %v1951
        %v1957 = vcombine.high %v1942, %v1942
        %1958 = vrot.lane.b32.xlu0 %v1957, 32
        %v1959 = vpop.permute.xlu0 %1958
        %vm1961 = vcmp.ge.s32.totalorder %v253, 32
        %vm1962 = vcmp.lt.s32.totalorder %v253, 48
        %vm1963 = vmand %vm1961, %vm1962
        %1964 = vst.msk [vmem:[#allocation4] sm:$0x1] %vm1963, %v1959
        %v1965 = vcombine.high %v1949, %v1949
        %1966 = vrot.lane.b32.xlu0 %v1965, 48
        %v1967 = vpop.permute.xlu0 %1966
        %vm1969 = vcmp.ge.s32.totalorder %v253, 48
        %vm1970 = vcmp.lt.s32.totalorder %v253, 64
        %vm1971 = vmand %vm1969, %vm1970
        %1972 = vst.msk [vmem:[#allocation4] sm:$0x1] %vm1971, %v1967
        %v1973 = vcombine.high %v1921, %v1921
        %v1975 = vunpack.c.l.s4 1966171168
        %v1976 = vunpack.c.0.s8 %v1975
        %v1977 = vlaneseq
        %v1978 = vshrl.u32 %v1977, 7
        %v1979 = vsub.s32 %v1976, %v1978
        %v1980 = vrot.slane %v1973, %v1979
        %v1982 = vunpack.c.l.s4 1966171168
        %v1983 = vunpack.c.0.s8 %v1982
        %v1984 = vlaneseq
        %v1985 = vshrl.u32 %v1984, 7
        %v1986 = vsub.s32 %v1983, %v1985
        %v1987 = vrot.slane %v1980, %v1986
        %1988 = vrot.lane.b32.xlu0 %v1987, 64
        %v1989 = vpop.permute.xlu0 %1988
        %vm1991 = vcmp.ge.s32.totalorder %v253, 64
        %vm1992 = vcmp.lt.s32.totalorder %v253, 80
        %vm1993 = vmand %vm1991, %vm1992
        %1994 = vst.msk [vmem:[#allocation4] sm:$0x1] %vm1993, %v1989
        %v1995 = vcombine.high %v1980, %v1980
        %v1997 = vunpack.c.l.s4 1966171168
        %v1998 = vunpack.c.0.s8 %v1997
        %v1999 = vlaneseq
        %v2000 = vshrl.u32 %v1999, 7
        %v2001 = vsub.s32 %v1998, %v2000
        %v2002 = vrot.slane %v1995, %v2001
        %2003 = vrot.lane.b32.xlu0 %v2002, 80
        %v2004 = vpop.permute.xlu0 %2003
        %vm2006 = vcmp.ge.s32.totalorder %v253, 80
        %vm2007 = vcmp.lt.s32.totalorder %v253, 96
        %vm2008 = vmand %vm2006, %vm2007
        %2009 = vst.msk [vmem:[#allocation4] sm:$0x1] %vm2008, %v2004
        %v2010 = vcombine.high %v1987, %v1987
        %2011 = vrot.lane.b32.xlu0 %v2010, 96
        %v2012 = vpop.permute.xlu0 %2011
        %vm2014 = vcmp.ge.s32.totalorder %v253, 96
        %vm2015 = vcmp.lt.s32.totalorder %v253, 112
        %vm2016 = vmand %vm2014, %vm2015
        %2017 = vst.msk [vmem:[#allocation4] sm:$0x1] %vm2016, %v2012
        %v2018 = vcombine.high %v2002, %v2002
        %2019 = vrot.lane.b32.xlu0 %v2018, 112
        %v2020 = vpop.permute.xlu0 %2019
        %vm2022 = vcmp.ge.s32.totalorder %v253, 112
        %vm2023 = vcmp.lt.s32.totalorder %v253, 128
        %vm2024 = vmand %vm2022, %vm2023
        %2025 = vst.msk [vmem:[#allocation4] sm:$0x1] %vm2024, %v2020
        %2026 = vst.msk [vmem:[#allocation4 + $0x1] sm:$0x1] %vm1925, %v1923
        %v2029 = vunpack.c.l.s4 1966171168
        %v2030 = vunpack.c.0.s8 %v2029
        %v2031 = vlaneseq
        %v2032 = vshrl.u32 %v2031, 7
        %v2033 = vsub.s32 %v2030, %v2032
        %v2034 = vrot.slane %v1923, %v2033
        %v2035 = vcombine.high %v2034, %v2034
        %v2037 = vunpack.c.l.s4 1966171168
        %v2038 = vunpack.c.0.s8 %v2037
        %v2039 = vlaneseq
        %v2040 = vshrl.u32 %v2039, 7
        %v2041 = vsub.s32 %v2038, %v2040
        %v2042 = vrot.slane %v2034, %v2041
        %v2044 = vunpack.c.l.s4 1966171168
        %v2045 = vunpack.c.0.s8 %v2044
        %v2046 = vlaneseq
        %v2047 = vshrl.u32 %v2046, 7
        %v2048 = vsub.s32 %v2045, %v2047
        %v2049 = vrot.slane %v2035, %v2048
        %2050 = vrot.lane.b32.xlu0 %v2049, 16
        %v2051 = vpop.permute.xlu0 %2050
        %2053 = vst.msk [vmem:[#allocation4 + $0x1] sm:$0x1] %vm1955, %v2051
        %v2054 = vcombine.high %v2042, %v2042
        %2055 = vrot.lane.b32.xlu0 %v2054, 32
        %v2056 = vpop.permute.xlu0 %2055
        %2058 = vst.msk [vmem:[#allocation4 + $0x1] sm:$0x1] %vm1963, %v2056
        %v2059 = vcombine.high %v2049, %v2049
        %2060 = vrot.lane.b32.xlu0 %v2059, 48
        %v2061 = vpop.permute.xlu0 %2060
        %2063 = vst.msk [vmem:[#allocation4 + $0x1] sm:$0x1] %vm1971, %v2061
        %v2064 = vcombine.high %v1923, %v1923
        %v2066 = vunpack.c.l.s4 1966171168
        %v2067 = vunpack.c.0.s8 %v2066
        %v2068 = vlaneseq
        %v2069 = vshrl.u32 %v2068, 7
        %v2070 = vsub.s32 %v2067, %v2069
        %v2071 = vrot.slane %v2064, %v2070
        %v2073 = vunpack.c.l.s4 1966171168
        %v2074 = vunpack.c.0.s8 %v2073
        %v2075 = vlaneseq
        %v2076 = vshrl.u32 %v2075, 7
        %v2077 = vsub.s32 %v2074, %v2076
        %v2078 = vrot.slane %v2071, %v2077
        %2079 = vrot.lane.b32.xlu0 %v2078, 64
        %v2080 = vpop.permute.xlu0 %2079
        %2082 = vst.msk [vmem:[#allocation4 + $0x1] sm:$0x1] %vm1993, %v2080
        %v2083 = vcombine.high %v2071, %v2071
        %v2085 = vunpack.c.l.s4 1966171168
        %v2086 = vunpack.c.0.s8 %v2085
        %v2087 = vlaneseq
        %v2088 = vshrl.u32 %v2087, 7
        %v2089 = vsub.s32 %v2086, %v2088
        %v2090 = vrot.slane %v2083, %v2089
        %2091 = vrot.lane.b32.xlu0 %v2090, 80
        %v2092 = vpop.permute.xlu0 %2091
        %2094 = vst.msk [vmem:[#allocation4 + $0x1] sm:$0x1] %vm2008, %v2092
        %v2095 = vcombine.high %v2078, %v2078
        %2096 = vrot.lane.b32.xlu0 %v2095, 96
        %v2097 = vpop.permute.xlu0 %2096
        %2099 = vst.msk [vmem:[#allocation4 + $0x1] sm:$0x1] %vm2016, %v2097
        %v2100 = vcombine.high %v2090, %v2090
        %2101 = vrot.lane.b32.xlu0 %v2100, 112
        %v2102 = vpop.permute.xlu0 %2101
        %2104 = vst.msk [vmem:[#allocation4 + $0x1] sm:$0x1] %vm2024, %v2102
        %v2105 = vld [vmem:[#allocation4] sm:$0x3]
        %v2106 = vld [vmem:[%s178] sm:$0xff]
        %v2108 = vlaneseq
        %v2109 = vshrl.u32 %v2108, 7
        %v2110 = vsub.s32 0, %v2109
        %v2111 = vrot.slane %v2105, %v2110
        %v2112 = vlaneseq
        %v2113 = vshrl.u32 %v2112, 7
        %v2114 = vsub.s32 1, %v2113
        %v2115 = vrot.slane %v2105, %v2114
        %v2116 = vcombine.low %v2111, %v2115
        %v2118 = vmul.f32 %v2106, %v2116
        %2119 = vst [vmem:[%s201] sm:$0xff] %v2118
        %s2120 = sand.u32 %s98, 1
        %s2121 = scalar_lea.sflag [#allocation8], %s2120
        %s2122 = sand.u32 %s98, 1
        %s2123 = smul.addr %s2122, 8
        %s2124 = scalar_lea.vmem [#allocation11], %s2123
        // Predicated region
        $region41: #{tpu_custom_call.1} parent=31 // pred_check
          %p2125 = pneg %p108
        $region42: #{tpu_custom_call.1} parent=31 // pred_check_branch
          %2127 = sbr.rel (%p2125) target = $region44
        $region43: #{tpu_custom_call.1} parent=31 // pred_region
          %s2129 = ssub.s32 128, 128
          %2130 = vsyncadd %s2121, %s2129
          %s2131 = smul.addr %s22, 2
          %s2132 = smul.addr %s2131, 64
          %s2133 = scalar_lea.hbm %s3, %s2132
          %s2135 = sshll.u32 %s2124, 4
          %s2136 = int_to_ptr.vmem [resolvable:$true] %s2135
          %2138 = dma.vmem_to_hbm [thread:$0]  %s2136, 128, %s2133, %s2121
        $region44: #{tpu_custom_call.1} parent=31 // pred_fallthru
          _
      $region32: #{tpu_custom_call.1} parent=5 // pred_fallthru
        _
      %p2139 = scmp.le.s32.totalorder 2, %s17
      // Predicated region
      $region45: #{tpu_custom_call.1} parent=5 // pred_check
        %p2140 = pneg %p2139
      $region46: #{tpu_custom_call.1} parent=5 // pred_check_branch
        %2142 = sbr.rel (%p2140) target = $region48
      $region47: #{tpu_custom_call.1} parent=5 // pred_region
        %s2143 = ssub.s32 %s17, 2
        // Predicated region
        $region49: #{tpu_custom_call.1} parent=47 // pred_check
          %p2144 = pneg %p114
        $region50: #{tpu_custom_call.1} parent=47 // pred_check_branch
          %2146 = sbr.rel (%p2144) target = $region52
        $region51: #{tpu_custom_call.1} parent=47 // pred_region
          %s2147 = sand.u32 %s99, 1
          %s2148 = scalar_lea.sflag [#allocation8], %s2147
          %s2149 = sand.u32 %s99, 1
          %s2150 = smul.addr %s2149, 8
          %s2151 = scalar_lea.vmem [#allocation11], %s2150
          %2152 = dma.done %s2148, 128
        $region52: #{tpu_custom_call.1} parent=47 // pred_fallthru
          _
      $region48: #{tpu_custom_call.1} parent=5 // pred_fallthru
        _
    $region6: #{tpu_custom_call.1} parent=1 // loop_footer
      %s21 = sadd.s32 1, %s17
    $region7: #{tpu_custom_call.1} parent=1 // loop_footer_branch
      %16 = sbr.rel target = $region3
    $region8: #{tpu_custom_call.1} parent=1 // loop_exit
      _
    %2153 = vsyncpa [#allocation7], 1
    %s2154 = scalar_lea.sflag [#allocation7], 1
    %2155 = vsyncpa %s2154, 1
    %2156 = vsyncpa [#allocation8], 1
    %s2157 = scalar_lea.sflag [#allocation8], 1
    %2158 = vsyncpa %s2157, 1
    %2159 = vsyncpa [#allocation9], 1
    %s2160 = scalar_lea.sflag [#allocation9], 1
    %2161 = vsyncpa %s2160, 1

</llo_original>
